<compile_context>
chip_gen: v5e
topology: v5e:2x2
jax: 0.10.0
libtpu: 0.0.40
codegen_flags: <defaults>
</compile_context>

<pallas_src>
import math
from functools import partial

import jax
import jax.numpy as jnp
from jax.experimental import pallas as pl
from jax.experimental.pallas import tpu as pltpu


# ----------------------------- in-kernel helpers -----------------------------

def _rmsnorm(x, gamma_row):
    # x: (S, D) f32; gamma_row: (1, D) f32, already folded with sqrt(D).
    # F.normalize(x, dim=-1) == x / max(||x||, 1e-12) == x * rsqrt(max(ss, 1e-24))
    ss = jnp.sum(x * x, axis=-1, keepdims=True)
    return (x * jax.lax.rsqrt(jnp.maximum(ss, 1e-24))) * gamma_row


def _erf(x):
    # Abramowitz & Stegun 7.1.26 (max abs err ~1.5e-7, i.e. f32-exact for gelu).
    # TODO(synk): swap to lax.erf if/when guaranteed to lower on Mosaic.
    a1, a2, a3, a4, a5 = 0.254829592, -0.284496736, 1.421413741, -1.453152027, 1.061405429
    p = 0.3275911
    sgn = jnp.where(x >= 0.0, 1.0, -1.0)
    ax = jnp.abs(x)
    t = 1.0 / (1.0 + p * ax)
    poly = ((((a5 * t + a4) * t + a3) * t + a2) * t + a1) * t
    return sgn * (1.0 - poly * jnp.exp(-ax * ax))


def _gelu(x):
    return 0.5 * x * (1.0 + _erf(x * (1.0 / math.sqrt(2.0))))


# ----------------------------- fused kernel -----------------------------

def _transformer_kernel(x_ref, cos_ref, sinl_ref, sinr_ref,
                        g1_ref, wq_ref, wk_ref, wv_ref, wo_ref,
                        g2_ref, w1x_ref, b1x_ref, w1g_ref, b1g_ref,
                        w2_ref, b2_ref, gf_ref,
                        o_ref, xs_ref, *, heads, dim_head):
    layer = pl.program_id(1)
    n_layers = pl.num_programs(1)
    lanes = heads * dim_head

    @pl.when(layer == 0)
    def _():                                   # load residual stream once per batch
        xs_ref[...] = x_ref[0]

    x = xs_ref[...]                            # (S, D) f32 residual stream

    # ---------------- attention block ----------------
    a_in = _rmsnorm(x, g1_ref[0])
    a_bf = a_in.astype(jnp.bfloat16)
    # all heads packed along the 128-wide lane dim; wq already carries Dh**-0.5
    q = jnp.dot(a_bf, wq_ref[0], preferred_element_type=jnp.float32)   # (S, H*Dh)
    k = jnp.dot(a_bf, wk_ref[0], preferred_element_type=jnp.float32)
    v = jnp.dot(a_bf, wv_ref[0], preferred_element_type=jnp.float32)

    # rotary embedding, interleaved rotate_half:
    #   rotate_half(t)[2i] = -t[2i+1] ; rotate_half(t)[2i+1] = t[2i]
    # sin tables carry the sign and the pair-parity mask (zeros elsewhere), so
    # the lane wrap-around of the rolls never contributes and pairs never
    # cross head boundaries.
    cos, sin_l, sin_r = cos_ref[...], sinl_ref[...], sinr_ref[...]

    def rope(t):
        nbr_up = pltpu.roll(t, lanes - 1, 1)   # nbr_up[:, j] = t[:, (j + 1) % lanes]
        nbr_dn = pltpu.roll(t, 1, 1)           # nbr_dn[:, j] = t[:, (j - 1) % lanes]
        return t * cos + nbr_up * sin_l + nbr_dn * sin_r

    qb = rope(q).astype(jnp.bfloat16)
    kb = rope(k).astype(jnp.bfloat16)
    vb = v.astype(jnp.bfloat16)

    # per-head softmax attention (full (S,S) block; S and Dh are tiny here).
    # TODO(synk): for realistic seq lengths switch to a KV-tiled flash-style
    # loop with running max/sum scratch and re-budget for v7x's 64 MiB VMEM.
    ctx_parts = []
    for h in range(heads):
        lo = h * dim_head
        qh = qb[:, lo:lo + dim_head]
        kh = kb[:, lo:lo + dim_head]
        vh = vb[:, lo:lo + dim_head]
        s = jax.lax.dot_general(qh, kh, (((1,), (1,)), ((), ())),
                                preferred_element_type=jnp.float32)     # (S, S)
        s = s - jnp.max(s, axis=-1, keepdims=True)
        p = jnp.exp(s)
        p = p * pl.reciprocal(jnp.sum(p, axis=-1, keepdims=True), approx=True)
        ctx_parts.append(jnp.dot(p.astype(jnp.bfloat16), vh,
                                 preferred_element_type=jnp.float32))
    ctx = jnp.concatenate(ctx_parts, axis=-1)                           # (S, H*Dh)

    attn_out = jnp.dot(ctx.astype(jnp.bfloat16), wo_ref[0],
                       preferred_element_type=jnp.float32)
    x = x + attn_out                                                    # residual

    # ---------------- feed-forward (GEGLU) block ----------------
    f_in = _rmsnorm(x, g2_ref[0])
    f_bf = f_in.astype(jnp.bfloat16)
    hx = jnp.dot(f_bf, w1x_ref[0], preferred_element_type=jnp.float32) + b1x_ref[0]
    hg = jnp.dot(f_bf, w1g_ref[0], preferred_element_type=jnp.float32) + b1g_ref[0]
    hid = _gelu(hg) * hx
    ff_out = jnp.dot(hid.astype(jnp.bfloat16), w2_ref[0],
                     preferred_element_type=jnp.float32) + b2_ref[0]
    x = x + ff_out                                                      # residual

    xs_ref[...] = x

    @pl.when(layer == n_layers - 1)
    def _():                                   # final RMSNorm + single HBM store
        o_ref[0] = _rmsnorm(x, gf_ref[...]).astype(o_ref.dtype)


# ----------------------------- wrapper -----------------------------

def transformer_forward(x, params, cos, sin_l, sin_r, *, heads, dim_head):
    B, S, D = x.shape
    depth = params["wq"].shape[0]
    hdh = heads * dim_head
    di = params["w1x"].shape[-1]

    grid_spec = pltpu.PrefetchScalarGridSpec(
        num_scalar_prefetch=0,
        grid=(B, depth),
        in_specs=[
            pl.BlockSpec((1, S, D), lambda b, l: (b, 0, 0)),      # x
            pl.BlockSpec((S, hdh), lambda b, l: (0, 0)),          # cos
            pl.BlockSpec((S, hdh), lambda b, l: (0, 0)),          # sin (even lanes, -)
            pl.BlockSpec((S, hdh), lambda b, l: (0, 0)),          # sin (odd lanes, +)
            pl.BlockSpec((1, 1, D), lambda b, l: (l, 0, 0)),      # attn-norm gamma
            pl.BlockSpec((1, D, hdh), lambda b, l: (l, 0, 0)),    # wq (pre-scaled)
            pl.BlockSpec((1, D, hdh), lambda b, l: (l, 0, 0)),    # wk
            pl.BlockSpec((1, D, hdh), lambda b, l: (l, 0, 0)),    # wv
            pl.BlockSpec((1, hdh, D), lambda b, l: (l, 0, 0)),    # wo
            pl.BlockSpec((1, 1, D), lambda b, l: (l, 0, 0)),      # ff-norm gamma
            pl.BlockSpec((1, D, di), lambda b, l: (l, 0, 0)),     # w1 value half
            pl.BlockSpec((1, 1, di), lambda b, l: (l, 0, 0)),     # b1 value half
            pl.BlockSpec((1, D, di), lambda b, l: (l, 0, 0)),     # w1 gate half
            pl.BlockSpec((1, 1, di), lambda b, l: (l, 0, 0)),     # b1 gate half
            pl.BlockSpec((1, di, D), lambda b, l: (l, 0, 0)),     # w2
            pl.BlockSpec((1, 1, D), lambda b, l: (l, 0, 0)),      # b2
            pl.BlockSpec((1, D), lambda b, l: (0, 0)),            # final-norm gamma
        ],
        out_specs=pl.BlockSpec((1, S, D), lambda b, l: (b, 0, 0)),
        scratch_shapes=[pltpu.VMEM((S, D), jnp.float32)],         # residual stream
    )
    return pl.pallas_call(
        partial(_transformer_kernel, heads=heads, dim_head=dim_head),
        out_shape=jax.ShapeDtypeStruct((B, S, D), jnp.float32),
        grid_spec=grid_spec,
        compiler_params=pltpu.CompilerParams(
            dimension_semantics=("parallel", "arbitrary")),
    )(x, cos, sin_l, sin_r,
      params["g1"], params["wq"], params["wk"], params["wv"], params["wo"],
      params["g2"], params["w1x"], params["b1x"], params["w1g"], params["b1g"],
      params["w2"], params["b2"], params["gf"])


# ----------------------------- parameter / table setup -----------------------------

def rotary_tables(seq_len, dim_head, heads):
    # lucidrains rotary-embedding-torch convention (interleaved pairs):
    #   freqs[..., 2i] = freqs[..., 2i+1] = pos * theta^(-2i/d)
    inv_freq = 1.0 / (10000.0 ** (jnp.arange(0, dim_head, 2, dtype=jnp.float32) / dim_head))
    pos = jnp.arange(seq_len, dtype=jnp.float32)
    freqs = jnp.repeat(pos[:, None] * inv_freq[None, :], 2, axis=-1)     # (S, Dh)
    cos, sin = jnp.cos(freqs), jnp.sin(freqs)
    lane = jnp.arange(dim_head)
    sin_left = jnp.where(lane % 2 == 0, -sin, 0.0)    # multiplies t[j+1] (even lanes)
    sin_right = jnp.where(lane % 2 == 1, sin, 0.0)    # multiplies t[j-1] (odd lanes)
    tile = lambda t: jnp.tile(t, (1, heads)).astype(jnp.float32)         # (S, H*Dh)
    return tile(cos), tile(sin_left), tile(sin_right)


def init_params(key, *, dim, depth, heads, dim_head, ff_mult):
    hdh = heads * dim_head
    di = int(dim * ff_mult * 2 / 3)            # GEGLU inner dim (matches FeedForward)
    rms_scale = float(dim) ** 0.5              # folded into gammas
    q_scale = float(dim_head) ** -0.5          # folded into wq

    def nrm(k, shape):
        return jax.random.normal(k, shape, jnp.float32) * 0.02

    g1, g2, wq, wk, wv, wo = [], [], [], [], [], []
    w1x, b1x, w1g, b1g, w2, b2 = [], [], [], [], [], []
    for _ in range(depth):
        key, k1, k2, k3, k4, k5, k6 = jax.random.split(key, 7)
        wq.append(nrm(k1, (dim, hdh)) * q_scale)          # columns are head-major (h*Dh+d)
        wk.append(nrm(k2, (dim, hdh)))
        wv.append(nrm(k3, (dim, hdh)))
        wo.append(nrm(k4, (hdh, dim)))
        w1 = nrm(k5, (dim, 2 * di))                       # Linear(dim, 2*di) -> GEGLU chunk
        w1x.append(w1[:, :di])
        w1g.append(w1[:, di:])
        w2.append(nrm(k6, (di, dim)))
        g1.append(jnp.full((1, dim), rms_scale, jnp.float32))   # gamma(=1) * sqrt(dim)
        g2.append(jnp.full((1, dim), rms_scale, jnp.float32))
        b1x.append(jnp.zeros((1, di), jnp.float32))
        b1g.append(jnp.zeros((1, di), jnp.float32))
        b2.append(jnp.zeros((1, dim), jnp.float32))

    stk = lambda xs, dt=jnp.float32: jnp.stack(xs).astype(dt)
    return dict(
        g1=stk(g1), g2=stk(g2),
        wq=stk(wq, jnp.bfloat16), wk=stk(wk, jnp.bfloat16), wv=stk(wv, jnp.bfloat16),
        wo=stk(wo, jnp.bfloat16),
        w1x=stk(w1x, jnp.bfloat16), w1g=stk(w1g, jnp.bfloat16), w2=stk(w2, jnp.bfloat16),
        b1x=stk(b1x), b1g=stk(b1g), b2=stk(b2),
        gf=jnp.full((1, dim), rms_scale, jnp.float32),
    )


# ----------------------------- main -----------------------------

if __name__ == "__main__":
    B, S = 2, 16
    dim, depth, heads, dim_head, ff_mult = 96, 2, 8, 16, 4

    key = jax.random.PRNGKey(0)
    kx, kp = jax.random.split(key)
    x = jax.random.normal(kx, (B, S, dim), jnp.float32)
    params = init_params(kp, dim=dim, depth=depth, heads=heads,
                         dim_head=dim_head, ff_mult=ff_mult)
    cos, sin_l, sin_r = rotary_tables(S, dim_head, heads)

    fwd = jax.jit(partial(transformer_forward, heads=heads, dim_head=dim_head))
    out = jax.block_until_ready(fwd(x, params, cos, sin_l, sin_r))
    assert out.shape == (B, S, dim) and out.dtype == jnp.float32
    print("KERNEL_OK")
</pallas_src>

<mosaic_0001>
module attributes {stable_mosaic.version = 11 : i64} {
  func.func @_transformer_kernel(%arg0: i32, %arg1: i32, %arg2: memref<1x16x96xf32, #tpu.memory_space<vmem>>, %arg3: memref<16x128xf32, #tpu.memory_space<vmem>>, %arg4: memref<16x128xf32, #tpu.memory_space<vmem>>, %arg5: memref<16x128xf32, #tpu.memory_space<vmem>>, %arg6: memref<1x1x96xf32, #tpu.memory_space<vmem>>, %arg7: memref<1x96x128xbf16, #tpu.memory_space<vmem>>, %arg8: memref<1x96x128xbf16, #tpu.memory_space<vmem>>, %arg9: memref<1x96x128xbf16, #tpu.memory_space<vmem>>, %arg10: memref<1x128x96xbf16, #tpu.memory_space<vmem>>, %arg11: memref<1x1x96xf32, #tpu.memory_space<vmem>>, %arg12: memref<1x96x256xbf16, #tpu.memory_space<vmem>>, %arg13: memref<1x1x256xf32, #tpu.memory_space<vmem>>, %arg14: memref<1x96x256xbf16, #tpu.memory_space<vmem>>, %arg15: memref<1x1x256xf32, #tpu.memory_space<vmem>>, %arg16: memref<1x256x96xbf16, #tpu.memory_space<vmem>>, %arg17: memref<1x1x96xf32, #tpu.memory_space<vmem>>, %arg18: memref<1x96xf32, #tpu.memory_space<vmem>>, %arg19: memref<1x16x96xf32, #tpu.memory_space<vmem>>, %arg20: memref<16x96xf32, #tpu.memory_space<vmem>>) attributes {dimension_semantics = [#tpu.dimension_semantics<parallel>, #tpu.dimension_semantics<arbitrary>], iteration_bounds = array<i64: 2, 2>, scalar_prefetch = 0 : i64, scratch_operands = 1 : i64, tpu.core_type = #tpu.core_type<tc>, window_params = [{transform_indices = @transform_0, window_bounds = array<i64: 1, 16, 96>}, {pipeline_mode = #tpu.pipeline_mode<synchronous>, transform_indices = @transform_1, window_bounds = array<i64: 16, 128>}, {pipeline_mode = #tpu.pipeline_mode<synchronous>, transform_indices = @transform_2, window_bounds = array<i64: 16, 128>}, {pipeline_mode = #tpu.pipeline_mode<synchronous>, transform_indices = @transform_3, window_bounds = array<i64: 16, 128>}, {transform_indices = @transform_4, window_bounds = array<i64: 1, 1, 96>}, {transform_indices = @transform_5, window_bounds = array<i64: 1, 96, 128>}, {transform_indices = @transform_6, window_bounds = array<i64: 1, 96, 128>}, {transform_indices = @transform_7, window_bounds = array<i64: 1, 96, 128>}, {transform_indices = @transform_8, window_bounds = array<i64: 1, 128, 96>}, {transform_indices = @transform_9, window_bounds = array<i64: 1, 1, 96>}, {transform_indices = @transform_10, window_bounds = array<i64: 1, 96, 256>}, {transform_indices = @transform_11, window_bounds = array<i64: 1, 1, 256>}, {transform_indices = @transform_12, window_bounds = array<i64: 1, 96, 256>}, {transform_indices = @transform_13, window_bounds = array<i64: 1, 1, 256>}, {transform_indices = @transform_14, window_bounds = array<i64: 1, 256, 96>}, {transform_indices = @transform_15, window_bounds = array<i64: 1, 1, 96>}, {pipeline_mode = #tpu.pipeline_mode<synchronous>, transform_indices = @transform_16, window_bounds = array<i64: 1, 96>}, {transform_indices = @transform_17, window_bounds = array<i64: 1, 16, 96>}]} {
    %c0_i32 = arith.constant 0 : i32
    %0 = arith.cmpi eq, %arg1, %c0_i32 : i32
    %1 = arith.extui %0 : i1 to i32
    %c0_i32_0 = arith.constant 0 : i32
    %2 = arith.cmpi ne, %1, %c0_i32_0 : i32
    scf.if %2 {
      %c0_108 = arith.constant 0 : index
      %c0_109 = arith.constant 0 : index
      %c0_110 = arith.constant 0 : index
      %262 = vector.load %arg2[%c0_108, %c0_109, %c0_110] : memref<1x16x96xf32, #tpu.memory_space<vmem>>, vector<1x16x96xf32>
      %263 = vector.shape_cast %262 : vector<1x16x96xf32> to vector<16x96xf32>
      %c0_111 = arith.constant 0 : index
      %c0_112 = arith.constant 0 : index
      %264 = vector.load %arg20[%c0_111, %c0_112] : memref<16x96xf32, #tpu.memory_space<vmem>>, vector<16x96xf32>
      tpu.vector_store %arg20[%c0_111, %c0_112], %263 {strides = array<i32>} : memref<16x96xf32, #tpu.memory_space<vmem>>, vector<16x96xf32>,
    } else {
    }
    %c0 = arith.constant 0 : index
    %c0_1 = arith.constant 0 : index
    %3 = vector.load %arg20[%c0, %c0_1] : memref<16x96xf32, #tpu.memory_space<vmem>>, vector<16x96xf32>
    %c0_2 = arith.constant 0 : index
    %c0_3 = arith.constant 0 : index
    %c0_4 = arith.constant 0 : index
    %4 = vector.load %arg6[%c0_2, %c0_3, %c0_4] : memref<1x1x96xf32, #tpu.memory_space<vmem>>, vector<1x1x96xf32>
    %5 = vector.shape_cast %4 : vector<1x1x96xf32> to vector<1x96xf32>
    %6 = arith.mulf %3, %3 : vector<16x96xf32>
    %cst = arith.constant dense<0.000000e+00> : vector<16xf32>
    %7 = vector.multi_reduction <add>, %6, %cst [1] : vector<16x96xf32> to vector<16xf32>
    %8 = vector.shape_cast %7 : vector<16xf32> to vector<16x1xf32>
    %cst_5 = arith.constant 1.000000e-24 : f32
    %9 = vector.broadcast %cst_5 : f32 to vector<16x1xf32>
    %10 = arith.maximumf %8, %9 : vector<16x1xf32>
    %11 = math.rsqrt %10 : vector<16x1xf32>
    %12 = vector.broadcast %11 : vector<16x1xf32> to vector<16x96xf32>
    %13 = arith.mulf %3, %12 : vector<16x96xf32>
    %14 = vector.broadcast %5 : vector<1x96xf32> to vector<16x96xf32>
    %15 = arith.mulf %13, %14 : vector<16x96xf32>
    %16 = arith.truncf %15 : vector<16x96xf32> to vector<16x96xbf16>
    %c0_6 = arith.constant 0 : index
    %c0_7 = arith.constant 0 : index
    %c0_8 = arith.constant 0 : index
    %17 = vector.load %arg7[%c0_6, %c0_7, %c0_8] : memref<1x96x128xbf16, #tpu.memory_space<vmem>>, vector<1x96x128xbf16>
    %18 = vector.shape_cast %17 : vector<1x96x128xbf16> to vector<96x128xbf16>
    %cst_9 = arith.constant dense<0.000000e+00> : vector<16x128xf32>
    %19 = tpu.matmul %16, %18, %cst_9 {dimension_numbers = #tpu.dot_dimension_numbers<[1], [0], [0], [1], [0, 0, 1, 1], [], []>} : vector<16x96xbf16>, vector<96x128xbf16>, vector<16x128xf32> -> vector<16x128xf32>
    %c0_10 = arith.constant 0 : index
    %c0_11 = arith.constant 0 : index
    %c0_12 = arith.constant 0 : index
    %20 = vector.load %arg8[%c0_10, %c0_11, %c0_12] : memref<1x96x128xbf16, #tpu.memory_space<vmem>>, vector<1x96x128xbf16>
    %21 = vector.shape_cast %20 : vector<1x96x128xbf16> to vector<96x128xbf16>
    %cst_13 = arith.constant dense<0.000000e+00> : vector<16x128xf32>
    %22 = tpu.matmul %16, %21, %cst_13 {dimension_numbers = #tpu.dot_dimension_numbers<[1], [0], [0], [1], [0, 0, 1, 1], [], []>} : vector<16x96xbf16>, vector<96x128xbf16>, vector<16x128xf32> -> vector<16x128xf32>
    %c0_14 = arith.constant 0 : index
    %c0_15 = arith.constant 0 : index
    %c0_16 = arith.constant 0 : index
    %23 = vector.load %arg9[%c0_14, %c0_15, %c0_16] : memref<1x96x128xbf16, #tpu.memory_space<vmem>>, vector<1x96x128xbf16>
    %24 = vector.shape_cast %23 : vector<1x96x128xbf16> to vector<96x128xbf16>
    %cst_17 = arith.constant dense<0.000000e+00> : vector<16x128xf32>
    %25 = tpu.matmul %16, %24, %cst_17 {dimension_numbers = #tpu.dot_dimension_numbers<[1], [0], [0], [1], [0, 0, 1, 1], [], []>} : vector<16x96xbf16>, vector<96x128xbf16>, vector<16x128xf32> -> vector<16x128xf32>
    %c0_18 = arith.constant 0 : index
    %c0_19 = arith.constant 0 : index
    %26 = vector.load %arg3[%c0_18, %c0_19] : memref<16x128xf32, #tpu.memory_space<vmem>>, vector<16x128xf32>
    %c0_20 = arith.constant 0 : index
    %c0_21 = arith.constant 0 : index
    %27 = vector.load %arg4[%c0_20, %c0_21] : memref<16x128xf32, #tpu.memory_space<vmem>>, vector<16x128xf32>
    %c0_22 = arith.constant 0 : index
    %c0_23 = arith.constant 0 : index
    %28 = vector.load %arg5[%c0_22, %c0_23] : memref<16x128xf32, #tpu.memory_space<vmem>>, vector<16x128xf32>
    %c127_i32 = arith.constant 127 : i32
    %29 = tpu.dynamic_rotate %19 by %c127_i32 dim 1 : vector<16x128xf32>, i32 -> vector<16x128xf32>
    %c1_i32 = arith.constant 1 : i32
    %30 = tpu.dynamic_rotate %19 by %c1_i32 dim 1 : vector<16x128xf32>, i32 -> vector<16x128xf32>
    %31 = arith.mulf %19, %26 : vector<16x128xf32>
    %32 = arith.mulf %29, %27 : vector<16x128xf32>
    %33 = arith.addf %31, %32 : vector<16x128xf32>
    %34 = arith.mulf %30, %28 : vector<16x128xf32>
    %35 = arith.addf %33, %34 : vector<16x128xf32>
    %36 = arith.truncf %35 : vector<16x128xf32> to vector<16x128xbf16>
    %c127_i32_24 = arith.constant 127 : i32
    %37 = tpu.dynamic_rotate %22 by %c127_i32_24 dim 1 : vector<16x128xf32>, i32 -> vector<16x128xf32>
    %c1_i32_25 = arith.constant 1 : i32
    %38 = tpu.dynamic_rotate %22 by %c1_i32_25 dim 1 : vector<16x128xf32>, i32 -> vector<16x128xf32>
    %39 = arith.mulf %22, %26 : vector<16x128xf32>
    %40 = arith.mulf %37, %27 : vector<16x128xf32>
    %41 = arith.addf %39, %40 : vector<16x128xf32>
    %42 = arith.mulf %38, %28 : vector<16x128xf32>
    %43 = arith.addf %41, %42 : vector<16x128xf32>
    %44 = arith.truncf %43 : vector<16x128xf32> to vector<16x128xbf16>
    %45 = arith.truncf %25 : vector<16x128xf32> to vector<16x128xbf16>
    %46 = vector.extract_strided_slice %36 {offsets = [0, 0], sizes = [16, 16], strides = [1, 1]} : vector<16x128xbf16> to vector<16x16xbf16>
    %47 = vector.extract_strided_slice %44 {offsets = [0, 0], sizes = [16, 16], strides = [1, 1]} : vector<16x128xbf16> to vector<16x16xbf16>
    %48 = vector.extract_strided_slice %45 {offsets = [0, 0], sizes = [16, 16], strides = [1, 1]} : vector<16x128xbf16> to vector<16x16xbf16>
    %cst_26 = arith.constant dense<0.000000e+00> : vector<16x16xf32>
    %49 = tpu.matmul %46, %47, %cst_26 {dimension_numbers = #tpu.dot_dimension_numbers<[1], [1], [0], [0], [0, 0, 1, 0], [], []>} : vector<16x16xbf16>, vector<16x16xbf16>, vector<16x16xf32> -> vector<16x16xf32>
    %cst_27 = arith.constant dense<0xFF800000> : vector<16xf32>
    %50 = vector.multi_reduction <maximumf>, %49, %cst_27 [1] : vector<16x16xf32> to vector<16xf32>
    %51 = vector.shape_cast %50 : vector<16xf32> to vector<16x1xf32>
    %52 = vector.broadcast %51 : vector<16x1xf32> to vector<16x16xf32>
    %53 = arith.subf %49, %52 : vector<16x16xf32>
    %54 = math.exp %53 : vector<16x16xf32>
    %cst_28 = arith.constant dense<0.000000e+00> : vector<16xf32>
    %55 = vector.multi_reduction <add>, %54, %cst_28 [1] : vector<16x16xf32> to vector<16xf32>
    %56 = vector.shape_cast %55 : vector<16xf32> to vector<16x1xf32>
    %57 = tpu.reciprocal %56 {approx = true} : vector<16x1xf32> -> vector<16x1xf32>
    %58 = vector.broadcast %57 : vector<16x1xf32> to vector<16x16xf32>
    %59 = arith.mulf %54, %58 : vector<16x16xf32>
    %60 = arith.truncf %59 : vector<16x16xf32> to vector<16x16xbf16>
    %cst_29 = arith.constant dense<0.000000e+00> : vector<16x16xf32>
    %61 = tpu.matmul %60, %48, %cst_29 {dimension_numbers = #tpu.dot_dimension_numbers<[1], [0], [0], [1], [0, 0, 1, 1], [], []>} : vector<16x16xbf16>, vector<16x16xbf16>, vector<16x16xf32> -> vector<16x16xf32>
    %62 = vector.extract_strided_slice %36 {offsets = [0, 16], sizes = [16, 16], strides = [1, 1]} : vector<16x128xbf16> to vector<16x16xbf16>
    %63 = vector.extract_strided_slice %44 {offsets = [0, 16], sizes = [16, 16], strides = [1, 1]} : vector<16x128xbf16> to vector<16x16xbf16>
    %64 = vector.extract_strided_slice %45 {offsets = [0, 16], sizes = [16, 16], strides = [1, 1]} : vector<16x128xbf16> to vector<16x16xbf16>
    %cst_30 = arith.constant dense<0.000000e+00> : vector<16x16xf32>
    %65 = tpu.matmul %62, %63, %cst_30 {dimension_numbers = #tpu.dot_dimension_numbers<[1], [1], [0], [0], [0, 0, 1, 0], [], []>} : vector<16x16xbf16>, vector<16x16xbf16>, vector<16x16xf32> -> vector<16x16xf32>
    %cst_31 = arith.constant dense<0xFF800000> : vector<16xf32>
    %66 = vector.multi_reduction <maximumf>, %65, %cst_31 [1] : vector<16x16xf32> to vector<16xf32>
    %67 = vector.shape_cast %66 : vector<16xf32> to vector<16x1xf32>
    %68 = vector.broadcast %67 : vector<16x1xf32> to vector<16x16xf32>
    %69 = arith.subf %65, %68 : vector<16x16xf32>
    %70 = math.exp %69 : vector<16x16xf32>
    %cst_32 = arith.constant dense<0.000000e+00> : vector<16xf32>
    %71 = vector.multi_reduction <add>, %70, %cst_32 [1] : vector<16x16xf32> to vector<16xf32>
    %72 = vector.shape_cast %71 : vector<16xf32> to vector<16x1xf32>
    %73 = tpu.reciprocal %72 {approx = true} : vector<16x1xf32> -> vector<16x1xf32>
    %74 = vector.broadcast %73 : vector<16x1xf32> to vector<16x16xf32>
    %75 = arith.mulf %70, %74 : vector<16x16xf32>
    %76 = arith.truncf %75 : vector<16x16xf32> to vector<16x16xbf16>
    %cst_33 = arith.constant dense<0.000000e+00> : vector<16x16xf32>
    %77 = tpu.matmul %76, %64, %cst_33 {dimension_numbers = #tpu.dot_dimension_numbers<[1], [0], [0], [1], [0, 0, 1, 1], [], []>} : vector<16x16xbf16>, vector<16x16xbf16>, vector<16x16xf32> -> vector<16x16xf32>
    %78 = vector.extract_strided_slice %36 {offsets = [0, 32], sizes = [16, 16], strides = [1, 1]} : vector<16x128xbf16> to vector<16x16xbf16>
    %79 = vector.extract_strided_slice %44 {offsets = [0, 32], sizes = [16, 16], strides = [1, 1]} : vector<16x128xbf16> to vector<16x16xbf16>
    %80 = vector.extract_strided_slice %45 {offsets = [0, 32], sizes = [16, 16], strides = [1, 1]} : vector<16x128xbf16> to vector<16x16xbf16>
    %cst_34 = arith.constant dense<0.000000e+00> : vector<16x16xf32>
    %81 = tpu.matmul %78, %79, %cst_34 {dimension_numbers = #tpu.dot_dimension_numbers<[1], [1], [0], [0], [0, 0, 1, 0], [], []>} : vector<16x16xbf16>, vector<16x16xbf16>, vector<16x16xf32> -> vector<16x16xf32>
    %cst_35 = arith.constant dense<0xFF800000> : vector<16xf32>
    %82 = vector.multi_reduction <maximumf>, %81, %cst_35 [1] : vector<16x16xf32> to vector<16xf32>
    %83 = vector.shape_cast %82 : vector<16xf32> to vector<16x1xf32>
    %84 = vector.broadcast %83 : vector<16x1xf32> to vector<16x16xf32>
    %85 = arith.subf %81, %84 : vector<16x16xf32>
    %86 = math.exp %85 : vector<16x16xf32>
    %cst_36 = arith.constant dense<0.000000e+00> : vector<16xf32>
    %87 = vector.multi_reduction <add>, %86, %cst_36 [1] : vector<16x16xf32> to vector<16xf32>
    %88 = vector.shape_cast %87 : vector<16xf32> to vector<16x1xf32>
    %89 = tpu.reciprocal %88 {approx = true} : vector<16x1xf32> -> vector<16x1xf32>
    %90 = vector.broadcast %89 : vector<16x1xf32> to vector<16x16xf32>
    %91 = arith.mulf %86, %90 : vector<16x16xf32>
    %92 = arith.truncf %91 : vector<16x16xf32> to vector<16x16xbf16>
    %cst_37 = arith.constant dense<0.000000e+00> : vector<16x16xf32>
    %93 = tpu.matmul %92, %80, %cst_37 {dimension_numbers = #tpu.dot_dimension_numbers<[1], [0], [0], [1], [0, 0, 1, 1], [], []>} : vector<16x16xbf16>, vector<16x16xbf16>, vector<16x16xf32> -> vector<16x16xf32>
    %94 = vector.extract_strided_slice %36 {offsets = [0, 48], sizes = [16, 16], strides = [1, 1]} : vector<16x128xbf16> to vector<16x16xbf16>
    %95 = vector.extract_strided_slice %44 {offsets = [0, 48], sizes = [16, 16], strides = [1, 1]} : vector<16x128xbf16> to vector<16x16xbf16>
    %96 = vector.extract_strided_slice %45 {offsets = [0, 48], sizes = [16, 16], strides = [1, 1]} : vector<16x128xbf16> to vector<16x16xbf16>
    %cst_38 = arith.constant dense<0.000000e+00> : vector<16x16xf32>
    %97 = tpu.matmul %94, %95, %cst_38 {dimension_numbers = #tpu.dot_dimension_numbers<[1], [1], [0], [0], [0, 0, 1, 0], [], []>} : vector<16x16xbf16>, vector<16x16xbf16>, vector<16x16xf32> -> vector<16x16xf32>
    %cst_39 = arith.constant dense<0xFF800000> : vector<16xf32>
    %98 = vector.multi_reduction <maximumf>, %97, %cst_39 [1] : vector<16x16xf32> to vector<16xf32>
    %99 = vector.shape_cast %98 : vector<16xf32> to vector<16x1xf32>
    %100 = vector.broadcast %99 : vector<16x1xf32> to vector<16x16xf32>
    %101 = arith.subf %97, %100 : vector<16x16xf32>
    %102 = math.exp %101 : vector<16x16xf32>
    %cst_40 = arith.constant dense<0.000000e+00> : vector<16xf32>
    %103 = vector.multi_reduction <add>, %102, %cst_40 [1] : vector<16x16xf32> to vector<16xf32>
    %104 = vector.shape_cast %103 : vector<16xf32> to vector<16x1xf32>
    %105 = tpu.reciprocal %104 {approx = true} : vector<16x1xf32> -> vector<16x1xf32>
    %106 = vector.broadcast %105 : vector<16x1xf32> to vector<16x16xf32>
    %107 = arith.mulf %102, %106 : vector<16x16xf32>
    %108 = arith.truncf %107 : vector<16x16xf32> to vector<16x16xbf16>
    %cst_41 = arith.constant dense<0.000000e+00> : vector<16x16xf32>
    %109 = tpu.matmul %108, %96, %cst_41 {dimension_numbers = #tpu.dot_dimension_numbers<[1], [0], [0], [1], [0, 0, 1, 1], [], []>} : vector<16x16xbf16>, vector<16x16xbf16>, vector<16x16xf32> -> vector<16x16xf32>
    %110 = vector.extract_strided_slice %36 {offsets = [0, 64], sizes = [16, 16], strides = [1, 1]} : vector<16x128xbf16> to vector<16x16xbf16>
    %111 = vector.extract_strided_slice %44 {offsets = [0, 64], sizes = [16, 16], strides = [1, 1]} : vector<16x128xbf16> to vector<16x16xbf16>
    %112 = vector.extract_strided_slice %45 {offsets = [0, 64], sizes = [16, 16], strides = [1, 1]} : vector<16x128xbf16> to vector<16x16xbf16>
    %cst_42 = arith.constant dense<0.000000e+00> : vector<16x16xf32>
    %113 = tpu.matmul %110, %111, %cst_42 {dimension_numbers = #tpu.dot_dimension_numbers<[1], [1], [0], [0], [0, 0, 1, 0], [], []>} : vector<16x16xbf16>, vector<16x16xbf16>, vector<16x16xf32> -> vector<16x16xf32>
    %cst_43 = arith.constant dense<0xFF800000> : vector<16xf32>
    %114 = vector.multi_reduction <maximumf>, %113, %cst_43 [1] : vector<16x16xf32> to vector<16xf32>
    %115 = vector.shape_cast %114 : vector<16xf32> to vector<16x1xf32>
    %116 = vector.broadcast %115 : vector<16x1xf32> to vector<16x16xf32>
    %117 = arith.subf %113, %116 : vector<16x16xf32>
    %118 = math.exp %117 : vector<16x16xf32>
    %cst_44 = arith.constant dense<0.000000e+00> : vector<16xf32>
    %119 = vector.multi_reduction <add>, %118, %cst_44 [1] : vector<16x16xf32> to vector<16xf32>
    %120 = vector.shape_cast %119 : vector<16xf32> to vector<16x1xf32>
    %121 = tpu.reciprocal %120 {approx = true} : vector<16x1xf32> -> vector<16x1xf32>
    %122 = vector.broadcast %121 : vector<16x1xf32> to vector<16x16xf32>
    %123 = arith.mulf %118, %122 : vector<16x16xf32>
    %124 = arith.truncf %123 : vector<16x16xf32> to vector<16x16xbf16>
    %cst_45 = arith.constant dense<0.000000e+00> : vector<16x16xf32>
    %125 = tpu.matmul %124, %112, %cst_45 {dimension_numbers = #tpu.dot_dimension_numbers<[1], [0], [0], [1], [0, 0, 1, 1], [], []>} : vector<16x16xbf16>, vector<16x16xbf16>, vector<16x16xf32> -> vector<16x16xf32>
    %126 = vector.extract_strided_slice %36 {offsets = [0, 80], sizes = [16, 16], strides = [1, 1]} : vector<16x128xbf16> to vector<16x16xbf16>
    %127 = vector.extract_strided_slice %44 {offsets = [0, 80], sizes = [16, 16], strides = [1, 1]} : vector<16x128xbf16> to vector<16x16xbf16>
    %128 = vector.extract_strided_slice %45 {offsets = [0, 80], sizes = [16, 16], strides = [1, 1]} : vector<16x128xbf16> to vector<16x16xbf16>
    %cst_46 = arith.constant dense<0.000000e+00> : vector<16x16xf32>
    %129 = tpu.matmul %126, %127, %cst_46 {dimension_numbers = #tpu.dot_dimension_numbers<[1], [1], [0], [0], [0, 0, 1, 0], [], []>} : vector<16x16xbf16>, vector<16x16xbf16>, vector<16x16xf32> -> vector<16x16xf32>
    %cst_47 = arith.constant dense<0xFF800000> : vector<16xf32>
    %130 = vector.multi_reduction <maximumf>, %129, %cst_47 [1] : vector<16x16xf32> to vector<16xf32>
    %131 = vector.shape_cast %130 : vector<16xf32> to vector<16x1xf32>
    %132 = vector.broadcast %131 : vector<16x1xf32> to vector<16x16xf32>
    %133 = arith.subf %129, %132 : vector<16x16xf32>
    %134 = math.exp %133 : vector<16x16xf32>
    %cst_48 = arith.constant dense<0.000000e+00> : vector<16xf32>
    %135 = vector.multi_reduction <add>, %134, %cst_48 [1] : vector<16x16xf32> to vector<16xf32>
    %136 = vector.shape_cast %135 : vector<16xf32> to vector<16x1xf32>
    %137 = tpu.reciprocal %136 {approx = true} : vector<16x1xf32> -> vector<16x1xf32>
    %138 = vector.broadcast %137 : vector<16x1xf32> to vector<16x16xf32>
    %139 = arith.mulf %134, %138 : vector<16x16xf32>
    %140 = arith.truncf %139 : vector<16x16xf32> to vector<16x16xbf16>
    %cst_49 = arith.constant dense<0.000000e+00> : vector<16x16xf32>
    %141 = tpu.matmul %140, %128, %cst_49 {dimension_numbers = #tpu.dot_dimension_numbers<[1], [0], [0], [1], [0, 0, 1, 1], [], []>} : vector<16x16xbf16>, vector<16x16xbf16>, vector<16x16xf32> -> vector<16x16xf32>
    %142 = vector.extract_strided_slice %36 {offsets = [0, 96], sizes = [16, 16], strides = [1, 1]} : vector<16x128xbf16> to vector<16x16xbf16>
    %143 = vector.extract_strided_slice %44 {offsets = [0, 96], sizes = [16, 16], strides = [1, 1]} : vector<16x128xbf16> to vector<16x16xbf16>
    %144 = vector.extract_strided_slice %45 {offsets = [0, 96], sizes = [16, 16], strides = [1, 1]} : vector<16x128xbf16> to vector<16x16xbf16>
    %cst_50 = arith.constant dense<0.000000e+00> : vector<16x16xf32>
    %145 = tpu.matmul %142, %143, %cst_50 {dimension_numbers = #tpu.dot_dimension_numbers<[1], [1], [0], [0], [0, 0, 1, 0], [], []>} : vector<16x16xbf16>, vector<16x16xbf16>, vector<16x16xf32> -> vector<16x16xf32>
    %cst_51 = arith.constant dense<0xFF800000> : vector<16xf32>
    %146 = vector.multi_reduction <maximumf>, %145, %cst_51 [1] : vector<16x16xf32> to vector<16xf32>
    %147 = vector.shape_cast %146 : vector<16xf32> to vector<16x1xf32>
    %148 = vector.broadcast %147 : vector<16x1xf32> to vector<16x16xf32>
    %149 = arith.subf %145, %148 : vector<16x16xf32>
    %150 = math.exp %149 : vector<16x16xf32>
    %cst_52 = arith.constant dense<0.000000e+00> : vector<16xf32>
    %151 = vector.multi_reduction <add>, %150, %cst_52 [1] : vector<16x16xf32> to vector<16xf32>
    %152 = vector.shape_cast %151 : vector<16xf32> to vector<16x1xf32>
    %153 = tpu.reciprocal %152 {approx = true} : vector<16x1xf32> -> vector<16x1xf32>
    %154 = vector.broadcast %153 : vector<16x1xf32> to vector<16x16xf32>
    %155 = arith.mulf %150, %154 : vector<16x16xf32>
    %156 = arith.truncf %155 : vector<16x16xf32> to vector<16x16xbf16>
    %cst_53 = arith.constant dense<0.000000e+00> : vector<16x16xf32>
    %157 = tpu.matmul %156, %144, %cst_53 {dimension_numbers = #tpu.dot_dimension_numbers<[1], [0], [0], [1], [0, 0, 1, 1], [], []>} : vector<16x16xbf16>, vector<16x16xbf16>, vector<16x16xf32> -> vector<16x16xf32>
    %158 = vector.extract_strided_slice %36 {offsets = [0, 112], sizes = [16, 16], strides = [1, 1]} : vector<16x128xbf16> to vector<16x16xbf16>
    %159 = vector.extract_strided_slice %44 {offsets = [0, 112], sizes = [16, 16], strides = [1, 1]} : vector<16x128xbf16> to vector<16x16xbf16>
    %160 = vector.extract_strided_slice %45 {offsets = [0, 112], sizes = [16, 16], strides = [1, 1]} : vector<16x128xbf16> to vector<16x16xbf16>
    %cst_54 = arith.constant dense<0.000000e+00> : vector<16x16xf32>
    %161 = tpu.matmul %158, %159, %cst_54 {dimension_numbers = #tpu.dot_dimension_numbers<[1], [1], [0], [0], [0, 0, 1, 0], [], []>} : vector<16x16xbf16>, vector<16x16xbf16>, vector<16x16xf32> -> vector<16x16xf32>
    %cst_55 = arith.constant dense<0xFF800000> : vector<16xf32>
    %162 = vector.multi_reduction <maximumf>, %161, %cst_55 [1] : vector<16x16xf32> to vector<16xf32>
    %163 = vector.shape_cast %162 : vector<16xf32> to vector<16x1xf32>
    %164 = vector.broadcast %163 : vector<16x1xf32> to vector<16x16xf32>
    %165 = arith.subf %161, %164 : vector<16x16xf32>
    %166 = math.exp %165 : vector<16x16xf32>
    %cst_56 = arith.constant dense<0.000000e+00> : vector<16xf32>
    %167 = vector.multi_reduction <add>, %166, %cst_56 [1] : vector<16x16xf32> to vector<16xf32>
    %168 = vector.shape_cast %167 : vector<16xf32> to vector<16x1xf32>
    %169 = tpu.reciprocal %168 {approx = true} : vector<16x1xf32> -> vector<16x1xf32>
    %170 = vector.broadcast %169 : vector<16x1xf32> to vector<16x16xf32>
    %171 = arith.mulf %166, %170 : vector<16x16xf32>
    %172 = arith.truncf %171 : vector<16x16xf32> to vector<16x16xbf16>
    %cst_57 = arith.constant dense<0.000000e+00> : vector<16x16xf32>
    %173 = tpu.matmul %172, %160, %cst_57 {dimension_numbers = #tpu.dot_dimension_numbers<[1], [0], [0], [1], [0, 0, 1, 1], [], []>} : vector<16x16xbf16>, vector<16x16xbf16>, vector<16x16xf32> -> vector<16x16xf32>
    %174 = tpu.concatenate %61, %77, %93, %109, %125, %141, %157, %173 in 1 : vector<16x16xf32>, vector<16x16xf32>, vector<16x16xf32>, vector<16x16xf32>, vector<16x16xf32>, vector<16x16xf32>, vector<16x16xf32>, vector<16x16xf32> -> vector<16x128xf32>
    %175 = arith.truncf %174 : vector<16x128xf32> to vector<16x128xbf16>
    %c0_58 = arith.constant 0 : index
    %c0_59 = arith.constant 0 : index
    %c0_60 = arith.constant 0 : index
    %176 = vector.load %arg10[%c0_58, %c0_59, %c0_60] : memref<1x128x96xbf16, #tpu.memory_space<vmem>>, vector<1x128x96xbf16>
    %177 = vector.shape_cast %176 : vector<1x128x96xbf16> to vector<128x96xbf16>
    %cst_61 = arith.constant dense<0.000000e+00> : vector<16x96xf32>
    %178 = tpu.matmul %175, %177, %cst_61 {dimension_numbers = #tpu.dot_dimension_numbers<[1], [0], [0], [1], [0, 0, 1, 1], [], []>} : vector<16x128xbf16>, vector<128x96xbf16>, vector<16x96xf32> -> vector<16x96xf32>
    %179 = arith.addf %3, %178 : vector<16x96xf32>
    %c0_62 = arith.constant 0 : index
    %c0_63 = arith.constant 0 : index
    %c0_64 = arith.constant 0 : index
    %180 = vector.load %arg11[%c0_62, %c0_63, %c0_64] : memref<1x1x96xf32, #tpu.memory_space<vmem>>, vector<1x1x96xf32>
    %181 = vector.shape_cast %180 : vector<1x1x96xf32> to vector<1x96xf32>
    %182 = arith.mulf %179, %179 : vector<16x96xf32>
    %cst_65 = arith.constant dense<0.000000e+00> : vector<16xf32>
    %183 = vector.multi_reduction <add>, %182, %cst_65 [1] : vector<16x96xf32> to vector<16xf32>
    %184 = vector.shape_cast %183 : vector<16xf32> to vector<16x1xf32>
    %cst_66 = arith.constant 1.000000e-24 : f32
    %185 = vector.broadcast %cst_66 : f32 to vector<16x1xf32>
    %186 = arith.maximumf %184, %185 : vector<16x1xf32>
    %187 = math.rsqrt %186 : vector<16x1xf32>
    %188 = vector.broadcast %187 : vector<16x1xf32> to vector<16x96xf32>
    %189 = arith.mulf %179, %188 : vector<16x96xf32>
    %190 = vector.broadcast %181 : vector<1x96xf32> to vector<16x96xf32>
    %191 = arith.mulf %189, %190 : vector<16x96xf32>
    %192 = arith.truncf %191 : vector<16x96xf32> to vector<16x96xbf16>
    %c0_67 = arith.constant 0 : index
    %c0_68 = arith.constant 0 : index
    %c0_69 = arith.constant 0 : index
    %193 = vector.load %arg12[%c0_67, %c0_68, %c0_69] : memref<1x96x256xbf16, #tpu.memory_space<vmem>>, vector<1x96x256xbf16>
    %194 = vector.shape_cast %193 : vector<1x96x256xbf16> to vector<96x256xbf16>
    %cst_70 = arith.constant dense<0.000000e+00> : vector<16x256xf32>
    %195 = tpu.matmul %192, %194, %cst_70 {dimension_numbers = #tpu.dot_dimension_numbers<[1], [0], [0], [1], [0, 0, 1, 1], [], []>} : vector<16x96xbf16>, vector<96x256xbf16>, vector<16x256xf32> -> vector<16x256xf32>
    %c0_71 = arith.constant 0 : index
    %c0_72 = arith.constant 0 : index
    %c0_73 = arith.constant 0 : index
    %196 = vector.load %arg13[%c0_71, %c0_72, %c0_73] : memref<1x1x256xf32, #tpu.memory_space<vmem>>, vector<1x1x256xf32>
    %197 = vector.shape_cast %196 : vector<1x1x256xf32> to vector<1x256xf32>
    %198 = vector.broadcast %197 : vector<1x256xf32> to vector<16x256xf32>
    %199 = arith.addf %195, %198 : vector<16x256xf32>
    %c0_74 = arith.constant 0 : index
    %c0_75 = arith.constant 0 : index
    %c0_76 = arith.constant 0 : index
    %200 = vector.load %arg14[%c0_74, %c0_75, %c0_76] : memref<1x96x256xbf16, #tpu.memory_space<vmem>>, vector<1x96x256xbf16>
    %201 = vector.shape_cast %200 : vector<1x96x256xbf16> to vector<96x256xbf16>
    %cst_77 = arith.constant dense<0.000000e+00> : vector<16x256xf32>
    %202 = tpu.matmul %192, %201, %cst_77 {dimension_numbers = #tpu.dot_dimension_numbers<[1], [0], [0], [1], [0, 0, 1, 1], [], []>} : vector<16x96xbf16>, vector<96x256xbf16>, vector<16x256xf32> -> vector<16x256xf32>
    %c0_78 = arith.constant 0 : index
    %c0_79 = arith.constant 0 : index
    %c0_80 = arith.constant 0 : index
    %203 = vector.load %arg15[%c0_78, %c0_79, %c0_80] : memref<1x1x256xf32, #tpu.memory_space<vmem>>, vector<1x1x256xf32>
    %204 = vector.shape_cast %203 : vector<1x1x256xf32> to vector<1x256xf32>
    %205 = vector.broadcast %204 : vector<1x256xf32> to vector<16x256xf32>
    %206 = arith.addf %202, %205 : vector<16x256xf32>
    %cst_81 = arith.constant 5.000000e-01 : f32
    %207 = vector.broadcast %cst_81 : f32 to vector<16x256xf32>
    %208 = arith.mulf %207, %206 : vector<16x256xf32>
    %cst_82 = arith.constant 0.707106769 : f32
    %209 = vector.broadcast %cst_82 : f32 to vector<16x256xf32>
    %210 = arith.mulf %206, %209 : vector<16x256xf32>
    %cst_83 = arith.constant 0.000000e+00 : f32
    %211 = vector.broadcast %cst_83 : f32 to vector<16x256xf32>
    %212 = arith.cmpf oge, %210, %211 : vector<16x256xf32>
    %cst_84 = arith.constant 1.000000e+00 : f32
    %cst_85 = arith.constant -1.000000e+00 : f32
    %213 = vector.broadcast %cst_84 : f32 to vector<16x256xf32>
    %214 = vector.broadcast %cst_85 : f32 to vector<16x256xf32>
    %215 = arith.select %212, %213, %214 : vector<16x256xi1>, vector<16x256xf32>
    %216 = math.absf %210 : vector<16x256xf32>
    %cst_86 = arith.constant 0.327591091 : f32
    %217 = vector.broadcast %cst_86 : f32 to vector<16x256xf32>
    %218 = arith.mulf %217, %216 : vector<16x256xf32>
    %cst_87 = arith.constant 1.000000e+00 : f32
    %219 = vector.broadcast %cst_87 : f32 to vector<16x256xf32>
    %220 = arith.addf %219, %218 : vector<16x256xf32>
    %cst_88 = arith.constant 1.000000e+00 : f32
    %221 = vector.broadcast %cst_88 : f32 to vector<16x256xf32>
    %222 = arith.divf %221, %220 : vector<16x256xf32>
    %cst_89 = arith.constant 1.06140542 : f32
    %223 = vector.broadcast %cst_89 : f32 to vector<16x256xf32>
    %224 = arith.mulf %223, %222 : vector<16x256xf32>
    %cst_90 = arith.constant -1.45315206 : f32
    %225 = vector.broadcast %cst_90 : f32 to vector<16x256xf32>
    %226 = arith.addf %224, %225 : vector<16x256xf32>
    %227 = arith.mulf %226, %222 : vector<16x256xf32>
    %cst_91 = arith.constant 1.42141378 : f32
    %228 = vector.broadcast %cst_91 : f32 to vector<16x256xf32>
    %229 = arith.addf %227, %228 : vector<16x256xf32>
    %230 = arith.mulf %229, %222 : vector<16x256xf32>
    %cst_92 = arith.constant -0.284496725 : f32
    %231 = vector.broadcast %cst_92 : f32 to vector<16x256xf32>
    %232 = arith.addf %230, %231 : vector<16x256xf32>
    %233 = arith.mulf %232, %222 : vector<16x256xf32>
    %cst_93 = arith.constant 0.254829586 : f32
    %234 = vector.broadcast %cst_93 : f32 to vector<16x256xf32>
    %235 = arith.addf %233, %234 : vector<16x256xf32>
    %236 = arith.mulf %235, %222 : vector<16x256xf32>
    %cst_94 = arith.constant 0.000000e+00 : f32
    %237 = vector.broadcast %cst_94 : f32 to vector<16x256xf32>
    %238 = arith.subf %237, %216 : vector<16x256xf32>
    %239 = arith.mulf %238, %216 : vector<16x256xf32>
    %240 = math.exp %239 : vector<16x256xf32>
    %241 = arith.mulf %236, %240 : vector<16x256xf32>
    %cst_95 = arith.constant 1.000000e+00 : f32
    %242 = vector.broadcast %cst_95 : f32 to vector<16x256xf32>
    %243 = arith.subf %242, %241 : vector<16x256xf32>
    %244 = arith.mulf %215, %243 : vector<16x256xf32>
    %cst_96 = arith.constant 1.000000e+00 : f32
    %245 = vector.broadcast %cst_96 : f32 to vector<16x256xf32>
    %246 = arith.addf %245, %244 : vector<16x256xf32>
    %247 = arith.mulf %208, %246 : vector<16x256xf32>
    %248 = arith.mulf %247, %199 : vector<16x256xf32>
    %249 = arith.truncf %248 : vector<16x256xf32> to vector<16x256xbf16>
    %c0_97 = arith.constant 0 : index
    %c0_98 = arith.constant 0 : index
    %c0_99 = arith.constant 0 : index
    %250 = vector.load %arg16[%c0_97, %c0_98, %c0_99] : memref<1x256x96xbf16, #tpu.memory_space<vmem>>, vector<1x256x96xbf16>
    %251 = vector.shape_cast %250 : vector<1x256x96xbf16> to vector<256x96xbf16>
    %cst_100 = arith.constant dense<0.000000e+00> : vector<16x96xf32>
    %252 = tpu.matmul %249, %251, %cst_100 {dimension_numbers = #tpu.dot_dimension_numbers<[1], [0], [0], [1], [0, 0, 1, 1], [], []>} : vector<16x256xbf16>, vector<256x96xbf16>, vector<16x96xf32> -> vector<16x96xf32>
    %c0_101 = arith.constant 0 : index
    %c0_102 = arith.constant 0 : index
    %c0_103 = arith.constant 0 : index
    %253 = vector.load %arg17[%c0_101, %c0_102, %c0_103] : memref<1x1x96xf32, #tpu.memory_space<vmem>>, vector<1x1x96xf32>
    %254 = vector.shape_cast %253 : vector<1x1x96xf32> to vector<1x96xf32>
    %255 = vector.broadcast %254 : vector<1x96xf32> to vector<16x96xf32>
    %256 = arith.addf %252, %255 : vector<16x96xf32>
    %257 = arith.addf %179, %256 : vector<16x96xf32>
    %c0_104 = arith.constant 0 : index
    %c0_105 = arith.constant 0 : index
    %258 = vector.load %arg20[%c0_104, %c0_105] : memref<16x96xf32, #tpu.memory_space<vmem>>, vector<16x96xf32>
    tpu.vector_store %arg20[%c0_104, %c0_105], %257 {strides = array<i32>} : memref<16x96xf32, #tpu.memory_space<vmem>>, vector<16x96xf32>,
    %c1_i32_106 = arith.constant 1 : i32
    %259 = arith.cmpi eq, %arg1, %c1_i32_106 : i32
    %260 = arith.extui %259 : i1 to i32
    %c0_i32_107 = arith.constant 0 : i32
    %261 = arith.cmpi ne, %260, %c0_i32_107 : i32
    scf.if %261 {
      %c0_108 = arith.constant 0 : index
      %c0_109 = arith.constant 0 : index
      %262 = vector.load %arg18[%c0_108, %c0_109] : memref<1x96xf32, #tpu.memory_space<vmem>>, vector<1x96xf32>
      %263 = arith.mulf %257, %257 : vector<16x96xf32>
      %cst_110 = arith.constant dense<0.000000e+00> : vector<16xf32>
      %264 = vector.multi_reduction <add>, %263, %cst_110 [1] : vector<16x96xf32> to vector<16xf32>
      %265 = vector.shape_cast %264 : vector<16xf32> to vector<16x1xf32>
      %cst_111 = arith.constant 1.000000e-24 : f32
      %266 = vector.broadcast %cst_111 : f32 to vector<16x1xf32>
      %267 = arith.maximumf %265, %266 : vector<16x1xf32>
      %268 = math.rsqrt %267 : vector<16x1xf32>
      %269 = vector.broadcast %268 : vector<16x1xf32> to vector<16x96xf32>
      %270 = arith.mulf %257, %269 : vector<16x96xf32>
      %271 = vector.broadcast %262 : vector<1x96xf32> to vector<16x96xf32>
      %272 = arith.mulf %270, %271 : vector<16x96xf32>
      %c0_112 = arith.constant 0 : index
      %c0_113 = arith.constant 0 : index
      %c0_114 = arith.constant 0 : index
      %273 = vector.load %arg19[%c0_112, %c0_113, %c0_114] : memref<1x16x96xf32, #tpu.memory_space<vmem>>, vector<1x16x96xf32>
      %274 = vector.shape_cast %273 : vector<1x16x96xf32> to vector<16x96xf32>
      %275 = vector.shape_cast %272 : vector<16x96xf32> to vector<1x16x96xf32>
      tpu.vector_store %arg19[%c0_112, %c0_113, %c0_114], %275 {strides = array<i32>} : memref<1x16x96xf32, #tpu.memory_space<vmem>>, vector<1x16x96xf32>,
    } else {
    }
    return
  }
  func.func @transform_0(%arg0: i32, %arg1: i32) -> (i32, i32, i32) {
    %c0_i32 = arith.constant 0 : i32
    %c0_i32_0 = arith.constant 0 : i32
    %c0_i32_1 = arith.constant 0 : i32
    return %arg0, %c0_i32, %c0_i32_0 : i32, i32, i32
  }
  func.func @transform_1(%arg0: i32, %arg1: i32) -> (i32, i32) {
    %c0_i32 = arith.constant 0 : i32
    %c0_i32_0 = arith.constant 0 : i32
    %c0_i32_1 = arith.constant 0 : i32
    return %c0_i32, %c0_i32_0 : i32, i32
  }
  func.func @transform_2(%arg0: i32, %arg1: i32) -> (i32, i32) {
    %c0_i32 = arith.constant 0 : i32
    %c0_i32_0 = arith.constant 0 : i32
    %c0_i32_1 = arith.constant 0 : i32
    return %c0_i32, %c0_i32_0 : i32, i32
  }
  func.func @transform_3(%arg0: i32, %arg1: i32) -> (i32, i32) {
    %c0_i32 = arith.constant 0 : i32
    %c0_i32_0 = arith.constant 0 : i32
    %c0_i32_1 = arith.constant 0 : i32
    return %c0_i32, %c0_i32_0 : i32, i32
  }
  func.func @transform_4(%arg0: i32, %arg1: i32) -> (i32, i32, i32) {
    %c0_i32 = arith.constant 0 : i32
    %c0_i32_0 = arith.constant 0 : i32
    %c0_i32_1 = arith.constant 0 : i32
    return %arg1, %c0_i32, %c0_i32_0 : i32, i32, i32
  }
  func.func @transform_5(%arg0: i32, %arg1: i32) -> (i32, i32, i32) {
    %c0_i32 = arith.constant 0 : i32
    %c0_i32_0 = arith.constant 0 : i32
    %c0_i32_1 = arith.constant 0 : i32
    return %arg1, %c0_i32, %c0_i32_0 : i32, i32, i32
  }
  func.func @transform_6(%arg0: i32, %arg1: i32) -> (i32, i32, i32) {
    %c0_i32 = arith.constant 0 : i32
    %c0_i32_0 = arith.constant 0 : i32
    %c0_i32_1 = arith.constant 0 : i32
    return %arg1, %c0_i32, %c0_i32_0 : i32, i32, i32
  }
  func.func @transform_7(%arg0: i32, %arg1: i32) -> (i32, i32, i32) {
    %c0_i32 = arith.constant 0 : i32
    %c0_i32_0 = arith.constant 0 : i32
    %c0_i32_1 = arith.constant 0 : i32
    return %arg1, %c0_i32, %c0_i32_0 : i32, i32, i32
  }
  func.func @transform_8(%arg0: i32, %arg1: i32) -> (i32, i32, i32) {
    %c0_i32 = arith.constant 0 : i32
    %c0_i32_0 = arith.constant 0 : i32
    %c0_i32_1 = arith.constant 0 : i32
    return %arg1, %c0_i32, %c0_i32_0 : i32, i32, i32
  }
  func.func @transform_9(%arg0: i32, %arg1: i32) -> (i32, i32, i32) {
    %c0_i32 = arith.constant 0 : i32
    %c0_i32_0 = arith.constant 0 : i32
    %c0_i32_1 = arith.constant 0 : i32
    return %arg1, %c0_i32, %c0_i32_0 : i32, i32, i32
  }
  func.func @transform_10(%arg0: i32, %arg1: i32) -> (i32, i32, i32) {
    %c0_i32 = arith.constant 0 : i32
    %c0_i32_0 = arith.constant 0 : i32
    %c0_i32_1 = arith.constant 0 : i32
    return %arg1, %c0_i32, %c0_i32_0 : i32, i32, i32
  }
  func.func @transform_11(%arg0: i32, %arg1: i32) -> (i32, i32, i32) {
    %c0_i32 = arith.constant 0 : i32
    %c0_i32_0 = arith.constant 0 : i32
    %c0_i32_1 = arith.constant 0 : i32
    return %arg1, %c0_i32, %c0_i32_0 : i32, i32, i32
  }
  func.func @transform_12(%arg0: i32, %arg1: i32) -> (i32, i32, i32) {
    %c0_i32 = arith.constant 0 : i32
    %c0_i32_0 = arith.constant 0 : i32
    %c0_i32_1 = arith.constant 0 : i32
    return %arg1, %c0_i32, %c0_i32_0 : i32, i32, i32
  }
  func.func @transform_13(%arg0: i32, %arg1: i32) -> (i32, i32, i32) {
    %c0_i32 = arith.constant 0 : i32
    %c0_i32_0 = arith.constant 0 : i32
    %c0_i32_1 = arith.constant 0 : i32
    return %arg1, %c0_i32, %c0_i32_0 : i32, i32, i32
  }
  func.func @transform_14(%arg0: i32, %arg1: i32) -> (i32, i32, i32) {
    %c0_i32 = arith.constant 0 : i32
    %c0_i32_0 = arith.constant 0 : i32
    %c0_i32_1 = arith.constant 0 : i32
    return %arg1, %c0_i32, %c0_i32_0 : i32, i32, i32
  }
  func.func @transform_15(%arg0: i32, %arg1: i32) -> (i32, i32, i32) {
    %c0_i32 = arith.constant 0 : i32
    %c0_i32_0 = arith.constant 0 : i32
    %c0_i32_1 = arith.constant 0 : i32
    return %arg1, %c0_i32, %c0_i32_0 : i32, i32, i32
  }
  func.func @transform_16(%arg0: i32, %arg1: i32) -> (i32, i32) {
    %c0_i32 = arith.constant 0 : i32
    %c0_i32_0 = arith.constant 0 : i32
    %c0_i32_1 = arith.constant 0 : i32
    return %c0_i32, %c0_i32_0 : i32, i32
  }
  func.func @transform_17(%arg0: i32, %arg1: i32) -> (i32, i32, i32) {
    %c0_i32 = arith.constant 0 : i32
    %c0_i32_0 = arith.constant 0 : i32
    %c0_i32_1 = arith.constant 0 : i32
    return %arg0, %c0_i32, %c0_i32_0 : i32, i32, i32
  }
}

</mosaic_0001>

<llo_original>
// kernel: transformer_forward.1
$region0: #{transformer_forward.1}
  #allocation0 [shape = 'u32[]', space=smem, size = 0x4, offset = 0x4, fixed_abs, tag = 'smem constant byte address 0x4 - core index']
  #allocation1 [shape = 'u32[72,128]{1,0:T(1,128)}', space=vmem, size = 0x9000, scoped, tag = 'internal scratch']
  #allocation2 [shape = 'f32[16,96]{1,0:T(8,128)}', space=vmem, size = 0x2000, scoped, tag = 'scratch operand']
  %s0 = inlined_call_operand.hbm [shape: f32[2,16,96], index: 0, kind: input, shape index: {}]
  %s1 = inlined_call_operand.hbm [shape: f32[16,128], index: 1, kind: input, shape index: {}]
  %s2 = inlined_call_operand.hbm [shape: f32[16,128], index: 2, kind: input, shape index: {}]
  %s3 = inlined_call_operand.hbm [shape: f32[16,128], index: 3, kind: input, shape index: {}]
  %s4 = inlined_call_operand.hbm [shape: f32[2,1,96], index: 4, kind: input, shape index: {}]
  %s5 = inlined_call_operand.vmem [shape: bf16[2,96,128], index: 5, kind: input, shape index: {}]
  %s6 = inlined_call_operand.hbm [shape: bf16[2,96,128], index: 6, kind: input, shape index: {}]
  %s7 = inlined_call_operand.hbm [shape: bf16[2,96,128], index: 7, kind: input, shape index: {}]
  %s8 = inlined_call_operand.vmem [shape: bf16[2,128,96], index: 8, kind: input, shape index: {}]
  %s9 = inlined_call_operand.hbm [shape: f32[2,1,96], index: 9, kind: input, shape index: {}]
  %s10 = inlined_call_operand.vmem [shape: bf16[2,96,256], index: 10, kind: input, shape index: {}]
  %s11 = inlined_call_operand.vmem [shape: f32[2,1,256], index: 11, kind: input, shape index: {}]
  %s12 = inlined_call_operand.vmem [shape: bf16[2,96,256], index: 12, kind: input, shape index: {}]
  %s13 = inlined_call_operand.vmem [shape: f32[2,1,256], index: 13, kind: input, shape index: {}]
  %s14 = inlined_call_operand.vmem [shape: bf16[2,256,96], index: 14, kind: input, shape index: {}]
  %s15 = inlined_call_operand.hbm [shape: f32[2,1,96], index: 15, kind: input, shape index: {}]
  %s16 = inlined_call_operand.hbm [shape: f32[1,96], index: 16, kind: input, shape index: {}]
  %s17 = inlined_call_operand.hbm [shape: f32[2,16,96], index: 17, kind: output, shape index: {}]
  %s18 = sld [smem:[#allocation0]]
  $region149: #{transformer_forward.1} parent=0
    _
  %s20 = ssub.s32 1, %s18
  %s21 = scalar_select 0, %s20, %s18
  $region1: #{transformer_forward.1} parent=0
    #allocation3 [shape = 'u8[16384]{0}', space=vmem, size = 0x4000, scoped, tag = 'input window, operand 0']
    #allocation4 [shape = 's32[2]{0}', space=sflag, size = 0x8, scoped, tag = 'scoped memory for transformer_forward.1']
    #allocation5 [shape = 's32[2]{0}', space=sflag, size = 0x8, scoped, tag = 'scoped memory for transformer_forward.1']
    #allocation6 [shape = 'u8[8192]{0}', space=vmem, size = 0x2000, scoped, tag = 'input window, operand 1, single buffered']
    #allocation7 [shape = 's32[1]{0}', space=sflag, size = 0x4, scoped, tag = 'scoped memory for transformer_forward.1']
    #allocation8 [shape = 'u8[8192]{0}', space=vmem, size = 0x2000, scoped, tag = 'input window, operand 2, single buffered']
    #allocation9 [shape = 'u8[8192]{0}', space=vmem, size = 0x2000, scoped, tag = 'input window, operand 3, single buffered']
    #allocation10 [shape = 's32[1]{0}', space=sflag, size = 0x4, scoped, tag = 'scoped memory for transformer_forward.1']
    #allocation11 [shape = 'u8[1024]{0}', space=vmem, size = 0x400, scoped, tag = 'input window, operand 4']
    #allocation12 [shape = 'u8[49152]{0}', space=vmem, size = 0xc000, scoped, tag = 'input window, operand 6']
    #allocation13 [shape = 'u8[49152]{0}', space=vmem, size = 0xc000, scoped, tag = 'input window, operand 7']
    #allocation14 [shape = 'u8[1024]{0}', space=vmem, size = 0x400, scoped, tag = 'input window, operand 9']
    #allocation15 [shape = 'u8[1024]{0}', space=vmem, size = 0x400, scoped, tag = 'input window, operand 15']
    #allocation16 [shape = 'u8[512]{0}', space=vmem, size = 0x400, scoped, tag = 'input window, operand 16, single buffered']
    #allocation17 [shape = 'u8[16384]{0}', space=vmem, size = 0x4000, scoped, tag = 'output window, operand 0']
    %22 = vsyncpa [#allocation4], 0
    %s23 = scalar_lea.sflag [#allocation4], 1
    %24 = vsyncpa %s23, 0
    %25 = vsyncpa [#allocation7], 0
    %26 = vsyncpa [#allocation10], 0
    %27 = vsyncpa [#allocation5], 0
    %s28 = scalar_lea.sflag [#allocation5], 1
    %29 = vsyncpa %s28, 0
    loop: start=0, step=1, limit=6
    $region2: #{transformer_forward.1} parent=1 // loop_pre_header
      _
    $region3: #{transformer_forward.1} parent=1 // loop_header
      %s31 = sphi 0, %s35
      %p32 = scmp.ge.s32.totalorder %s31, 6
      %s38 = sphi 0, %s50
      %s39 = sphi 0, %s46
      %s40 = sphi 0, %s38
      %s41 = sphi 0, %s39
      %s42 = sphi 0, %s40
      %s43 = sphi 0, %s41
      %s53 = sphi 0, %s55
      %s56 = sphi 0, %s53
      %s57 = sphi 0, %s56
      %s73 = sphi 0, %s57
      %s77 = sphi 0, %s77
      %s79 = sphi 0, %s77
      %s80 = sphi 0, %s79
      %s94 = sphi 0, %s80
      %s98 = sphi 0, %s98
      %s100 = sphi 0, %s98
      %s101 = sphi 0, %s100
      %s115 = sphi 0, %s101
      %s119 = sphi 0, %s119
      %s121 = sphi 0, %s119
      %s122 = sphi 0, %s121
      %s136 = sphi 0, %s122
      %s142 = sphi 0, %s144
      %s145 = sphi 0, %s142
      %s146 = sphi 0, %s145
      %s162 = sphi 0, %s146
      %s168 = sphi 0, %s170
      %s171 = sphi 0, %s168
      %s172 = sphi 0, %s171
      %s188 = sphi 0, %s172
      %s194 = sphi 0, %s196
      %s197 = sphi 0, %s194
      %s198 = sphi 0, %s197
      %s214 = sphi 0, %s198
      %s220 = sphi 0, %s222
      %s223 = sphi 0, %s220
      %s224 = sphi 0, %s223
      %s240 = sphi 0, %s224
      %s246 = sphi 0, %s248
      %s249 = sphi 0, %s246
      %s250 = sphi 0, %s249
      %s266 = sphi 0, %s250
      %s272 = sphi 0, %s274
      %s275 = sphi 0, %s272
      %s276 = sphi 0, %s275
      %s292 = sphi 0, %s276
      %s298 = sphi 0, %s300
      %s301 = sphi 0, %s298
      %s302 = sphi 0, %s301
      %s318 = sphi 0, %s302
      %s324 = sphi 0, %s326
      %s327 = sphi 0, %s324
      %s328 = sphi 0, %s327
      %s344 = sphi 0, %s328
      %s350 = sphi 0, %s352
      %s353 = sphi 0, %s350
      %s354 = sphi 0, %s353
      %s370 = sphi 0, %s354
      %s376 = sphi 0, %s378
      %s379 = sphi 0, %s376
      %s380 = sphi 0, %s379
      %s396 = sphi 0, %s380
      %s402 = sphi 0, %s404
      %s405 = sphi 0, %s402
      %s406 = sphi 0, %s405
      %s422 = sphi 0, %s406
      %s428 = sphi 0, %s430
      %s431 = sphi 0, %s428
      %s432 = sphi 0, %s431
      %s448 = sphi 0, %s432
      %s452 = sphi 0, %s452
      %s454 = sphi 0, %s452
      %s455 = sphi 0, %s454
      %s469 = sphi 0, %s455
      %s475 = sphi 0, %s477
      %s478 = sphi 0, %s475
      %s479 = sphi 0, %s478
      %s495 = sphi 0, %s479
    $region4: #{transformer_forward.1} parent=1 // loop_header_branch
      %34 = sbr.rel (%p32) target = $region8
    $region5: #{transformer_forward.1} parent=1 // loop_body
      %s36 = ssub.s32 %s31, 1
      %s37 = ssub.s32 %s31, 2
      %s44 = sadd.s32 1, %s39
      %p45 = scmp.ge.s32.totalorder %s44, 2
      %s46 = scalar_select %p45, 0, %s44
      %s47 = sadd.s32 1, %s38
      %s48 = scalar_select %p45, %s47, %s38
      %p49 = scmp.ge.s32.totalorder %s48, 2
      %s50 = scalar_select %p49, 0, %s48
      %s51 = ssub.s32 %s38, %s50
      %p52 = scmp.eq.s32.totalorder %s51, 0
      %s54 = sadd.s32 %s53, 1
      %s55 = scalar_select %p52, %s53, %s54
      %p58 = pneg %p52
      %p59 = scmp.eq.s32.totalorder %s31, 3
      %p60 = por %p58, %p59
      %p61 = scmp.ne.s32.totalorder %s53, %s56
      %p62 = scmp.eq.s32.totalorder %s31, 0
      %p63 = por %p61, %p62
      %p64 = scmp.ne.s32.totalorder %s53, %s56
      %p65 = scmp.eq.s32.totalorder %s36, 3
      %p66 = por %p64, %p65
      %p67 = scmp.ne.s32.totalorder %s56, %s57
      %p68 = scmp.eq.s32.totalorder %s36, 0
      %p69 = por %p67, %p68
      %p70 = scmp.ne.s32.totalorder %s56, %s57
      %p71 = scmp.eq.s32.totalorder %s37, 3
      %p72 = por %p70, %p71
      %p74 = scmp.ne.s32.totalorder %s57, %s73
      %p75 = scmp.eq.s32.totalorder %s37, 0
      %p76 = por %p74, %p75
      %s78 = sadd.s32 %s77, 1
      %p81 = scmp.eq.s32.totalorder %s31, 3
      %p82 = scmp.ne.s32.totalorder %s77, %s79
      %p83 = scmp.eq.s32.totalorder %s31, 0
      %p84 = por %p82, %p83
      %p85 = scmp.ne.s32.totalorder %s77, %s79
      %p86 = scmp.eq.s32.totalorder %s36, 3
      %p87 = por %p85, %p86
      %p88 = scmp.ne.s32.totalorder %s79, %s80
      %p89 = scmp.eq.s32.totalorder %s36, 0
      %p90 = por %p88, %p89
      %p91 = scmp.ne.s32.totalorder %s79, %s80
      %p92 = scmp.eq.s32.totalorder %s37, 3
      %p93 = por %p91, %p92
      %p95 = scmp.ne.s32.totalorder %s80, %s94
      %p96 = scmp.eq.s32.totalorder %s37, 0
      %p97 = por %p95, %p96
      %s99 = sadd.s32 %s98, 1
      %p102 = scmp.eq.s32.totalorder %s31, 3
      %p103 = scmp.ne.s32.totalorder %s98, %s100
      %p104 = scmp.eq.s32.totalorder %s31, 0
      %p105 = por %p103, %p104
      %p106 = scmp.ne.s32.totalorder %s98, %s100
      %p107 = scmp.eq.s32.totalorder %s36, 3
      %p108 = por %p106, %p107
      %p109 = scmp.ne.s32.totalorder %s100, %s101
      %p110 = scmp.eq.s32.totalorder %s36, 0
      %p111 = por %p109, %p110
      %p112 = scmp.ne.s32.totalorder %s100, %s101
      %p113 = scmp.eq.s32.totalorder %s37, 3
      %p114 = por %p112, %p113
      %p116 = scmp.ne.s32.totalorder %s101, %s115
      %p117 = scmp.eq.s32.totalorder %s37, 0
      %p118 = por %p116, %p117
      %s120 = sadd.s32 %s119, 1
      %p123 = scmp.eq.s32.totalorder %s31, 3
      %p124 = scmp.ne.s32.totalorder %s119, %s121
      %p125 = scmp.eq.s32.totalorder %s31, 0
      %p126 = por %p124, %p125
      %p127 = scmp.ne.s32.totalorder %s119, %s121
      %p128 = scmp.eq.s32.totalorder %s36, 3
      %p129 = por %p127, %p128
      %p130 = scmp.ne.s32.totalorder %s121, %s122
      %p131 = scmp.eq.s32.totalorder %s36, 0
      %p132 = por %p130, %p131
      %p133 = scmp.ne.s32.totalorder %s121, %s122
      %p134 = scmp.eq.s32.totalorder %s37, 3
      %p135 = por %p133, %p134
      %p137 = scmp.ne.s32.totalorder %s122, %s136
      %p138 = scmp.eq.s32.totalorder %s37, 0
      %p139 = por %p137, %p138
      %s140 = ssub.s32 %s39, %s46
      %p141 = scmp.eq.s32.totalorder %s140, 0
      %s143 = sadd.s32 %s142, 1
      %s144 = scalar_select %p141, %s142, %s143
      %p147 = pneg %p141
      %p148 = scmp.eq.s32.totalorder %s31, 3
      %p149 = por %p147, %p148
      %p150 = scmp.ne.s32.totalorder %s142, %s145
      %p151 = scmp.eq.s32.totalorder %s31, 0
      %p152 = por %p150, %p151
      %p153 = scmp.ne.s32.totalorder %s142, %s145
      %p154 = scmp.eq.s32.totalorder %s36, 3
      %p155 = por %p153, %p154
      %p156 = scmp.ne.s32.totalorder %s145, %s146
      %p157 = scmp.eq.s32.totalorder %s36, 0
      %p158 = por %p156, %p157
      %p159 = scmp.ne.s32.totalorder %s145, %s146
      %p160 = scmp.eq.s32.totalorder %s37, 3
      %p161 = por %p159, %p160
      %p163 = scmp.ne.s32.totalorder %s146, %s162
      %p164 = scmp.eq.s32.totalorder %s37, 0
      %p165 = por %p163, %p164
      %s166 = ssub.s32 %s39, %s46
      %p167 = scmp.eq.s32.totalorder %s166, 0
      %s169 = sadd.s32 %s168, 1
      %s170 = scalar_select %p167, %s168, %s169
      %p173 = pneg %p167
      %p174 = scmp.eq.s32.totalorder %s31, 3
      %p175 = por %p173, %p174
      %p176 = scmp.ne.s32.totalorder %s168, %s171
      %p177 = scmp.eq.s32.totalorder %s31, 0
      %p178 = por %p176, %p177
      %p179 = scmp.ne.s32.totalorder %s168, %s171
      %p180 = scmp.eq.s32.totalorder %s36, 3
      %p181 = por %p179, %p180
      %p182 = scmp.ne.s32.totalorder %s171, %s172
      %p183 = scmp.eq.s32.totalorder %s36, 0
      %p184 = por %p182, %p183
      %p185 = scmp.ne.s32.totalorder %s171, %s172
      %p186 = scmp.eq.s32.totalorder %s37, 3
      %p187 = por %p185, %p186
      %p189 = scmp.ne.s32.totalorder %s172, %s188
      %p190 = scmp.eq.s32.totalorder %s37, 0
      %p191 = por %p189, %p190
      %s192 = ssub.s32 %s39, %s46
      %p193 = scmp.eq.s32.totalorder %s192, 0
      %s195 = sadd.s32 %s194, 1
      %s196 = scalar_select %p193, %s194, %s195
      %p199 = pneg %p193
      %p200 = scmp.eq.s32.totalorder %s31, 3
      %p201 = por %p199, %p200
      %p202 = scmp.ne.s32.totalorder %s194, %s197
      %p203 = scmp.eq.s32.totalorder %s31, 0
      %p204 = por %p202, %p203
      %p205 = scmp.ne.s32.totalorder %s194, %s197
      %p206 = scmp.eq.s32.totalorder %s36, 3
      %p207 = por %p205, %p206
      %p208 = scmp.ne.s32.totalorder %s197, %s198
      %p209 = scmp.eq.s32.totalorder %s36, 0
      %p210 = por %p208, %p209
      %p211 = scmp.ne.s32.totalorder %s197, %s198
      %p212 = scmp.eq.s32.totalorder %s37, 3
      %p213 = por %p211, %p212
      %p215 = scmp.ne.s32.totalorder %s198, %s214
      %p216 = scmp.eq.s32.totalorder %s37, 0
      %p217 = por %p215, %p216
      %s218 = ssub.s32 %s39, %s46
      %p219 = scmp.eq.s32.totalorder %s218, 0
      %s221 = sadd.s32 %s220, 1
      %s222 = scalar_select %p219, %s220, %s221
      %p225 = pneg %p219
      %p226 = scmp.eq.s32.totalorder %s31, 3
      %p227 = por %p225, %p226
      %p228 = scmp.ne.s32.totalorder %s220, %s223
      %p229 = scmp.eq.s32.totalorder %s31, 0
      %p230 = por %p228, %p229
      %p231 = scmp.ne.s32.totalorder %s220, %s223
      %p232 = scmp.eq.s32.totalorder %s36, 3
      %p233 = por %p231, %p232
      %p234 = scmp.ne.s32.totalorder %s223, %s224
      %p235 = scmp.eq.s32.totalorder %s36, 0
      %p236 = por %p234, %p235
      %p237 = scmp.ne.s32.totalorder %s223, %s224
      %p238 = scmp.eq.s32.totalorder %s37, 3
      %p239 = por %p237, %p238
      %p241 = scmp.ne.s32.totalorder %s224, %s240
      %p242 = scmp.eq.s32.totalorder %s37, 0
      %p243 = por %p241, %p242
      %s244 = ssub.s32 %s39, %s46
      %p245 = scmp.eq.s32.totalorder %s244, 0
      %s247 = sadd.s32 %s246, 1
      %s248 = scalar_select %p245, %s246, %s247
      %p251 = pneg %p245
      %p252 = scmp.eq.s32.totalorder %s31, 3
      %p253 = por %p251, %p252
      %p254 = scmp.ne.s32.totalorder %s246, %s249
      %p255 = scmp.eq.s32.totalorder %s31, 0
      %p256 = por %p254, %p255
      %p257 = scmp.ne.s32.totalorder %s246, %s249
      %p258 = scmp.eq.s32.totalorder %s36, 3
      %p259 = por %p257, %p258
      %p260 = scmp.ne.s32.totalorder %s249, %s250
      %p261 = scmp.eq.s32.totalorder %s36, 0
      %p262 = por %p260, %p261
      %p263 = scmp.ne.s32.totalorder %s249, %s250
      %p264 = scmp.eq.s32.totalorder %s37, 3
      %p265 = por %p263, %p264
      %p267 = scmp.ne.s32.totalorder %s250, %s266
      %p268 = scmp.eq.s32.totalorder %s37, 0
      %p269 = por %p267, %p268
      %s270 = ssub.s32 %s39, %s46
      %p271 = scmp.eq.s32.totalorder %s270, 0
      %s273 = sadd.s32 %s272, 1
      %s274 = scalar_select %p271, %s272, %s273
      %p277 = pneg %p271
      %p278 = scmp.eq.s32.totalorder %s31, 3
      %p279 = por %p277, %p278
      %p280 = scmp.ne.s32.totalorder %s272, %s275
      %p281 = scmp.eq.s32.totalorder %s31, 0
      %p282 = por %p280, %p281
      %p283 = scmp.ne.s32.totalorder %s272, %s275
      %p284 = scmp.eq.s32.totalorder %s36, 3
      %p285 = por %p283, %p284
      %p286 = scmp.ne.s32.totalorder %s275, %s276
      %p287 = scmp.eq.s32.totalorder %s36, 0
      %p288 = por %p286, %p287
      %p289 = scmp.ne.s32.totalorder %s275, %s276
      %p290 = scmp.eq.s32.totalorder %s37, 3
      %p291 = por %p289, %p290
      %p293 = scmp.ne.s32.totalorder %s276, %s292
      %p294 = scmp.eq.s32.totalorder %s37, 0
      %p295 = por %p293, %p294
      %s296 = ssub.s32 %s39, %s46
      %p297 = scmp.eq.s32.totalorder %s296, 0
      %s299 = sadd.s32 %s298, 1
      %s300 = scalar_select %p297, %s298, %s299
      %p303 = pneg %p297
      %p304 = scmp.eq.s32.totalorder %s31, 3
      %p305 = por %p303, %p304
      %p306 = scmp.ne.s32.totalorder %s298, %s301
      %p307 = scmp.eq.s32.totalorder %s31, 0
      %p308 = por %p306, %p307
      %p309 = scmp.ne.s32.totalorder %s298, %s301
      %p310 = scmp.eq.s32.totalorder %s36, 3
      %p311 = por %p309, %p310
      %p312 = scmp.ne.s32.totalorder %s301, %s302
      %p313 = scmp.eq.s32.totalorder %s36, 0
      %p314 = por %p312, %p313
      %p315 = scmp.ne.s32.totalorder %s301, %s302
      %p316 = scmp.eq.s32.totalorder %s37, 3
      %p317 = por %p315, %p316
      %p319 = scmp.ne.s32.totalorder %s302, %s318
      %p320 = scmp.eq.s32.totalorder %s37, 0
      %p321 = por %p319, %p320
      %s322 = ssub.s32 %s39, %s46
      %p323 = scmp.eq.s32.totalorder %s322, 0
      %s325 = sadd.s32 %s324, 1
      %s326 = scalar_select %p323, %s324, %s325
      %p329 = pneg %p323
      %p330 = scmp.eq.s32.totalorder %s31, 3
      %p331 = por %p329, %p330
      %p332 = scmp.ne.s32.totalorder %s324, %s327
      %p333 = scmp.eq.s32.totalorder %s31, 0
      %p334 = por %p332, %p333
      %p335 = scmp.ne.s32.totalorder %s324, %s327
      %p336 = scmp.eq.s32.totalorder %s36, 3
      %p337 = por %p335, %p336
      %p338 = scmp.ne.s32.totalorder %s327, %s328
      %p339 = scmp.eq.s32.totalorder %s36, 0
      %p340 = por %p338, %p339
      %p341 = scmp.ne.s32.totalorder %s327, %s328
      %p342 = scmp.eq.s32.totalorder %s37, 3
      %p343 = por %p341, %p342
      %p345 = scmp.ne.s32.totalorder %s328, %s344
      %p346 = scmp.eq.s32.totalorder %s37, 0
      %p347 = por %p345, %p346
      %s348 = ssub.s32 %s39, %s46
      %p349 = scmp.eq.s32.totalorder %s348, 0
      %s351 = sadd.s32 %s350, 1
      %s352 = scalar_select %p349, %s350, %s351
      %p355 = pneg %p349
      %p356 = scmp.eq.s32.totalorder %s31, 3
      %p357 = por %p355, %p356
      %p358 = scmp.ne.s32.totalorder %s350, %s353
      %p359 = scmp.eq.s32.totalorder %s31, 0
      %p360 = por %p358, %p359
      %p361 = scmp.ne.s32.totalorder %s350, %s353
      %p362 = scmp.eq.s32.totalorder %s36, 3
      %p363 = por %p361, %p362
      %p364 = scmp.ne.s32.totalorder %s353, %s354
      %p365 = scmp.eq.s32.totalorder %s36, 0
      %p366 = por %p364, %p365
      %p367 = scmp.ne.s32.totalorder %s353, %s354
      %p368 = scmp.eq.s32.totalorder %s37, 3
      %p369 = por %p367, %p368
      %p371 = scmp.ne.s32.totalorder %s354, %s370
      %p372 = scmp.eq.s32.totalorder %s37, 0
      %p373 = por %p371, %p372
      %s374 = ssub.s32 %s39, %s46
      %p375 = scmp.eq.s32.totalorder %s374, 0
      %s377 = sadd.s32 %s376, 1
      %s378 = scalar_select %p375, %s376, %s377
      %p381 = pneg %p375
      %p382 = scmp.eq.s32.totalorder %s31, 3
      %p383 = por %p381, %p382
      %p384 = scmp.ne.s32.totalorder %s376, %s379
      %p385 = scmp.eq.s32.totalorder %s31, 0
      %p386 = por %p384, %p385
      %p387 = scmp.ne.s32.totalorder %s376, %s379
      %p388 = scmp.eq.s32.totalorder %s36, 3
      %p389 = por %p387, %p388
      %p390 = scmp.ne.s32.totalorder %s379, %s380
      %p391 = scmp.eq.s32.totalorder %s36, 0
      %p392 = por %p390, %p391
      %p393 = scmp.ne.s32.totalorder %s379, %s380
      %p394 = scmp.eq.s32.totalorder %s37, 3
      %p395 = por %p393, %p394
      %p397 = scmp.ne.s32.totalorder %s380, %s396
      %p398 = scmp.eq.s32.totalorder %s37, 0
      %p399 = por %p397, %p398
      %s400 = ssub.s32 %s39, %s46
      %p401 = scmp.eq.s32.totalorder %s400, 0
      %s403 = sadd.s32 %s402, 1
      %s404 = scalar_select %p401, %s402, %s403
      %p407 = pneg %p401
      %p408 = scmp.eq.s32.totalorder %s31, 3
      %p409 = por %p407, %p408
      %p410 = scmp.ne.s32.totalorder %s402, %s405
      %p411 = scmp.eq.s32.totalorder %s31, 0
      %p412 = por %p410, %p411
      %p413 = scmp.ne.s32.totalorder %s402, %s405
      %p414 = scmp.eq.s32.totalorder %s36, 3
      %p415 = por %p413, %p414
      %p416 = scmp.ne.s32.totalorder %s405, %s406
      %p417 = scmp.eq.s32.totalorder %s36, 0
      %p418 = por %p416, %p417
      %p419 = scmp.ne.s32.totalorder %s405, %s406
      %p420 = scmp.eq.s32.totalorder %s37, 3
      %p421 = por %p419, %p420
      %p423 = scmp.ne.s32.totalorder %s406, %s422
      %p424 = scmp.eq.s32.totalorder %s37, 0
      %p425 = por %p423, %p424
      %s426 = ssub.s32 %s39, %s46
      %p427 = scmp.eq.s32.totalorder %s426, 0
      %s429 = sadd.s32 %s428, 1
      %s430 = scalar_select %p427, %s428, %s429
      %p433 = pneg %p427
      %p434 = scmp.eq.s32.totalorder %s31, 3
      %p435 = por %p433, %p434
      %p436 = scmp.ne.s32.totalorder %s428, %s431
      %p437 = scmp.eq.s32.totalorder %s31, 0
      %p438 = por %p436, %p437
      %p439 = scmp.ne.s32.totalorder %s428, %s431
      %p440 = scmp.eq.s32.totalorder %s36, 3
      %p441 = por %p439, %p440
      %p442 = scmp.ne.s32.totalorder %s431, %s432
      %p443 = scmp.eq.s32.totalorder %s36, 0
      %p444 = por %p442, %p443
      %p445 = scmp.ne.s32.totalorder %s431, %s432
      %p446 = scmp.eq.s32.totalorder %s37, 3
      %p447 = por %p445, %p446
      %p449 = scmp.ne.s32.totalorder %s432, %s448
      %p450 = scmp.eq.s32.totalorder %s37, 0
      %p451 = por %p449, %p450
      %s453 = sadd.s32 %s452, 1
      %p456 = scmp.eq.s32.totalorder %s31, 3
      %p457 = scmp.ne.s32.totalorder %s452, %s454
      %p458 = scmp.eq.s32.totalorder %s31, 0
      %p459 = por %p457, %p458
      %p460 = scmp.ne.s32.totalorder %s452, %s454
      %p461 = scmp.eq.s32.totalorder %s36, 3
      %p462 = por %p460, %p461
      %p463 = scmp.ne.s32.totalorder %s454, %s455
      %p464 = scmp.eq.s32.totalorder %s36, 0
      %p465 = por %p463, %p464
      %p466 = scmp.ne.s32.totalorder %s454, %s455
      %p467 = scmp.eq.s32.totalorder %s37, 3
      %p468 = por %p466, %p467
      %p470 = scmp.ne.s32.totalorder %s455, %s469
      %p471 = scmp.eq.s32.totalorder %s37, 0
      %p472 = por %p470, %p471
      %s473 = ssub.s32 %s38, %s50
      %p474 = scmp.eq.s32.totalorder %s473, 0
      %s476 = sadd.s32 %s475, 1
      %s477 = scalar_select %p474, %s475, %s476
      %p480 = pneg %p474
      %p481 = scmp.eq.s32.totalorder %s31, 3
      %p482 = por %p480, %p481
      %p483 = scmp.ne.s32.totalorder %s475, %s478
      %p484 = scmp.eq.s32.totalorder %s31, 0
      %p485 = por %p483, %p484
      %p486 = scmp.ne.s32.totalorder %s475, %s478
      %p487 = scmp.eq.s32.totalorder %s36, 3
      %p488 = por %p486, %p487
      %p489 = scmp.ne.s32.totalorder %s478, %s479
      %p490 = scmp.eq.s32.totalorder %s36, 0
      %p491 = por %p489, %p490
      %p492 = scmp.ne.s32.totalorder %s478, %s479
      %p493 = scmp.eq.s32.totalorder %s37, 3
      %p494 = por %p492, %p493
      %p496 = scmp.ne.s32.totalorder %s479, %s495
      %p497 = scmp.eq.s32.totalorder %s37, 0
      %p498 = por %p496, %p497
      %p499 = scmp.le.s32.totalorder 1, %s31
      %p500 = scmp.lt.s32.totalorder %s31, 5
      %p501 = pnand %p499, %p500
      %p502 = pneg %p501
      // Predicated region
      $region9: #{transformer_forward.1} parent=5 // pred_check
        _
      $region10: #{transformer_forward.1} parent=5 // pred_check_branch
        %504 = sbr.rel (%p501) target = $region12
      $region11: #{transformer_forward.1} parent=5 // pred_region
        %s505 = ssub.s32 %s31, 1
        // Predicated region
        $region13: #{transformer_forward.1} parent=11 // pred_check
          %p506 = pneg %p90
        $region14: #{transformer_forward.1} parent=11 // pred_check_branch
          %508 = sbr.rel (%p506) target = $region16
        $region15: #{transformer_forward.1} parent=11 // pred_region
          %510 = vsyncadd [#allocation7], 0
          %s511 = sshll.u32 %s1, 4
          %s512 = int_to_ptr.hbm [resolvable:$true] %s511
          %s513 = sshll.u32 [#allocation6], 4
          %s514 = int_to_ptr.vmem [resolvable:$true] %s513
          %519 = dma.hbm_to_vmem [thread:$0]  %s512, 256, %s514, [#allocation7], 128, 128, 8
        $region16: #{transformer_forward.1} parent=11 // pred_fallthru
          _
        // Predicated region
        $region17: #{transformer_forward.1} parent=11 // pred_check
          %p520 = pneg %p111
        $region18: #{transformer_forward.1} parent=11 // pred_check_branch
          %522 = sbr.rel (%p520) target = $region20
        $region19: #{transformer_forward.1} parent=11 // pred_region
          %524 = vsyncadd [#allocation7], 0
          %s525 = sshll.u32 %s2, 4
          %s526 = int_to_ptr.hbm [resolvable:$true] %s525
          %s527 = sshll.u32 [#allocation8], 4
          %s528 = int_to_ptr.vmem [resolvable:$true] %s527
          %533 = dma.hbm_to_vmem [thread:$0]  %s526, 256, %s528, [#allocation7], 128, 128, 8
        $region20: #{transformer_forward.1} parent=11 // pred_fallthru
          _
        // Predicated region
        $region21: #{transformer_forward.1} parent=11 // pred_check
          %p534 = pneg %p132
        $region22: #{transformer_forward.1} parent=11 // pred_check_branch
          %536 = sbr.rel (%p534) target = $region24
        $region23: #{transformer_forward.1} parent=11 // pred_region
          %538 = vsyncadd [#allocation10], 0
          %s539 = sshll.u32 %s3, 4
          %s540 = int_to_ptr.hbm [resolvable:$true] %s539
          %s541 = sshll.u32 [#allocation9], 4
          %s542 = int_to_ptr.vmem [resolvable:$true] %s541
          %547 = dma.hbm_to_vmem [thread:$0]  %s540, 256, %s542, [#allocation10], 128, 128, 8
        $region24: #{transformer_forward.1} parent=11 // pred_fallthru
          _
        // Predicated region
        $region25: #{transformer_forward.1} parent=11 // pred_check
          %p548 = pneg %p465
        $region26: #{transformer_forward.1} parent=11 // pred_check_branch
          %550 = sbr.rel (%p548) target = $region28
        $region27: #{transformer_forward.1} parent=11 // pred_region
          %552 = vsyncadd [#allocation7], 0
          %s554 = sshll.u32 %s16, 4
          %s555 = int_to_ptr.hbm [resolvable:$true] %s554
          %s556 = sshll.u32 [#allocation16], 4
          %s557 = int_to_ptr.vmem [resolvable:$true] %s556
          %559 = dma.hbm_to_vmem [thread:$0]  %s555, 16, %s557, [#allocation7]
        $region28: #{transformer_forward.1} parent=11 // pred_fallthru
          _
      $region12: #{transformer_forward.1} parent=5 // pred_fallthru
        _
      %p560 = scmp.lt.s32.totalorder %s31, 4
      // Predicated region
      $region29: #{transformer_forward.1} parent=5 // pred_check
        %p561 = pneg %p560
      $region30: #{transformer_forward.1} parent=5 // pred_check_branch
        %563 = sbr.rel (%p561) target = $region32
      $region31: #{transformer_forward.1} parent=5 // pred_region
        // Predicated region
        $region33: #{transformer_forward.1} parent=31 // pred_check
          %p564 = pneg %p63
        $region34: #{transformer_forward.1} parent=31 // pred_check_branch
          %566 = sbr.rel (%p564) target = $region36
        $region35: #{transformer_forward.1} parent=31 // pred_region
          %s567 = sand.u32 %s31, 1
          %s568 = scalar_lea.sflag [#allocation4], %s567
          %s569 = sand.u32 %s53, 1
          %s570 = smul.addr %s569, 16
          %s571 = scalar_lea.vmem [#allocation3], %s570
          %573 = vsyncadd %s568, 0
          %s574 = smul.addr %s38, 2
          %s575 = smul.addr %s574, 8
          %s576 = scalar_lea.hbm %s0, %s575
          %s577 = sshll.u32 %s576, 4
          %s578 = int_to_ptr.hbm [resolvable:$true] %s577
          %s579 = sshll.u32 %s571, 4
          %s580 = int_to_ptr.vmem [resolvable:$true] %s579
          %585 = dma.hbm_to_vmem [thread:$0]  %s578, 256, %s580, %s568, 128, 128, 8
        $region36: #{transformer_forward.1} parent=31 // pred_fallthru
          _
        // Predicated region
        $region37: #{transformer_forward.1} parent=31 // pred_check
          %p586 = pneg %p152
        $region38: #{transformer_forward.1} parent=31 // pred_check_branch
          %588 = sbr.rel (%p586) target = $region40
        $region39: #{transformer_forward.1} parent=31 // pred_region
          %s589 = sand.u32 %s31, 1
          %s590 = scalar_lea.sflag [#allocation4], %s589
          %s591 = sand.u32 %s142, 1
          %s592 = scalar_lea.vmem [#allocation11], %s591
          %594 = vsyncadd %s590, 0
          %s595 = scalar_lea.hbm %s4, %s39
          %s597 = sshll.u32 %s595, 4
          %s598 = int_to_ptr.hbm [resolvable:$true] %s597
          %s599 = sshll.u32 %s592, 4
          %s600 = int_to_ptr.vmem [resolvable:$true] %s599
          %602 = dma.hbm_to_vmem [thread:$0]  %s598, 16, %s600, %s590
        $region40: #{transformer_forward.1} parent=31 // pred_fallthru
          _
        // Predicated region
        $region41: #{transformer_forward.1} parent=31 // pred_check
          %p603 = pneg %p178
        $region42: #{transformer_forward.1} parent=31 // pred_check_branch
          %605 = sbr.rel (%p603) target = $region44
        $region43: #{transformer_forward.1} parent=31 // pred_region
          %p606 = scmp.lt.s32.totalorder %s39, 1
          %s607 = scalar_select %p606, %s39, 1
          %s608 = smul.addr %s607, 12
          %s609 = smul.addr %s608, 4
          %s610 = scalar_lea.vmem %s5, %s609
        $region44: #{transformer_forward.1} parent=31 // pred_fallthru
          _
        // Predicated region
        $region45: #{transformer_forward.1} parent=31 // pred_check
          %p611 = pneg %p204
        $region46: #{transformer_forward.1} parent=31 // pred_check_branch
          %613 = sbr.rel (%p611) target = $region48
        $region47: #{transformer_forward.1} parent=31 // pred_region
          %s614 = sand.u32 %s31, 1
          %s615 = scalar_lea.sflag [#allocation4], %s614
          %s616 = sand.u32 %s194, 1
          %s617 = smul.addr %s616, 48
          %s618 = scalar_lea.vmem [#allocation12], %s617
          %620 = vsyncadd %s615, 0
          %s621 = smul.addr %s39, 12
          %s622 = smul.addr %s621, 4
          %s623 = scalar_lea.hbm %s6, %s622
          %s624 = sshll.u32 %s623, 4
          %s625 = int_to_ptr.hbm [resolvable:$true] %s624
          %s626 = sshll.u32 %s618, 4
          %s627 = int_to_ptr.vmem [resolvable:$true] %s626
          %632 = dma.hbm_to_vmem [thread:$0]  %s625, 768, %s627, %s615, 64, 64, 4
        $region48: #{transformer_forward.1} parent=31 // pred_fallthru
          _
        // Predicated region
        $region49: #{transformer_forward.1} parent=31 // pred_check
          %p633 = pneg %p230
        $region50: #{transformer_forward.1} parent=31 // pred_check_branch
          %635 = sbr.rel (%p633) target = $region52
        $region51: #{transformer_forward.1} parent=31 // pred_region
          %s636 = sand.u32 %s31, 1
          %s637 = scalar_lea.sflag [#allocation4], %s636
          %s638 = sand.u32 %s220, 1
          %s639 = smul.addr %s638, 48
          %s640 = scalar_lea.vmem [#allocation13], %s639
          %642 = vsyncadd %s637, 0
          %s643 = smul.addr %s39, 12
          %s644 = smul.addr %s643, 4
          %s645 = scalar_lea.hbm %s7, %s644
          %s646 = sshll.u32 %s645, 4
          %s647 = int_to_ptr.hbm [resolvable:$true] %s646
          %s648 = sshll.u32 %s640, 4
          %s649 = int_to_ptr.vmem [resolvable:$true] %s648
          %654 = dma.hbm_to_vmem [thread:$0]  %s647, 768, %s649, %s637, 64, 64, 4
        $region52: #{transformer_forward.1} parent=31 // pred_fallthru
          _
        // Predicated region
        $region53: #{transformer_forward.1} parent=31 // pred_check
          %p655 = pneg %p256
        $region54: #{transformer_forward.1} parent=31 // pred_check_branch
          %657 = sbr.rel (%p655) target = $region56
        $region55: #{transformer_forward.1} parent=31 // pred_region
          %p658 = scmp.lt.s32.totalorder %s39, 1
          %s659 = scalar_select %p658, %s39, 1
          %s660 = smul.addr %s659, 16
          %s661 = smul.addr %s660, 4
          %s662 = scalar_lea.vmem %s8, %s661
        $region56: #{transformer_forward.1} parent=31 // pred_fallthru
          _
        // Predicated region
        $region57: #{transformer_forward.1} parent=31 // pred_check
          %p663 = pneg %p282
        $region58: #{transformer_forward.1} parent=31 // pred_check_branch
          %665 = sbr.rel (%p663) target = $region60
        $region59: #{transformer_forward.1} parent=31 // pred_region
          %s666 = sand.u32 %s31, 1
          %s667 = scalar_lea.sflag [#allocation4], %s666
          %s668 = sand.u32 %s272, 1
          %s669 = scalar_lea.vmem [#allocation14], %s668
          %671 = vsyncadd %s667, 0
          %s672 = scalar_lea.hbm %s9, %s39
          %s674 = sshll.u32 %s672, 4
          %s675 = int_to_ptr.hbm [resolvable:$true] %s674
          %s676 = sshll.u32 %s669, 4
          %s677 = int_to_ptr.vmem [resolvable:$true] %s676
          %679 = dma.hbm_to_vmem [thread:$0]  %s675, 16, %s677, %s667
        $region60: #{transformer_forward.1} parent=31 // pred_fallthru
          _
        // Predicated region
        $region61: #{transformer_forward.1} parent=31 // pred_check
          %p680 = pneg %p308
        $region62: #{transformer_forward.1} parent=31 // pred_check_branch
          %682 = sbr.rel (%p680) target = $region64
        $region63: #{transformer_forward.1} parent=31 // pred_region
          %p683 = scmp.lt.s32.totalorder %s39, 1
          %s684 = scalar_select %p683, %s39, 1
          %s685 = smul.addr %s684, 24
          %s686 = smul.addr %s685, 4
          %s687 = scalar_lea.vmem %s10, %s686
        $region64: #{transformer_forward.1} parent=31 // pred_fallthru
          _
        // Predicated region
        $region65: #{transformer_forward.1} parent=31 // pred_check
          %p688 = pneg %p334
        $region66: #{transformer_forward.1} parent=31 // pred_check_branch
          %690 = sbr.rel (%p688) target = $region68
        $region67: #{transformer_forward.1} parent=31 // pred_region
          %p691 = scmp.lt.s32.totalorder %s39, 1
          %s692 = scalar_select %p691, %s39, 1
          %s693 = smul.addr %s692, 2
          %s694 = scalar_lea.vmem %s11, %s693
        $region68: #{transformer_forward.1} parent=31 // pred_fallthru
          _
        // Predicated region
        $region69: #{transformer_forward.1} parent=31 // pred_check
          %p695 = pneg %p360
        $region70: #{transformer_forward.1} parent=31 // pred_check_branch
          %697 = sbr.rel (%p695) target = $region72
        $region71: #{transformer_forward.1} parent=31 // pred_region
          %p698 = scmp.lt.s32.totalorder %s39, 1
          %s699 = scalar_select %p698, %s39, 1
          %s700 = smul.addr %s699, 24
          %s701 = smul.addr %s700, 4
          %s702 = scalar_lea.vmem %s12, %s701
        $region72: #{transformer_forward.1} parent=31 // pred_fallthru
          _
        // Predicated region
        $region73: #{transformer_forward.1} parent=31 // pred_check
          %p703 = pneg %p386
        $region74: #{transformer_forward.1} parent=31 // pred_check_branch
          %705 = sbr.rel (%p703) target = $region76
        $region75: #{transformer_forward.1} parent=31 // pred_region
          %p706 = scmp.lt.s32.totalorder %s39, 1
          %s707 = scalar_select %p706, %s39, 1
          %s708 = smul.addr %s707, 2
          %s709 = scalar_lea.vmem %s13, %s708
        $region76: #{transformer_forward.1} parent=31 // pred_fallthru
          _
        // Predicated region
        $region77: #{transformer_forward.1} parent=31 // pred_check
          %p710 = pneg %p412
        $region78: #{transformer_forward.1} parent=31 // pred_check_branch
          %712 = sbr.rel (%p710) target = $region80
        $region79: #{transformer_forward.1} parent=31 // pred_region
          %p713 = scmp.lt.s32.totalorder %s39, 1
          %s714 = scalar_select %p713, %s39, 1
          %s715 = smul.addr %s714, 32
          %s716 = smul.addr %s715, 4
          %s717 = scalar_lea.vmem %s14, %s716
        $region80: #{transformer_forward.1} parent=31 // pred_fallthru
          _
        // Predicated region
        $region81: #{transformer_forward.1} parent=31 // pred_check
          %p718 = pneg %p438
        $region82: #{transformer_forward.1} parent=31 // pred_check_branch
          %720 = sbr.rel (%p718) target = $region84
        $region83: #{transformer_forward.1} parent=31 // pred_region
          %s721 = sand.u32 %s31, 1
          %s722 = scalar_lea.sflag [#allocation4], %s721
          %s723 = sand.u32 %s428, 1
          %s724 = scalar_lea.vmem [#allocation15], %s723
          %726 = vsyncadd %s722, 0
          %s727 = scalar_lea.hbm %s15, %s39
          %s729 = sshll.u32 %s727, 4
          %s730 = int_to_ptr.hbm [resolvable:$true] %s729
          %s731 = sshll.u32 %s724, 4
          %s732 = int_to_ptr.vmem [resolvable:$true] %s731
          %734 = dma.hbm_to_vmem [thread:$0]  %s730, 16, %s732, %s722
        $region84: #{transformer_forward.1} parent=31 // pred_fallthru
          _
      $region32: #{transformer_forward.1} parent=5 // pred_fallthru
        _
      %p735 = scmp.le.s32.totalorder 1, %s31
      %p736 = scmp.lt.s32.totalorder %s31, 5
      %p737 = pnand %p735, %p736
      %p738 = pneg %p737
      // Predicated region
      $region85: #{transformer_forward.1} parent=5 // pred_check
        _
      $region86: #{transformer_forward.1} parent=5 // pred_check_branch
        %740 = sbr.rel (%p737) target = $region88
      $region87: #{transformer_forward.1} parent=5 // pred_region
        %s741 = ssub.s32 %s31, 1
        %s742 = sand.u32 %s36, 1
        %s743 = scalar_lea.sflag [#allocation4], %s742
        %s744 = sand.u32 %s56, 1
        %s745 = smul.addr %s744, 16
        %s746 = scalar_lea.vmem [#allocation3], %s745
        // Predicated region
        $region89: #{transformer_forward.1} parent=87 // pred_check
          %p747 = pneg %p69
        $region90: #{transformer_forward.1} parent=87 // pred_check_branch
          %749 = sbr.rel (%p747) target = $region92
        $region91: #{transformer_forward.1} parent=87 // pred_region
          %751 = dma.done %s743, 256
        $region92: #{transformer_forward.1} parent=87 // pred_fallthru
          _
        // Predicated region
        $region93: #{transformer_forward.1} parent=87 // pred_check
          %p752 = pneg %p90
        $region94: #{transformer_forward.1} parent=87 // pred_check_branch
          %754 = sbr.rel (%p752) target = $region96
        $region95: #{transformer_forward.1} parent=87 // pred_region
          %756 = dma.done [#allocation7], 256
        $region96: #{transformer_forward.1} parent=87 // pred_fallthru
          _
        // Predicated region
        $region97: #{transformer_forward.1} parent=87 // pred_check
          %p757 = pneg %p111
        $region98: #{transformer_forward.1} parent=87 // pred_check_branch
          %759 = sbr.rel (%p757) target = $region100
        $region99: #{transformer_forward.1} parent=87 // pred_region
          %761 = dma.done [#allocation7], 256
        $region100: #{transformer_forward.1} parent=87 // pred_fallthru
          _
        // Predicated region
        $region101: #{transformer_forward.1} parent=87 // pred_check
          %p762 = pneg %p132
        $region102: #{transformer_forward.1} parent=87 // pred_check_branch
          %764 = sbr.rel (%p762) target = $region104
        $region103: #{transformer_forward.1} parent=87 // pred_region
          %766 = dma.done [#allocation10], 256
        $region104: #{transformer_forward.1} parent=87 // pred_fallthru
          _
        %s767 = sand.u32 %s36, 1
        %s768 = scalar_lea.sflag [#allocation4], %s767
        %s769 = sand.u32 %s145, 1
        %s770 = scalar_lea.vmem [#allocation11], %s769
        // Predicated region
        $region105: #{transformer_forward.1} parent=87 // pred_check
          %p771 = pneg %p158
        $region106: #{transformer_forward.1} parent=87 // pred_check_branch
          %773 = sbr.rel (%p771) target = $region108
        $region107: #{transformer_forward.1} parent=87 // pred_region
          %775 = dma.done %s768, 16
        $region108: #{transformer_forward.1} parent=87 // pred_fallthru
          _
        %s776 = sand.u32 %s36, 1
        %s777 = scalar_lea.sflag [#allocation4], %s776
        %s778 = sand.u32 %s197, 1
        %s779 = smul.addr %s778, 48
        %s780 = scalar_lea.vmem [#allocation12], %s779
        // Predicated region
        $region109: #{transformer_forward.1} parent=87 // pred_check
          %p781 = pneg %p210
        $region110: #{transformer_forward.1} parent=87 // pred_check_branch
          %783 = sbr.rel (%p781) target = $region112
        $region111: #{transformer_forward.1} parent=87 // pred_region
          %785 = dma.done %s777, 768
        $region112: #{transformer_forward.1} parent=87 // pred_fallthru
          _
        %s786 = sand.u32 %s36, 1
        %s787 = scalar_lea.sflag [#allocation4], %s786
        %s788 = sand.u32 %s223, 1
        %s789 = smul.addr %s788, 48
        %s790 = scalar_lea.vmem [#allocation13], %s789
        // Predicated region
        $region113: #{transformer_forward.1} parent=87 // pred_check
          %p791 = pneg %p236
        $region114: #{transformer_forward.1} parent=87 // pred_check_branch
          %793 = sbr.rel (%p791) target = $region116
        $region115: #{transformer_forward.1} parent=87 // pred_region
          %795 = dma.done %s787, 768
        $region116: #{transformer_forward.1} parent=87 // pred_fallthru
          _
        %s796 = sand.u32 %s36, 1
        %s797 = scalar_lea.sflag [#allocation4], %s796
        %s798 = sand.u32 %s275, 1
        %s799 = scalar_lea.vmem [#allocation14], %s798
        // Predicated region
        $region117: #{transformer_forward.1} parent=87 // pred_check
          %p800 = pneg %p288
        $region118: #{transformer_forward.1} parent=87 // pred_check_branch
          %802 = sbr.rel (%p800) target = $region120
        $region119: #{transformer_forward.1} parent=87 // pred_region
          %804 = dma.done %s797, 16
        $region120: #{transformer_forward.1} parent=87 // pred_fallthru
          _
        %s805 = sand.u32 %s36, 1
        %s806 = scalar_lea.sflag [#allocation4], %s805
        %s807 = sand.u32 %s431, 1
        %s808 = scalar_lea.vmem [#allocation15], %s807
        // Predicated region
        $region121: #{transformer_forward.1} parent=87 // pred_check
          %p809 = pneg %p444
        $region122: #{transformer_forward.1} parent=87 // pred_check_branch
          %811 = sbr.rel (%p809) target = $region124
        $region123: #{transformer_forward.1} parent=87 // pred_region
          %813 = dma.done %s806, 16
        $region124: #{transformer_forward.1} parent=87 // pred_fallthru
          _
        // Predicated region
        $region125: #{transformer_forward.1} parent=87 // pred_check
          %p814 = pneg %p465
        $region126: #{transformer_forward.1} parent=87 // pred_check_branch
          %816 = sbr.rel (%p814) target = $region128
        $region127: #{transformer_forward.1} parent=87 // pred_region
          %818 = dma.done [#allocation7], 16
        $region128: #{transformer_forward.1} parent=87 // pred_fallthru
          _
        %s819 = sand.u32 %s36, 1
        %s820 = scalar_lea.sflag [#allocation4], %s819
        %s821 = sand.u32 %s56, 1
        %s822 = smul.addr %s821, 16
        %s823 = scalar_lea.vmem [#allocation3], %s822
        %p824 = pneg %p69
        %p825 = pneg %p66
        %p826 = pneg %p90
        %p827 = pneg %p87
        %p828 = pneg %p111
        %p829 = pneg %p108
        %p830 = pneg %p132
        %p831 = pneg %p129
        %s832 = sand.u32 %s36, 1
        %s833 = scalar_lea.sflag [#allocation4], %s832
        %s834 = sand.u32 %s145, 1
        %s835 = scalar_lea.vmem [#allocation11], %s834
        %p836 = pneg %p158
        %p837 = pneg %p155
        %p838 = scmp.lt.s32.totalorder %s41, 1
        %s839 = scalar_select %p838, %s41, 1
        %s840 = smul.addr %s839, 12
        %s841 = smul.addr %s840, 4
        %s842 = scalar_lea.vmem %s5, %s841
        %p843 = pneg %p184
        %p844 = pneg %p181
        %s845 = sand.u32 %s36, 1
        %s846 = scalar_lea.sflag [#allocation4], %s845
        %s847 = sand.u32 %s197, 1
        %s848 = smul.addr %s847, 48
        %s849 = scalar_lea.vmem [#allocation12], %s848
        %p850 = pneg %p210
        %p851 = pneg %p207
        %s852 = sand.u32 %s36, 1
        %s853 = scalar_lea.sflag [#allocation4], %s852
        %s854 = sand.u32 %s223, 1
        %s855 = smul.addr %s854, 48
        %s856 = scalar_lea.vmem [#allocation13], %s855
        %p857 = pneg %p236
        %p858 = pneg %p233
        %p859 = scmp.lt.s32.totalorder %s41, 1
        %s860 = scalar_select %p859, %s41, 1
        %s861 = smul.addr %s860, 16
        %s862 = smul.addr %s861, 4
        %s863 = scalar_lea.vmem %s8, %s862
        %p864 = pneg %p262
        %p865 = pneg %p259
        %s866 = sand.u32 %s36, 1
        %s867 = scalar_lea.sflag [#allocation4], %s866
        %s868 = sand.u32 %s275, 1
        %s869 = scalar_lea.vmem [#allocation14], %s868
        %p870 = pneg %p288
        %p871 = pneg %p285
        %p872 = scmp.lt.s32.totalorder %s41, 1
        %s873 = scalar_select %p872, %s41, 1
        %s874 = smul.addr %s873, 24
        %s875 = smul.addr %s874, 4
        %s876 = scalar_lea.vmem %s10, %s875
        %p877 = pneg %p314
        %p878 = pneg %p311
        %p879 = scmp.lt.s32.totalorder %s41, 1
        %s880 = scalar_select %p879, %s41, 1
        %s881 = smul.addr %s880, 2
        %s882 = scalar_lea.vmem %s11, %s881
        %p883 = pneg %p340
        %p884 = pneg %p337
        %p885 = scmp.lt.s32.totalorder %s41, 1
        %s886 = scalar_select %p885, %s41, 1
        %s887 = smul.addr %s886, 24
        %s888 = smul.addr %s887, 4
        %s889 = scalar_lea.vmem %s12, %s888
        %p890 = pneg %p366
        %p891 = pneg %p363
        %p892 = scmp.lt.s32.totalorder %s41, 1
        %s893 = scalar_select %p892, %s41, 1
        %s894 = smul.addr %s893, 2
        %s895 = scalar_lea.vmem %s13, %s894
        %p896 = pneg %p392
        %p897 = pneg %p389
        %p898 = scmp.lt.s32.totalorder %s41, 1
        %s899 = scalar_select %p898, %s41, 1
        %s900 = smul.addr %s899, 32
        %s901 = smul.addr %s900, 4
        %s902 = scalar_lea.vmem %s14, %s901
        %p903 = pneg %p418
        %p904 = pneg %p415
        %s905 = sand.u32 %s36, 1
        %s906 = scalar_lea.sflag [#allocation4], %s905
        %s907 = sand.u32 %s431, 1
        %s908 = scalar_lea.vmem [#allocation15], %s907
        %p909 = pneg %p444
        %p910 = pneg %p441
        %p911 = pneg %p465
        %p912 = pneg %p462
        %p913 = pneg %p491
        %p914 = pneg %p488
        %s915 = sand.u32 %s478, 1
        %s916 = scalar_lea.sflag [#allocation5], %s915
        %s917 = sand.u32 %s478, 1
        %s918 = smul.addr %s917, 16
        %s919 = scalar_lea.vmem [#allocation17], %s918
        %p920 = scmp.lt.s32.totalorder %s41, 1
        %s921 = scalar_select %p920, %s41, 1
        %s922 = smul.addr %s921, 12
        %s923 = smul.addr %s922, 4
        %s924 = scalar_lea.vmem %s5, %s923
        %p925 = scmp.lt.s32.totalorder %s41, 1
        %s926 = scalar_select %p925, %s41, 1
        %s927 = smul.addr %s926, 16
        %s928 = smul.addr %s927, 4
        %s929 = scalar_lea.vmem %s8, %s928
        %p930 = scmp.lt.s32.totalorder %s41, 1
        %s931 = scalar_select %p930, %s41, 1
        %s932 = smul.addr %s931, 24
        %s933 = smul.addr %s932, 4
        %s934 = scalar_lea.vmem %s10, %s933
        %p935 = scmp.lt.s32.totalorder %s41, 1
        %s936 = scalar_select %p935, %s41, 1
        %s937 = smul.addr %s936, 2
        %s938 = scalar_lea.vmem %s11, %s937
        %p939 = scmp.lt.s32.totalorder %s41, 1
        %s940 = scalar_select %p939, %s41, 1
        %s941 = smul.addr %s940, 24
        %s942 = smul.addr %s941, 4
        %s943 = scalar_lea.vmem %s12, %s942
        %p944 = scmp.lt.s32.totalorder %s41, 1
        %s945 = scalar_select %p944, %s41, 1
        %s946 = smul.addr %s945, 2
        %s947 = scalar_lea.vmem %s13, %s946
        %p948 = scmp.lt.s32.totalorder %s41, 1
        %s949 = scalar_select %p948, %s41, 1
        %s950 = smul.addr %s949, 32
        %s951 = smul.addr %s950, 4
        %s952 = scalar_lea.vmem %s14, %s951
        %p954 = scmp.eq.s32.totalorder %s41, 0
        // Predicated region
        $region129: #{transformer_forward.1} parent=87 // pred_check
          %p955 = pneg %p954
        $region130: #{transformer_forward.1} parent=87 // pred_check_branch
          %957 = sbr.rel (%p955) target = $region132
        $region131: #{transformer_forward.1} parent=87 // pred_region
          %v958 = vld [vmem:[%s746] sm:$0xff]
          %v959 = vld [vmem:[%s746 + $0x8] sm:$0xff]
          %vm960 = vcmask 785408
          %961 = vst.msk [vmem:[#allocation2] sm:$0xff] %vm960, %v958
          %962 = vst.msk [vmem:[#allocation2 + $0x8] sm:$0xff] %vm960, %v959
        $region132: #{transformer_forward.1} parent=87 // pred_fallthru
          _
        %v963 = vld [vmem:[#allocation2] sm:$0xff]
        %v964 = vld [vmem:[#allocation2 + $0x8] sm:$0xff]
        %v965 = vld [vmem:[%s770] sm:$0x1]
        %v966 = vmul.f32 %v963, %v963
        %v967 = vmul.f32 %v964, %v964
        %vm968 = vcmask 785408
        %v969 = vsel %vm968, %v966, 0.0
        %970 = vadd.xlane.f32.xlu0 %v969
        %v971 = vpop.xlane.xlu0 %970
        %v972 = vsel %vm968, %v967, 0.0
        %973 = vadd.xlane.f32.xlu0 %v972
        %v974 = vpop.xlane.xlu0 %973
        %v975 = vmax.f32 %v971, 1e-24
        %v976 = vmax.f32 %v974, 1e-24
        %v977 = vrsqrt.pop %v975
        %v978 = vmul.f32 %v977, %v975
        %v979 = vmul.f32 %v978, %v977
        %v980 = vmul.f32 0.5, %v979
        %v981 = vsub.f32 1.5, %v980
        %v982 = vmul.f32 %v977, %v981
        %vm983 = vweird.f32 %v975
        %vm984 = vweird.f32 %v977
        %vm985 = vmor %vm983, %vm984
        %v986 = vsel %vm985, %v977, %v982
        %v987 = vrsqrt.pop %v976
        %v988 = vmul.f32 %v987, %v976
        %v989 = vmul.f32 %v988, %v987
        %v990 = vmul.f32 0.5, %v989
        %v991 = vsub.f32 1.5, %v990
        %v992 = vmul.f32 %v987, %v991
        %vm993 = vweird.f32 %v976
        %vm994 = vweird.f32 %v987
        %vm995 = vmor %vm993, %vm994
        %v996 = vsel %vm995, %v987, %v992
        %v997 = vmul.f32 %v963, %v986
        %v998 = vmul.f32 %v964, %v996
        %v1000 = vperm.slane %v965, 0
        %v1002 = vmul.f32 %v997, %v1000
        %v1003 = vmul.f32 %v998, %v1000
        %v1004 = vpack.c.bf16 %v1003, %v1002
        %v1005 = vld [vmem:[%s924] sm:$0xf]
        %v1006 = vld [vmem:[%s924 + $0x4] sm:$0xf]
        %v1007 = vld [vmem:[%s924 + $0x8] sm:$0xf]
        %v1008 = vld [vmem:[%s924 + $0xc] sm:$0xf]
        %v1009 = vld [vmem:[%s924 + $0x10] sm:$0xf]
        %v1010 = vld [vmem:[%s924 + $0x14] sm:$0xf]
        %v1011 = vld [vmem:[%s924 + $0x18] sm:$0xf]
        %v1012 = vld [vmem:[%s924 + $0x1c] sm:$0xf]
        %v1013 = vld [vmem:[%s924 + $0x20] sm:$0xf]
        %v1014 = vld [vmem:[%s924 + $0x24] sm:$0xf]
        %v1015 = vld [vmem:[%s924 + $0x28] sm:$0xf]
        %v1016 = vld [vmem:[%s924 + $0x2c] sm:$0xf]
        %v1029 = vunpack.c.l.b16 %v1005
        %v1030 = vunpack.c.l.b16 %v1006
        %v1031 = vunpack.c.l.b16 %v1007
        %v1032 = vunpack.c.l.b16 %v1008
        %v1033 = vunpack.c.l.b16 %v1009
        %v1034 = vunpack.c.l.b16 %v1010
        %v1035 = vunpack.c.l.b16 %v1011
        %v1036 = vunpack.c.l.b16 %v1012
        %v1037 = vunpack.c.l.b16 %v1013
        %v1038 = vunpack.c.l.b16 %v1014
        %v1039 = vunpack.c.l.b16 %v1015
        %v1040 = vunpack.c.l.b16 %v1016
        %v1041 = vpack.c.b16 %v1030, %v1029
        %v1042 = vpack.c.b16 %v1032, %v1031
        %v1043 = vpack.c.b16 %v1034, %v1033
        %v1044 = vpack.c.b16 %v1036, %v1035
        %v1045 = vpack.c.b16 %v1038, %v1037
        %v1046 = vpack.c.b16 %v1040, %v1039
        %v1054 = vsel %vm968, %v1004, 0
        %1056 = vmatpush.bf16.msra.mxu0 0
        %1057 = vmatpush.bf16.msra.mxu0 0
        %1058 = vmatpush.bf16.msra.mxu0 %v1046
        %1059 = vmatpush.bf16.msra.mxu0 %v1045
        %1060 = vmatpush.bf16.msra.mxu0 %v1044
        %1061 = vmatpush.bf16.msra.mxu0 %v1043
        %1062 = vmatpush.bf16.msra.mxu0 %v1042
        %1063 = vmatpush.bf16.msra.mxu0 %v1041
        %1064 = vmatmul.bf16.gmra.mxu0 %v1054
        %v1065 = vpop.f32.mrf.mxu0
        %v1066 = vadd.f32 0.0, %v1065
        %v1067 = vpop.f32.mrf.mxu0
        %v1068 = vadd.f32 0.0, %v1067
        %1069 = vdwg.mxu0
        %v1070 = vld [vmem:[%s780] sm:$0xf]
        %v1071 = vld [vmem:[%s780 + $0x4] sm:$0xf]
        %v1072 = vld [vmem:[%s780 + $0x8] sm:$0xf]
        %v1073 = vld [vmem:[%s780 + $0xc] sm:$0xf]
        %v1074 = vld [vmem:[%s780 + $0x10] sm:$0xf]
        %v1075 = vld [vmem:[%s780 + $0x14] sm:$0xf]
        %v1076 = vld [vmem:[%s780 + $0x18] sm:$0xf]
        %v1077 = vld [vmem:[%s780 + $0x1c] sm:$0xf]
        %v1078 = vld [vmem:[%s780 + $0x20] sm:$0xf]
        %v1079 = vld [vmem:[%s780 + $0x24] sm:$0xf]
        %v1080 = vld [vmem:[%s780 + $0x28] sm:$0xf]
        %v1081 = vld [vmem:[%s780 + $0x2c] sm:$0xf]
        %v1094 = vunpack.c.l.b16 %v1070
        %v1095 = vunpack.c.l.b16 %v1071
        %v1096 = vunpack.c.l.b16 %v1072
        %v1097 = vunpack.c.l.b16 %v1073
        %v1098 = vunpack.c.l.b16 %v1074
        %v1099 = vunpack.c.l.b16 %v1075
        %v1100 = vunpack.c.l.b16 %v1076
        %v1101 = vunpack.c.l.b16 %v1077
        %v1102 = vunpack.c.l.b16 %v1078
        %v1103 = vunpack.c.l.b16 %v1079
        %v1104 = vunpack.c.l.b16 %v1080
        %v1105 = vunpack.c.l.b16 %v1081
        %v1106 = vpack.c.b16 %v1095, %v1094
        %v1107 = vpack.c.b16 %v1097, %v1096
        %v1108 = vpack.c.b16 %v1099, %v1098
        %v1109 = vpack.c.b16 %v1101, %v1100
        %v1110 = vpack.c.b16 %v1103, %v1102
        %v1111 = vpack.c.b16 %v1105, %v1104
        %1118 = vmatpush.bf16.msra.mxu0 0
        %1119 = vmatpush.bf16.msra.mxu0 0
        %1120 = vmatpush.bf16.msra.mxu0 %v1111
        %1121 = vmatpush.bf16.msra.mxu0 %v1110
        %1122 = vmatpush.bf16.msra.mxu0 %v1109
        %1123 = vmatpush.bf16.msra.mxu0 %v1108
        %1124 = vmatpush.bf16.msra.mxu0 %v1107
        %1125 = vmatpush.bf16.msra.mxu0 %v1106
        %1126 = vmatmul.bf16.gmra.mxu0 %v1054
        %v1127 = vpop.f32.mrf.mxu0
        %v1128 = vadd.f32 0.0, %v1127
        %v1129 = vpop.f32.mrf.mxu0
        %v1130 = vadd.f32 0.0, %v1129
        %1131 = vdwg.mxu0
        %v1132 = vld [vmem:[%s790] sm:$0xf]
        %v1133 = vld [vmem:[%s790 + $0x4] sm:$0xf]
        %v1134 = vld [vmem:[%s790 + $0x8] sm:$0xf]
        %v1135 = vld [vmem:[%s790 + $0xc] sm:$0xf]
        %v1136 = vld [vmem:[%s790 + $0x10] sm:$0xf]
        %v1137 = vld [vmem:[%s790 + $0x14] sm:$0xf]
        %v1138 = vld [vmem:[%s790 + $0x18] sm:$0xf]
        %v1139 = vld [vmem:[%s790 + $0x1c] sm:$0xf]
        %v1140 = vld [vmem:[%s790 + $0x20] sm:$0xf]
        %v1141 = vld [vmem:[%s790 + $0x24] sm:$0xf]
        %v1142 = vld [vmem:[%s790 + $0x28] sm:$0xf]
        %v1143 = vld [vmem:[%s790 + $0x2c] sm:$0xf]
        %v1156 = vunpack.c.l.b16 %v1132
        %v1157 = vunpack.c.l.b16 %v1133
        %v1158 = vunpack.c.l.b16 %v1134
        %v1159 = vunpack.c.l.b16 %v1135
        %v1160 = vunpack.c.l.b16 %v1136
        %v1161 = vunpack.c.l.b16 %v1137
        %v1162 = vunpack.c.l.b16 %v1138
        %v1163 = vunpack.c.l.b16 %v1139
        %v1164 = vunpack.c.l.b16 %v1140
        %v1165 = vunpack.c.l.b16 %v1141
        %v1166 = vunpack.c.l.b16 %v1142
        %v1167 = vunpack.c.l.b16 %v1143
        %v1168 = vpack.c.b16 %v1157, %v1156
        %v1169 = vpack.c.b16 %v1159, %v1158
        %v1170 = vpack.c.b16 %v1161, %v1160
        %v1171 = vpack.c.b16 %v1163, %v1162
        %v1172 = vpack.c.b16 %v1165, %v1164
        %v1173 = vpack.c.b16 %v1167, %v1166
        %1180 = vmatpush.bf16.msra.mxu0 0
        %1181 = vmatpush.bf16.msra.mxu0 0
        %1182 = vmatpush.bf16.msra.mxu0 %v1173
        %1183 = vmatpush.bf16.msra.mxu0 %v1172
        %1184 = vmatpush.bf16.msra.mxu0 %v1171
        %1185 = vmatpush.bf16.msra.mxu0 %v1170
        %1186 = vmatpush.bf16.msra.mxu0 %v1169
        %1187 = vmatpush.bf16.msra.mxu0 %v1168
        %1188 = vmatmul.bf16.gmra.mxu0 %v1054
        %v1189 = vpop.f32.mrf.mxu0
        %v1190 = vadd.f32 0.0, %v1189
        %v1191 = vpop.f32.mrf.mxu0
        %v1192 = vadd.f32 0.0, %v1191
        %1193 = vdwg.mxu0
        %v1194 = vld [vmem:[#allocation6] sm:$0xff]
        %v1195 = vld [vmem:[#allocation6 + $0x8] sm:$0xff]
        %v1196 = vld [vmem:[#allocation8] sm:$0xff]
        %v1197 = vld [vmem:[#allocation8 + $0x8] sm:$0xff]
        %v1198 = vld [vmem:[#allocation9] sm:$0xff]
        %v1199 = vld [vmem:[#allocation9 + $0x8] sm:$0xff]
        %1200 = vrot.lane.b32.xlu0 %v1066, 127
        %v1201 = vpop.permute.xlu0 %1200
        %1202 = vrot.lane.b32.xlu0 %v1068, 127
        %v1203 = vpop.permute.xlu0 %1202
        %1204 = vrot.lane.b32.xlu0 %v1066, 1
        %v1205 = vpop.permute.xlu0 %1204
        %1206 = vrot.lane.b32.xlu0 %v1068, 1
        %v1207 = vpop.permute.xlu0 %1206
        %v1208 = vmul.f32 %v1066, %v1194
        %v1209 = vmul.f32 %v1068, %v1195
        %v1210 = vmul.f32 %v1201, %v1196
        %v1211 = vmul.f32 %v1203, %v1197
        %v1212 = vadd.f32 %v1208, %v1210
        %v1213 = vadd.f32 %v1209, %v1211
        %v1214 = vmul.f32 %v1205, %v1198
        %v1215 = vmul.f32 %v1207, %v1199
        %v1216 = vadd.f32 %v1212, %v1214
        %v1217 = vadd.f32 %v1213, %v1215
        %v1218 = vpack.c.bf16 %v1216, %v1216
        %v1219 = vpack.c.bf16 %v1217, %v1217
        %1220 = vrot.lane.b32.xlu0 %v1128, 127
        %v1221 = vpop.permute.xlu0 %1220
        %1222 = vrot.lane.b32.xlu0 %v1130, 127
        %v1223 = vpop.permute.xlu0 %1222
        %1224 = vrot.lane.b32.xlu0 %v1128, 1
        %v1225 = vpop.permute.xlu0 %1224
        %1226 = vrot.lane.b32.xlu0 %v1130, 1
        %v1227 = vpop.permute.xlu0 %1226
        %v1228 = vmul.f32 %v1128, %v1194
        %v1229 = vmul.f32 %v1130, %v1195
        %v1230 = vmul.f32 %v1221, %v1196
        %v1231 = vmul.f32 %v1223, %v1197
        %v1232 = vadd.f32 %v1228, %v1230
        %v1233 = vadd.f32 %v1229, %v1231
        %v1234 = vmul.f32 %v1225, %v1198
        %v1235 = vmul.f32 %v1227, %v1199
        %v1236 = vadd.f32 %v1232, %v1234
        %v1237 = vadd.f32 %v1233, %v1235
        %v1238 = vpack.c.bf16 %v1236, %v1236
        %v1239 = vpack.c.bf16 %v1237, %v1237
        %v1240 = vpack.c.bf16 %v1190, %v1190
        %v1241 = vpack.c.bf16 %v1192, %v1192
        %v1244 = vunpack.c.l.b16 %v1218
        %v1245 = vunpack.c.l.b16 %v1219
        %v1246 = vpack.c.b16 %v1245, %v1244
        %v1249 = vunpack.c.l.b16 %v1238
        %v1250 = vunpack.c.l.b16 %v1239
        %v1251 = vpack.c.b16 %v1250, %v1249
        %vm1252 = vcmask 130048
        %v1254 = vsel %vm1252, %v1246, 0
        %v1257 = vsel %vm1252, %v1251, 0
        %1259 = vmatpush.bf16.xpose.msra.mxu0 0
        %1260 = vmatpush.bf16.xpose.msra.mxu0 0
        %1261 = vmatpush.bf16.xpose.msra.mxu0 0
        %1262 = vmatpush.bf16.xpose.msra.mxu0 0
        %1263 = vmatpush.bf16.xpose.msra.mxu0 0
        %1264 = vmatpush.bf16.xpose.msra.mxu0 0
        %1265 = vmatpush.bf16.xpose.msra.mxu0 0
        %1266 = vmatpush.bf16.xpose.msra.mxu0 %v1257
        %1267 = vmatmul.bf16.gmra.mxu0 %v1254
        %v1268 = vpop.f32.mrf.mxu0
        %v1269 = vadd.f32 0.0, %v1268
        %v1270 = vpop.f32.mrf.mxu0
        %v1271 = vadd.f32 0.0, %v1270
        %1272 = vdwg.mxu0
        %v1273 = vsel %vm1252, %v1269, -inf
        %1274 = vmax.xlane.f32.xlu0 %v1273
        %v1275 = vpop.xlane.xlu0 %1274
        %v1276 = vsel %vm1252, %v1271, -inf
        %1277 = vmax.xlane.f32.xlu0 %v1276
        %v1278 = vpop.xlane.xlu0 %1277
        %v1279 = vsub.f32 %v1269, %v1275
        %v1280 = vsub.f32 %v1271, %v1278
        %v1281 = vmul.f32 %v1279, 1.442695
        %v1282 = vpow.pop %v1281
        %v1283 = vmul.f32 %v1280, 1.442695
        %v1284 = vpow.pop %v1283
        %v1285 = vsel %vm1252, %v1282, 0.0
        %1286 = vadd.xlane.f32.xlu0 %v1285
        %v1287 = vpop.xlane.xlu0 %1286
        %v1288 = vsel %vm1252, %v1284, 0.0
        %1289 = vadd.xlane.f32.xlu0 %v1288
        %v1290 = vpop.xlane.xlu0 %1289
        %v1291 = vrcp.pop %v1287
        %v1292 = vrcp.pop %v1290
        %v1293 = vmul.f32 %v1282, %v1291
        %v1294 = vmul.f32 %v1284, %v1292
        %v1295 = vpack.c.bf16 %v1294, %v1293
        %v1298 = vunpack.c.l.b16 %v1240
        %v1299 = vunpack.c.l.b16 %v1241
        %v1300 = vpack.c.b16 %v1299, %v1298
        %v1303 = vsel %vm1252, %v1295, 0
        %1305 = vmatpush.bf16.msra.mxu0 0
        %1306 = vmatpush.bf16.msra.mxu0 0
        %1307 = vmatpush.bf16.msra.mxu0 0
        %1308 = vmatpush.bf16.msra.mxu0 0
        %1309 = vmatpush.bf16.msra.mxu0 0
        %1310 = vmatpush.bf16.msra.mxu0 0
        %1311 = vmatpush.bf16.msra.mxu0 0
        %1312 = vmatpush.bf16.msra.mxu0 %v1300
        %1313 = vmatmul.bf16.gmra.mxu0 %v1303
        %v1314 = vpop.f32.mrf.mxu0
        %v1315 = vadd.f32 0.0, %v1314
        %v1316 = vpop.f32.mrf.mxu0
        %v1317 = vadd.f32 0.0, %v1316
        %1318 = vdwg.mxu0
        %1319 = vrot.lane.b32.xlu0 %v1246, 112
        %v1320 = vpop.permute.xlu0 %1319
        %1321 = vrot.lane.b32.xlu0 %v1251, 112
        %v1322 = vpop.permute.xlu0 %1321
        %v1324 = vsel %vm1252, %v1320, 0
        %v1327 = vsel %vm1252, %v1322, 0
        %1329 = vmatpush.bf16.xpose.msra.mxu0 0
        %1330 = vmatpush.bf16.xpose.msra.mxu0 0
        %1331 = vmatpush.bf16.xpose.msra.mxu0 0
        %1332 = vmatpush.bf16.xpose.msra.mxu0 0
        %1333 = vmatpush.bf16.xpose.msra.mxu0 0
        %1334 = vmatpush.bf16.xpose.msra.mxu0 0
        %1335 = vmatpush.bf16.xpose.msra.mxu0 0
        %1336 = vmatpush.bf16.xpose.msra.mxu0 %v1327
        %1337 = vmatmul.bf16.gmra.mxu0 %v1324
        %v1338 = vpop.f32.mrf.mxu0
        %v1339 = vadd.f32 0.0, %v1338
        %v1340 = vpop.f32.mrf.mxu0
        %v1341 = vadd.f32 0.0, %v1340
        %1342 = vdwg.mxu0
        %v1343 = vsel %vm1252, %v1339, -inf
        %1344 = vmax.xlane.f32.xlu0 %v1343
        %v1345 = vpop.xlane.xlu0 %1344
        %v1346 = vsel %vm1252, %v1341, -inf
        %1347 = vmax.xlane.f32.xlu0 %v1346
        %v1348 = vpop.xlane.xlu0 %1347
        %v1349 = vsub.f32 %v1339, %v1345
        %v1350 = vsub.f32 %v1341, %v1348
        %v1351 = vmul.f32 %v1349, 1.442695
        %v1352 = vpow.pop %v1351
        %v1353 = vmul.f32 %v1350, 1.442695
        %v1354 = vpow.pop %v1353
        %v1355 = vsel %vm1252, %v1352, 0.0
        %1356 = vadd.xlane.f32.xlu0 %v1355
        %v1357 = vpop.xlane.xlu0 %1356
        %v1358 = vsel %vm1252, %v1354, 0.0
        %1359 = vadd.xlane.f32.xlu0 %v1358
        %v1360 = vpop.xlane.xlu0 %1359
        %v1361 = vrcp.pop %v1357
        %v1362 = vrcp.pop %v1360
        %v1363 = vmul.f32 %v1352, %v1361
        %v1364 = vmul.f32 %v1354, %v1362
        %v1365 = vpack.c.bf16 %v1364, %v1363
        %1366 = vrot.lane.b32.xlu0 %v1300, 112
        %v1367 = vpop.permute.xlu0 %1366
        %v1370 = vsel %vm1252, %v1365, 0
        %1372 = vmatpush.bf16.msra.mxu0 0
        %1373 = vmatpush.bf16.msra.mxu0 0
        %1374 = vmatpush.bf16.msra.mxu0 0
        %1375 = vmatpush.bf16.msra.mxu0 0
        %1376 = vmatpush.bf16.msra.mxu0 0
        %1377 = vmatpush.bf16.msra.mxu0 0
        %1378 = vmatpush.bf16.msra.mxu0 0
        %1379 = vmatpush.bf16.msra.mxu0 %v1367
        %1380 = vmatmul.bf16.gmra.mxu0 %v1370
        %v1381 = vpop.f32.mrf.mxu0
        %v1382 = vadd.f32 0.0, %v1381
        %v1383 = vpop.f32.mrf.mxu0
        %v1384 = vadd.f32 0.0, %v1383
        %1385 = vdwg.mxu0
        %1386 = vrot.lane.b32.xlu0 %v1246, 96
        %v1387 = vpop.permute.xlu0 %1386
        %1388 = vrot.lane.b32.xlu0 %v1251, 96
        %v1389 = vpop.permute.xlu0 %1388
        %v1391 = vsel %vm1252, %v1387, 0
        %v1394 = vsel %vm1252, %v1389, 0
        %1396 = vmatpush.bf16.xpose.msra.mxu0 0
        %1397 = vmatpush.bf16.xpose.msra.mxu0 0
        %1398 = vmatpush.bf16.xpose.msra.mxu0 0
        %1399 = vmatpush.bf16.xpose.msra.mxu0 0
        %1400 = vmatpush.bf16.xpose.msra.mxu0 0
        %1401 = vmatpush.bf16.xpose.msra.mxu0 0
        %1402 = vmatpush.bf16.xpose.msra.mxu0 0
        %1403 = vmatpush.bf16.xpose.msra.mxu0 %v1394
        %1404 = vmatmul.bf16.gmra.mxu0 %v1391
        %v1405 = vpop.f32.mrf.mxu0
        %v1406 = vadd.f32 0.0, %v1405
        %v1407 = vpop.f32.mrf.mxu0
        %v1408 = vadd.f32 0.0, %v1407
        %1409 = vdwg.mxu0
        %v1410 = vsel %vm1252, %v1406, -inf
        %1411 = vmax.xlane.f32.xlu0 %v1410
        %v1412 = vpop.xlane.xlu0 %1411
        %v1413 = vsel %vm1252, %v1408, -inf
        %1414 = vmax.xlane.f32.xlu0 %v1413
        %v1415 = vpop.xlane.xlu0 %1414
        %v1416 = vsub.f32 %v1406, %v1412
        %v1417 = vsub.f32 %v1408, %v1415
        %v1418 = vmul.f32 %v1416, 1.442695
        %v1419 = vpow.pop %v1418
        %v1420 = vmul.f32 %v1417, 1.442695
        %v1421 = vpow.pop %v1420
        %v1422 = vsel %vm1252, %v1419, 0.0
        %1423 = vadd.xlane.f32.xlu0 %v1422
        %v1424 = vpop.xlane.xlu0 %1423
        %v1425 = vsel %vm1252, %v1421, 0.0
        %1426 = vadd.xlane.f32.xlu0 %v1425
        %v1427 = vpop.xlane.xlu0 %1426
        %v1428 = vrcp.pop %v1424
        %v1429 = vrcp.pop %v1427
        %v1430 = vmul.f32 %v1419, %v1428
        %v1431 = vmul.f32 %v1421, %v1429
        %v1432 = vpack.c.bf16 %v1431, %v1430
        %1433 = vrot.lane.b32.xlu0 %v1300, 96
        %v1434 = vpop.permute.xlu0 %1433
        %v1437 = vsel %vm1252, %v1432, 0
        %1439 = vmatpush.bf16.msra.mxu0 0
        %1440 = vmatpush.bf16.msra.mxu0 0
        %1441 = vmatpush.bf16.msra.mxu0 0
        %1442 = vmatpush.bf16.msra.mxu0 0
        %1443 = vmatpush.bf16.msra.mxu0 0
        %1444 = vmatpush.bf16.msra.mxu0 0
        %1445 = vmatpush.bf16.msra.mxu0 0
        %1446 = vmatpush.bf16.msra.mxu0 %v1434
        %1447 = vmatmul.bf16.gmra.mxu0 %v1437
        %v1448 = vpop.f32.mrf.mxu0
        %v1449 = vadd.f32 0.0, %v1448
        %v1450 = vpop.f32.mrf.mxu0
        %v1451 = vadd.f32 0.0, %v1450
        %1452 = vdwg.mxu0
        %1453 = vrot.lane.b32.xlu0 %v1246, 80
        %v1454 = vpop.permute.xlu0 %1453
        %1455 = vrot.lane.b32.xlu0 %v1251, 80
        %v1456 = vpop.permute.xlu0 %1455
        %v1458 = vsel %vm1252, %v1454, 0
        %v1461 = vsel %vm1252, %v1456, 0
        %1463 = vmatpush.bf16.xpose.msra.mxu0 0
        %1464 = vmatpush.bf16.xpose.msra.mxu0 0
        %1465 = vmatpush.bf16.xpose.msra.mxu0 0
        %1466 = vmatpush.bf16.xpose.msra.mxu0 0
        %1467 = vmatpush.bf16.xpose.msra.mxu0 0
        %1468 = vmatpush.bf16.xpose.msra.mxu0 0
        %1469 = vmatpush.bf16.xpose.msra.mxu0 0
        %1470 = vmatpush.bf16.xpose.msra.mxu0 %v1461
        %1471 = vmatmul.bf16.gmra.mxu0 %v1458
        %v1472 = vpop.f32.mrf.mxu0
        %v1473 = vadd.f32 0.0, %v1472
        %v1474 = vpop.f32.mrf.mxu0
        %v1475 = vadd.f32 0.0, %v1474
        %1476 = vdwg.mxu0
        %v1477 = vsel %vm1252, %v1473, -inf
        %1478 = vmax.xlane.f32.xlu0 %v1477
        %v1479 = vpop.xlane.xlu0 %1478
        %v1480 = vsel %vm1252, %v1475, -inf
        %1481 = vmax.xlane.f32.xlu0 %v1480
        %v1482 = vpop.xlane.xlu0 %1481
        %v1483 = vsub.f32 %v1473, %v1479
        %v1484 = vsub.f32 %v1475, %v1482
        %v1485 = vmul.f32 %v1483, 1.442695
        %v1486 = vpow.pop %v1485
        %v1487 = vmul.f32 %v1484, 1.442695
        %v1488 = vpow.pop %v1487
        %v1489 = vsel %vm1252, %v1486, 0.0
        %1490 = vadd.xlane.f32.xlu0 %v1489
        %v1491 = vpop.xlane.xlu0 %1490
        %v1492 = vsel %vm1252, %v1488, 0.0
        %1493 = vadd.xlane.f32.xlu0 %v1492
        %v1494 = vpop.xlane.xlu0 %1493
        %v1495 = vrcp.pop %v1491
        %v1496 = vrcp.pop %v1494
        %v1497 = vmul.f32 %v1486, %v1495
        %v1498 = vmul.f32 %v1488, %v1496
        %v1499 = vpack.c.bf16 %v1498, %v1497
        %1500 = vrot.lane.b32.xlu0 %v1300, 80
        %v1501 = vpop.permute.xlu0 %1500
        %v1504 = vsel %vm1252, %v1499, 0
        %1506 = vmatpush.bf16.msra.mxu0 0
        %1507 = vmatpush.bf16.msra.mxu0 0
        %1508 = vmatpush.bf16.msra.mxu0 0
        %1509 = vmatpush.bf16.msra.mxu0 0
        %1510 = vmatpush.bf16.msra.mxu0 0
        %1511 = vmatpush.bf16.msra.mxu0 0
        %1512 = vmatpush.bf16.msra.mxu0 0
        %1513 = vmatpush.bf16.msra.mxu0 %v1501
        %1514 = vmatmul.bf16.gmra.mxu0 %v1504
        %v1515 = vpop.f32.mrf.mxu0
        %v1516 = vadd.f32 0.0, %v1515
        %v1517 = vpop.f32.mrf.mxu0
        %v1518 = vadd.f32 0.0, %v1517
        %1519 = vdwg.mxu0
        %1520 = vrot.lane.b32.xlu0 %v1246, 64
        %v1521 = vpop.permute.xlu0 %1520
        %1522 = vrot.lane.b32.xlu0 %v1251, 64
        %v1523 = vpop.permute.xlu0 %1522
        %v1525 = vsel %vm1252, %v1521, 0
        %v1528 = vsel %vm1252, %v1523, 0
        %1530 = vmatpush.bf16.xpose.msra.mxu0 0
        %1531 = vmatpush.bf16.xpose.msra.mxu0 0
        %1532 = vmatpush.bf16.xpose.msra.mxu0 0
        %1533 = vmatpush.bf16.xpose.msra.mxu0 0
        %1534 = vmatpush.bf16.xpose.msra.mxu0 0
        %1535 = vmatpush.bf16.xpose.msra.mxu0 0
        %1536 = vmatpush.bf16.xpose.msra.mxu0 0
        %1537 = vmatpush.bf16.xpose.msra.mxu0 %v1528
        %1538 = vmatmul.bf16.gmra.mxu0 %v1525
        %v1539 = vpop.f32.mrf.mxu0
        %v1540 = vadd.f32 0.0, %v1539
        %v1541 = vpop.f32.mrf.mxu0
        %v1542 = vadd.f32 0.0, %v1541
        %1543 = vdwg.mxu0
        %v1544 = vsel %vm1252, %v1540, -inf
        %1545 = vmax.xlane.f32.xlu0 %v1544
        %v1546 = vpop.xlane.xlu0 %1545
        %v1547 = vsel %vm1252, %v1542, -inf
        %1548 = vmax.xlane.f32.xlu0 %v1547
        %v1549 = vpop.xlane.xlu0 %1548
        %v1550 = vsub.f32 %v1540, %v1546
        %v1551 = vsub.f32 %v1542, %v1549
        %v1552 = vmul.f32 %v1550, 1.442695
        %v1553 = vpow.pop %v1552
        %v1554 = vmul.f32 %v1551, 1.442695
        %v1555 = vpow.pop %v1554
        %v1556 = vsel %vm1252, %v1553, 0.0
        %1557 = vadd.xlane.f32.xlu0 %v1556
        %v1558 = vpop.xlane.xlu0 %1557
        %v1559 = vsel %vm1252, %v1555, 0.0
        %1560 = vadd.xlane.f32.xlu0 %v1559
        %v1561 = vpop.xlane.xlu0 %1560
        %v1562 = vrcp.pop %v1558
        %v1563 = vrcp.pop %v1561
        %v1564 = vmul.f32 %v1553, %v1562
        %v1565 = vmul.f32 %v1555, %v1563
        %v1566 = vpack.c.bf16 %v1565, %v1564
        %1567 = vrot.lane.b32.xlu0 %v1300, 64
        %v1568 = vpop.permute.xlu0 %1567
        %v1571 = vsel %vm1252, %v1566, 0
        %1573 = vmatpush.bf16.msra.mxu0 0
        %1574 = vmatpush.bf16.msra.mxu0 0
        %1575 = vmatpush.bf16.msra.mxu0 0
        %1576 = vmatpush.bf16.msra.mxu0 0
        %1577 = vmatpush.bf16.msra.mxu0 0
        %1578 = vmatpush.bf16.msra.mxu0 0
        %1579 = vmatpush.bf16.msra.mxu0 0
        %1580 = vmatpush.bf16.msra.mxu0 %v1568
        %1581 = vmatmul.bf16.gmra.mxu0 %v1571
        %v1582 = vpop.f32.mrf.mxu0
        %v1583 = vadd.f32 0.0, %v1582
        %v1584 = vpop.f32.mrf.mxu0
        %v1585 = vadd.f32 0.0, %v1584
        %1586 = vdwg.mxu0
        %1587 = vrot.lane.b32.xlu0 %v1246, 48
        %v1588 = vpop.permute.xlu0 %1587
        %1589 = vrot.lane.b32.xlu0 %v1251, 48
        %v1590 = vpop.permute.xlu0 %1589
        %v1592 = vsel %vm1252, %v1588, 0
        %v1595 = vsel %vm1252, %v1590, 0
        %1597 = vmatpush.bf16.xpose.msra.mxu0 0
        %1598 = vmatpush.bf16.xpose.msra.mxu0 0
        %1599 = vmatpush.bf16.xpose.msra.mxu0 0
        %1600 = vmatpush.bf16.xpose.msra.mxu0 0
        %1601 = vmatpush.bf16.xpose.msra.mxu0 0
        %1602 = vmatpush.bf16.xpose.msra.mxu0 0
        %1603 = vmatpush.bf16.xpose.msra.mxu0 0
        %1604 = vmatpush.bf16.xpose.msra.mxu0 %v1595
        %1605 = vmatmul.bf16.gmra.mxu0 %v1592
        %v1606 = vpop.f32.mrf.mxu0
        %v1607 = vadd.f32 0.0, %v1606
        %v1608 = vpop.f32.mrf.mxu0
        %v1609 = vadd.f32 0.0, %v1608
        %1610 = vdwg.mxu0
        %v1611 = vsel %vm1252, %v1607, -inf
        %1612 = vmax.xlane.f32.xlu0 %v1611
        %v1613 = vpop.xlane.xlu0 %1612
        %v1614 = vsel %vm1252, %v1609, -inf
        %1615 = vmax.xlane.f32.xlu0 %v1614
        %v1616 = vpop.xlane.xlu0 %1615
        %v1617 = vsub.f32 %v1607, %v1613
        %v1618 = vsub.f32 %v1609, %v1616
        %v1619 = vmul.f32 %v1617, 1.442695
        %v1620 = vpow.pop %v1619
        %v1621 = vmul.f32 %v1618, 1.442695
        %v1622 = vpow.pop %v1621
        %v1623 = vsel %vm1252, %v1620, 0.0
        %1624 = vadd.xlane.f32.xlu0 %v1623
        %v1625 = vpop.xlane.xlu0 %1624
        %v1626 = vsel %vm1252, %v1622, 0.0
        %1627 = vadd.xlane.f32.xlu0 %v1626
        %v1628 = vpop.xlane.xlu0 %1627
        %v1629 = vrcp.pop %v1625
        %v1630 = vrcp.pop %v1628
        %v1631 = vmul.f32 %v1620, %v1629
        %v1632 = vmul.f32 %v1622, %v1630
        %v1633 = vpack.c.bf16 %v1632, %v1631
        %1634 = vrot.lane.b32.xlu0 %v1300, 48
        %v1635 = vpop.permute.xlu0 %1634
        %v1638 = vsel %vm1252, %v1633, 0
        %1640 = vmatpush.bf16.msra.mxu0 0
        %1641 = vmatpush.bf16.msra.mxu0 0
        %1642 = vmatpush.bf16.msra.mxu0 0
        %1643 = vmatpush.bf16.msra.mxu0 0
        %1644 = vmatpush.bf16.msra.mxu0 0
        %1645 = vmatpush.bf16.msra.mxu0 0
        %1646 = vmatpush.bf16.msra.mxu0 0
        %1647 = vmatpush.bf16.msra.mxu0 %v1635
        %1648 = vmatmul.bf16.gmra.mxu0 %v1638
        %v1649 = vpop.f32.mrf.mxu0
        %v1650 = vadd.f32 0.0, %v1649
        %v1651 = vpop.f32.mrf.mxu0
        %v1652 = vadd.f32 0.0, %v1651
        %1653 = vdwg.mxu0
        %1654 = vrot.lane.b32.xlu0 %v1246, 32
        %v1655 = vpop.permute.xlu0 %1654
        %1656 = vrot.lane.b32.xlu0 %v1251, 32
        %v1657 = vpop.permute.xlu0 %1656
        %v1659 = vsel %vm1252, %v1655, 0
        %v1662 = vsel %vm1252, %v1657, 0
        %1664 = vmatpush.bf16.xpose.msra.mxu0 0
        %1665 = vmatpush.bf16.xpose.msra.mxu0 0
        %1666 = vmatpush.bf16.xpose.msra.mxu0 0
        %1667 = vmatpush.bf16.xpose.msra.mxu0 0
        %1668 = vmatpush.bf16.xpose.msra.mxu0 0
        %1669 = vmatpush.bf16.xpose.msra.mxu0 0
        %1670 = vmatpush.bf16.xpose.msra.mxu0 0
        %1671 = vmatpush.bf16.xpose.msra.mxu0 %v1662
        %1672 = vmatmul.bf16.gmra.mxu0 %v1659
        %v1673 = vpop.f32.mrf.mxu0
        %v1674 = vadd.f32 0.0, %v1673
        %v1675 = vpop.f32.mrf.mxu0
        %v1676 = vadd.f32 0.0, %v1675
        %1677 = vdwg.mxu0
        %v1678 = vsel %vm1252, %v1674, -inf
        %1679 = vmax.xlane.f32.xlu0 %v1678
        %v1680 = vpop.xlane.xlu0 %1679
        %v1681 = vsel %vm1252, %v1676, -inf
        %1682 = vmax.xlane.f32.xlu0 %v1681
        %v1683 = vpop.xlane.xlu0 %1682
        %v1684 = vsub.f32 %v1674, %v1680
        %v1685 = vsub.f32 %v1676, %v1683
        %v1686 = vmul.f32 %v1684, 1.442695
        %v1687 = vpow.pop %v1686
        %v1688 = vmul.f32 %v1685, 1.442695
        %v1689 = vpow.pop %v1688
        %v1690 = vsel %vm1252, %v1687, 0.0
        %1691 = vadd.xlane.f32.xlu0 %v1690
        %v1692 = vpop.xlane.xlu0 %1691
        %v1693 = vsel %vm1252, %v1689, 0.0
        %1694 = vadd.xlane.f32.xlu0 %v1693
        %v1695 = vpop.xlane.xlu0 %1694
        %v1696 = vrcp.pop %v1692
        %v1697 = vrcp.pop %v1695
        %v1698 = vmul.f32 %v1687, %v1696
        %v1699 = vmul.f32 %v1689, %v1697
        %v1700 = vpack.c.bf16 %v1699, %v1698
        %1701 = vrot.lane.b32.xlu0 %v1300, 32
        %v1702 = vpop.permute.xlu0 %1701
        %v1705 = vsel %vm1252, %v1700, 0
        %1707 = vmatpush.bf16.msra.mxu0 0
        %1708 = vmatpush.bf16.msra.mxu0 0
        %1709 = vmatpush.bf16.msra.mxu0 0
        %1710 = vmatpush.bf16.msra.mxu0 0
        %1711 = vmatpush.bf16.msra.mxu0 0
        %1712 = vmatpush.bf16.msra.mxu0 0
        %1713 = vmatpush.bf16.msra.mxu0 0
        %1714 = vmatpush.bf16.msra.mxu0 %v1702
        %1715 = vmatmul.bf16.gmra.mxu0 %v1705
        %v1716 = vpop.f32.mrf.mxu0
        %v1717 = vadd.f32 0.0, %v1716
        %v1718 = vpop.f32.mrf.mxu0
        %v1719 = vadd.f32 0.0, %v1718
        %1720 = vdwg.mxu0
        %1721 = vrot.lane.b32.xlu0 %v1246, 16
        %v1722 = vpop.permute.xlu0 %1721
        %1723 = vrot.lane.b32.xlu0 %v1251, 16
        %v1724 = vpop.permute.xlu0 %1723
        %v1726 = vsel %vm1252, %v1722, 0
        %v1729 = vsel %vm1252, %v1724, 0
        %1731 = vmatpush.bf16.xpose.msra.mxu0 0
        %1732 = vmatpush.bf16.xpose.msra.mxu0 0
        %1733 = vmatpush.bf16.xpose.msra.mxu0 0
        %1734 = vmatpush.bf16.xpose.msra.mxu0 0
        %1735 = vmatpush.bf16.xpose.msra.mxu0 0
        %1736 = vmatpush.bf16.xpose.msra.mxu0 0
        %1737 = vmatpush.bf16.xpose.msra.mxu0 0
        %1738 = vmatpush.bf16.xpose.msra.mxu0 %v1729
        %1739 = vmatmul.bf16.gmra.mxu0 %v1726
        %v1740 = vpop.f32.mrf.mxu0
        %v1741 = vadd.f32 0.0, %v1740
        %v1742 = vpop.f32.mrf.mxu0
        %v1743 = vadd.f32 0.0, %v1742
        %1744 = vdwg.mxu0
        %v1745 = vsel %vm1252, %v1741, -inf
        %1746 = vmax.xlane.f32.xlu0 %v1745
        %v1747 = vpop.xlane.xlu0 %1746
        %v1748 = vsel %vm1252, %v1743, -inf
        %1749 = vmax.xlane.f32.xlu0 %v1748
        %v1750 = vpop.xlane.xlu0 %1749
        %v1751 = vsub.f32 %v1741, %v1747
        %v1752 = vsub.f32 %v1743, %v1750
        %v1753 = vmul.f32 %v1751, 1.442695
        %v1754 = vpow.pop %v1753
        %v1755 = vmul.f32 %v1752, 1.442695
        %v1756 = vpow.pop %v1755
        %v1757 = vsel %vm1252, %v1754, 0.0
        %1758 = vadd.xlane.f32.xlu0 %v1757
        %v1759 = vpop.xlane.xlu0 %1758
        %v1760 = vsel %vm1252, %v1756, 0.0
        %1761 = vadd.xlane.f32.xlu0 %v1760
        %v1762 = vpop.xlane.xlu0 %1761
        %v1763 = vrcp.pop %v1759
        %v1764 = vrcp.pop %v1762
        %v1765 = vmul.f32 %v1754, %v1763
        %v1766 = vmul.f32 %v1756, %v1764
        %v1767 = vpack.c.bf16 %v1766, %v1765
        %1768 = vrot.lane.b32.xlu0 %v1300, 16
        %v1769 = vpop.permute.xlu0 %1768
        %v1772 = vsel %vm1252, %v1767, 0
        %1774 = vmatpush.bf16.msra.mxu0 0
        %1775 = vmatpush.bf16.msra.mxu0 0
        %1776 = vmatpush.bf16.msra.mxu0 0
        %1777 = vmatpush.bf16.msra.mxu0 0
        %1778 = vmatpush.bf16.msra.mxu0 0
        %1779 = vmatpush.bf16.msra.mxu0 0
        %1780 = vmatpush.bf16.msra.mxu0 0
        %1781 = vmatpush.bf16.msra.mxu0 %v1769
        %1782 = vmatmul.bf16.gmra.mxu0 %v1772
        %v1783 = vpop.f32.mrf.mxu0
        %v1784 = vadd.f32 0.0, %v1783
        %v1785 = vpop.f32.mrf.mxu0
        %v1786 = vadd.f32 0.0, %v1785
        %1787 = vdwg.mxu0
        %1790 = vrot.lane.b32.xlu0 %v1382, 16
        %v1791 = vpop.permute.xlu0 %1790
        %1792 = vrot.lane.b32.xlu0 %v1384, 16
        %v1793 = vpop.permute.xlu0 %1792
        %1798 = vrot.lane.b32.xlu0 %v1449, 32
        %v1799 = vpop.permute.xlu0 %1798
        %1800 = vrot.lane.b32.xlu0 %v1451, 32
        %v1801 = vpop.permute.xlu0 %1800
        %1806 = vrot.lane.b32.xlu0 %v1516, 48
        %v1807 = vpop.permute.xlu0 %1806
        %1808 = vrot.lane.b32.xlu0 %v1518, 48
        %v1809 = vpop.permute.xlu0 %1808
        %1814 = vrot.lane.b32.xlu0 %v1583, 64
        %v1815 = vpop.permute.xlu0 %1814
        %1816 = vrot.lane.b32.xlu0 %v1585, 64
        %v1817 = vpop.permute.xlu0 %1816
        %1822 = vrot.lane.b32.xlu0 %v1650, 80
        %v1823 = vpop.permute.xlu0 %1822
        %1824 = vrot.lane.b32.xlu0 %v1652, 80
        %v1825 = vpop.permute.xlu0 %1824
        %1830 = vrot.lane.b32.xlu0 %v1717, 96
        %v1831 = vpop.permute.xlu0 %1830
        %1832 = vrot.lane.b32.xlu0 %v1719, 96
        %v1833 = vpop.permute.xlu0 %1832
        %1838 = vrot.lane.b32.xlu0 %v1784, 112
        %v1839 = vpop.permute.xlu0 %1838
        %1840 = vrot.lane.b32.xlu0 %v1786, 112
        %v1841 = vpop.permute.xlu0 %1840
        %v1844 = vsel %vm1252, %v1315, %v1791
        %v1845 = vsel %vm1252, %v1317, %v1793
        %vm1846 = vcmask 261120
        %v1847 = vsel %vm1846, %v1844, %v1799
        %v1848 = vsel %vm1846, %v1845, %v1801
        %vm1849 = vcmask 392192
        %v1850 = vsel %vm1849, %v1847, %v1807
        %v1851 = vsel %vm1849, %v1848, %v1809
        %vm1852 = vcmask 523264
        %v1853 = vsel %vm1852, %v1850, %v1815
        %v1854 = vsel %vm1852, %v1851, %v1817
        %vm1855 = vcmask 654336
        %v1856 = vsel %vm1855, %v1853, %v1823
        %v1857 = vsel %vm1855, %v1854, %v1825
        %v1858 = vsel %vm968, %v1856, %v1831
        %v1859 = vsel %vm968, %v1857, %v1833
        %vm1860 = vcmask 916480
        %v1861 = vsel %vm1860, %v1858, %v1839
        %v1862 = vsel %vm1860, %v1859, %v1841
        %v1863 = vpack.c.bf16 %v1862, %v1861
        %v1864 = vld [vmem:[%s929] sm:$0xf]
        %v1865 = vld [vmem:[%s929 + $0x4] sm:$0xf]
        %v1866 = vld [vmem:[%s929 + $0x8] sm:$0xf]
        %v1867 = vld [vmem:[%s929 + $0xc] sm:$0xf]
        %v1868 = vld [vmem:[%s929 + $0x10] sm:$0xf]
        %v1869 = vld [vmem:[%s929 + $0x14] sm:$0xf]
        %v1870 = vld [vmem:[%s929 + $0x18] sm:$0xf]
        %v1871 = vld [vmem:[%s929 + $0x1c] sm:$0xf]
        %v1872 = vld [vmem:[%s929 + $0x20] sm:$0xf]
        %v1873 = vld [vmem:[%s929 + $0x24] sm:$0xf]
        %v1874 = vld [vmem:[%s929 + $0x28] sm:$0xf]
        %v1875 = vld [vmem:[%s929 + $0x2c] sm:$0xf]
        %v1876 = vld [vmem:[%s929 + $0x30] sm:$0xf]
        %v1877 = vld [vmem:[%s929 + $0x34] sm:$0xf]
        %v1878 = vld [vmem:[%s929 + $0x38] sm:$0xf]
        %v1879 = vld [vmem:[%s929 + $0x3c] sm:$0xf]
        %v1896 = vunpack.c.l.b16 %v1864
        %v1897 = vunpack.c.l.b16 %v1865
        %v1898 = vunpack.c.l.b16 %v1866
        %v1899 = vunpack.c.l.b16 %v1867
        %v1900 = vunpack.c.l.b16 %v1868
        %v1901 = vunpack.c.l.b16 %v1869
        %v1902 = vunpack.c.l.b16 %v1870
        %v1903 = vunpack.c.l.b16 %v1871
        %v1904 = vunpack.c.l.b16 %v1872
        %v1905 = vunpack.c.l.b16 %v1873
        %v1906 = vunpack.c.l.b16 %v1874
        %v1907 = vunpack.c.l.b16 %v1875
        %v1908 = vunpack.c.l.b16 %v1876
        %v1909 = vunpack.c.l.b16 %v1877
        %v1910 = vunpack.c.l.b16 %v1878
        %v1911 = vunpack.c.l.b16 %v1879
        %v1912 = vpack.c.b16 %v1897, %v1896
        %v1913 = vpack.c.b16 %v1899, %v1898
        %v1914 = vpack.c.b16 %v1901, %v1900
        %v1915 = vpack.c.b16 %v1903, %v1902
        %v1916 = vpack.c.b16 %v1905, %v1904
        %v1917 = vpack.c.b16 %v1907, %v1906
        %v1918 = vpack.c.b16 %v1909, %v1908
        %v1919 = vpack.c.b16 %v1911, %v1910
        %1928 = vmatpush.bf16.msra.mxu0 %v1919
        %1929 = vmatpush.bf16.msra.mxu0 %v1918
        %1930 = vmatpush.bf16.msra.mxu0 %v1917
        %1931 = vmatpush.bf16.msra.mxu0 %v1916
        %1932 = vmatpush.bf16.msra.mxu0 %v1915
        %1933 = vmatpush.bf16.msra.mxu0 %v1914
        %1934 = vmatpush.bf16.msra.mxu0 %v1913
        %1935 = vmatpush.bf16.msra.mxu0 %v1912
        %1936 = vmatmul.bf16.gmra.mxu0 %v1863
        %v1937 = vpop.f32.mrf.mxu0
        %v1938 = vadd.f32 0.0, %v1937
        %v1939 = vpop.f32.mrf.mxu0
        %v1940 = vadd.f32 0.0, %v1939
        %1941 = vdwg.mxu0
        %v1942 = vadd.f32 %v963, %v1938
        %v1943 = vadd.f32 %v964, %v1940
        %v1944 = vld [vmem:[%s799] sm:$0x1]
        %v1945 = vmul.f32 %v1942, %v1942
        %v1946 = vmul.f32 %v1943, %v1943
        %v1947 = vsel %vm968, %v1945, 0.0
        %1948 = vadd.xlane.f32.xlu0 %v1947
        %v1949 = vpop.xlane.xlu0 %1948
        %v1950 = vsel %vm968, %v1946, 0.0
        %1951 = vadd.xlane.f32.xlu0 %v1950
        %v1952 = vpop.xlane.xlu0 %1951
        %v1953 = vmax.f32 %v1949, 1e-24
        %v1954 = vmax.f32 %v1952, 1e-24
        %v1955 = vrsqrt.pop %v1953
        %v1956 = vmul.f32 %v1955, %v1953
        %v1957 = vmul.f32 %v1956, %v1955
        %v1958 = vmul.f32 0.5, %v1957
        %v1959 = vsub.f32 1.5, %v1958
        %v1960 = vmul.f32 %v1955, %v1959
        %vm1961 = vweird.f32 %v1953
        %vm1962 = vweird.f32 %v1955
        %vm1963 = vmor %vm1961, %vm1962
        %v1964 = vsel %vm1963, %v1955, %v1960
        %v1965 = vrsqrt.pop %v1954
        %v1966 = vmul.f32 %v1965, %v1954
        %v1967 = vmul.f32 %v1966, %v1965
        %v1968 = vmul.f32 0.5, %v1967
        %v1969 = vsub.f32 1.5, %v1968
        %v1970 = vmul.f32 %v1965, %v1969
        %vm1971 = vweird.f32 %v1954
        %vm1972 = vweird.f32 %v1965
        %vm1973 = vmor %vm1971, %vm1972
        %v1974 = vsel %vm1973, %v1965, %v1970
        %v1975 = vmul.f32 %v1942, %v1964
        %v1976 = vmul.f32 %v1943, %v1974
        %v1978 = vperm.slane %v1944, 0
        %v1980 = vmul.f32 %v1975, %v1978
        %v1981 = vmul.f32 %v1976, %v1978
        %v1982 = vpack.c.bf16 %v1981, %v1980
        %v1983 = vld [vmem:[%s934] sm:$0xff]
        %v1984 = vld [vmem:[%s934 + $0x8] sm:$0xff]
        %v1985 = vld [vmem:[%s934 + $0x10] sm:$0xff]
        %v1986 = vld [vmem:[%s934 + $0x18] sm:$0xff]
        %v1987 = vld [vmem:[%s934 + $0x20] sm:$0xff]
        %v1988 = vld [vmem:[%s934 + $0x28] sm:$0xff]
        %v1989 = vld [vmem:[%s934 + $0x30] sm:$0xff]
        %v1990 = vld [vmem:[%s934 + $0x38] sm:$0xff]
        %v1991 = vld [vmem:[%s934 + $0x40] sm:$0xff]
        %v1992 = vld [vmem:[%s934 + $0x48] sm:$0xff]
        %v1993 = vld [vmem:[%s934 + $0x50] sm:$0xff]
        %v1994 = vld [vmem:[%s934 + $0x58] sm:$0xff]
        %v1995 = vld [vmem:[%s938] sm:$0x3]
        %v1997 = vperm.slane %v1995, 0
        %v1998 = vperm.slane %v1995, 1
        %v2013 = vunpack.c.l.b16 %v1983
        %v2014 = vunpack.c.h.b16 %v1983
        %v2015 = vunpack.c.l.b16 %v1984
        %v2016 = vunpack.c.h.b16 %v1984
        %v2017 = vunpack.c.l.b16 %v1985
        %v2018 = vunpack.c.h.b16 %v1985
        %v2019 = vunpack.c.l.b16 %v1986
        %v2020 = vunpack.c.h.b16 %v1986
        %v2021 = vunpack.c.l.b16 %v1987
        %v2022 = vunpack.c.h.b16 %v1987
        %v2023 = vunpack.c.l.b16 %v1988
        %v2024 = vunpack.c.h.b16 %v1988
        %v2025 = vunpack.c.l.b16 %v1989
        %v2026 = vunpack.c.h.b16 %v1989
        %v2027 = vunpack.c.l.b16 %v1990
        %v2028 = vunpack.c.h.b16 %v1990
        %v2029 = vunpack.c.l.b16 %v1991
        %v2030 = vunpack.c.h.b16 %v1991
        %v2031 = vunpack.c.l.b16 %v1992
        %v2032 = vunpack.c.h.b16 %v1992
        %v2033 = vunpack.c.l.b16 %v1993
        %v2034 = vunpack.c.h.b16 %v1993
        %v2035 = vunpack.c.l.b16 %v1994
        %v2036 = vunpack.c.h.b16 %v1994
        %v2037 = vpack.c.b16 %v2015, %v2013
        %v2038 = vpack.c.b16 %v2016, %v2014
        %v2039 = vpack.c.b16 %v2019, %v2017
        %v2040 = vpack.c.b16 %v2020, %v2018
        %v2041 = vpack.c.b16 %v2023, %v2021
        %v2042 = vpack.c.b16 %v2024, %v2022
        %v2043 = vpack.c.b16 %v2027, %v2025
        %v2044 = vpack.c.b16 %v2028, %v2026
        %v2045 = vpack.c.b16 %v2031, %v2029
        %v2046 = vpack.c.b16 %v2032, %v2030
        %v2047 = vpack.c.b16 %v2035, %v2033
        %v2048 = vpack.c.b16 %v2036, %v2034
        %v2062 = vsel %vm968, %v1982, 0
        %2064 = vmatpush.bf16.msra.mxu0 0
        %2065 = vmatpush.bf16.msra.mxu0 0
        %2066 = vmatpush.bf16.msra.mxu0 %v2047
        %2067 = vmatpush.bf16.msra.mxu0 %v2045
        %2068 = vmatpush.bf16.msra.mxu0 %v2043
        %2069 = vmatpush.bf16.msra.mxu0 %v2041
        %2070 = vmatpush.bf16.msra.mxu0 %v2039
        %2071 = vmatpush.bf16.msra.mxu0 %v2037
        %2072 = vmatmul.bf16.gmra.mxu0 %v2062
        %v2073 = vpop.f32.mrf.mxu0
        %v2074 = vadd.f32 %v1997, %v2073
        %v2075 = vpop.f32.mrf.mxu0
        %v2076 = vadd.f32 %v1997, %v2075
        %2077 = vdwg.mxu0
        %2078 = vmatpush.bf16.msra.mxu0 0
        %2079 = vmatpush.bf16.msra.mxu0 0
        %2080 = vmatpush.bf16.msra.mxu0 %v2048
        %2081 = vmatpush.bf16.msra.mxu0 %v2046
        %2082 = vmatpush.bf16.msra.mxu0 %v2044
        %2083 = vmatpush.bf16.msra.mxu0 %v2042
        %2084 = vmatpush.bf16.msra.mxu0 %v2040
        %2085 = vmatpush.bf16.msra.mxu0 %v2038
        %2086 = vmatmul.bf16.gmra.mxu0 %v2062
        %v2087 = vpop.f32.mrf.mxu0
        %v2088 = vadd.f32 %v1998, %v2087
        %v2089 = vpop.f32.mrf.mxu0
        %v2090 = vadd.f32 %v1998, %v2089
        %2091 = vdwg.mxu0
        %v2092 = vld [vmem:[%s943] sm:$0xff]
        %v2093 = vld [vmem:[%s943 + $0x8] sm:$0xff]
        %v2094 = vld [vmem:[%s943 + $0x10] sm:$0xff]
        %v2095 = vld [vmem:[%s943 + $0x18] sm:$0xff]
        %v2096 = vld [vmem:[%s943 + $0x20] sm:$0xff]
        %v2097 = vld [vmem:[%s943 + $0x28] sm:$0xff]
        %v2098 = vld [vmem:[%s943 + $0x30] sm:$0xff]
        %v2099 = vld [vmem:[%s943 + $0x38] sm:$0xff]
        %v2100 = vld [vmem:[%s943 + $0x40] sm:$0xff]
        %v2101 = vld [vmem:[%s943 + $0x48] sm:$0xff]
        %v2102 = vld [vmem:[%s943 + $0x50] sm:$0xff]
        %v2103 = vld [vmem:[%s943 + $0x58] sm:$0xff]
        %v2104 = vld [vmem:[%s947] sm:$0x3]
        %v2106 = vperm.slane %v2104, 0
        %v2107 = vperm.slane %v2104, 1
        %v2122 = vunpack.c.l.b16 %v2092
        %v2123 = vunpack.c.h.b16 %v2092
        %v2124 = vunpack.c.l.b16 %v2093
        %v2125 = vunpack.c.h.b16 %v2093
        %v2126 = vunpack.c.l.b16 %v2094
        %v2127 = vunpack.c.h.b16 %v2094
        %v2128 = vunpack.c.l.b16 %v2095
        %v2129 = vunpack.c.h.b16 %v2095
        %v2130 = vunpack.c.l.b16 %v2096
        %v2131 = vunpack.c.h.b16 %v2096
        %v2132 = vunpack.c.l.b16 %v2097
        %v2133 = vunpack.c.h.b16 %v2097
        %v2134 = vunpack.c.l.b16 %v2098
        %v2135 = vunpack.c.h.b16 %v2098
        %v2136 = vunpack.c.l.b16 %v2099
        %v2137 = vunpack.c.h.b16 %v2099
        %v2138 = vunpack.c.l.b16 %v2100
        %v2139 = vunpack.c.h.b16 %v2100
        %v2140 = vunpack.c.l.b16 %v2101
        %v2141 = vunpack.c.h.b16 %v2101
        %v2142 = vunpack.c.l.b16 %v2102
        %v2143 = vunpack.c.h.b16 %v2102
        %v2144 = vunpack.c.l.b16 %v2103
        %v2145 = vunpack.c.h.b16 %v2103
        %v2146 = vpack.c.b16 %v2124, %v2122
        %v2147 = vpack.c.b16 %v2125, %v2123
        %v2148 = vpack.c.b16 %v2128, %v2126
        %v2149 = vpack.c.b16 %v2129, %v2127
        %v2150 = vpack.c.b16 %v2132, %v2130
        %v2151 = vpack.c.b16 %v2133, %v2131
        %v2152 = vpack.c.b16 %v2136, %v2134
        %v2153 = vpack.c.b16 %v2137, %v2135
        %v2154 = vpack.c.b16 %v2140, %v2138
        %v2155 = vpack.c.b16 %v2141, %v2139
        %v2156 = vpack.c.b16 %v2144, %v2142
        %v2157 = vpack.c.b16 %v2145, %v2143
        %2170 = vmatpush.bf16.msra.mxu0 0
        %2171 = vmatpush.bf16.msra.mxu0 0
        %2172 = vmatpush.bf16.msra.mxu0 %v2156
        %2173 = vmatpush.bf16.msra.mxu0 %v2154
        %2174 = vmatpush.bf16.msra.mxu0 %v2152
        %2175 = vmatpush.bf16.msra.mxu0 %v2150
        %2176 = vmatpush.bf16.msra.mxu0 %v2148
        %2177 = vmatpush.bf16.msra.mxu0 %v2146
        %2178 = vmatmul.bf16.gmra.mxu0 %v2062
        %v2179 = vpop.f32.mrf.mxu0
        %v2180 = vadd.f32 %v2106, %v2179
        %v2181 = vpop.f32.mrf.mxu0
        %v2182 = vadd.f32 %v2106, %v2181
        %2183 = vdwg.mxu0
        %2184 = vmatpush.bf16.msra.mxu0 0
        %2185 = vmatpush.bf16.msra.mxu0 0
        %2186 = vmatpush.bf16.msra.mxu0 %v2157
        %2187 = vmatpush.bf16.msra.mxu0 %v2155
        %2188 = vmatpush.bf16.msra.mxu0 %v2153
        %2189 = vmatpush.bf16.msra.mxu0 %v2151
        %2190 = vmatpush.bf16.msra.mxu0 %v2149
        %2191 = vmatpush.bf16.msra.mxu0 %v2147
        %2192 = vmatmul.bf16.gmra.mxu0 %v2062
        %v2193 = vpop.f32.mrf.mxu0
        %v2194 = vadd.f32 %v2107, %v2193
        %v2195 = vpop.f32.mrf.mxu0
        %v2196 = vadd.f32 %v2107, %v2195
        %2197 = vdwg.mxu0
        %v2198 = vmul.f32 %v2180, 0.5
        %v2199 = vmul.f32 %v2194, 0.5
        %v2200 = vmul.f32 %v2182, 0.5
        %v2201 = vmul.f32 %v2196, 0.5
        %v2202 = vmul.f32 %v2180, 0.70710677
        %v2203 = vmul.f32 %v2194, 0.70710677
        %v2204 = vmul.f32 %v2182, 0.70710677
        %v2205 = vmul.f32 %v2196, 0.70710677
        %vm2206 = vcmp.ge.f32.partialorder %v2202, 0.0
        %vm2207 = vcmp.ge.f32.partialorder %v2203, 0.0
        %vm2208 = vcmp.ge.f32.partialorder %v2204, 0.0
        %vm2209 = vcmp.ge.f32.partialorder %v2205, 0.0
        %v2210 = vsel %vm2206, 1.0, -1.0
        %v2211 = vsel %vm2207, 1.0, -1.0
        %v2212 = vsel %vm2208, 1.0, -1.0
        %v2213 = vsel %vm2209, 1.0, -1.0
        %v2214 = vand.u32 2147483647, %v2202
        %v2215 = vand.u32 2147483647, %v2203
        %v2216 = vand.u32 2147483647, %v2204
        %v2217 = vand.u32 2147483647, %v2205
        %v2218 = vmul.f32 %v2214, 0.3275911
        %v2219 = vmul.f32 %v2215, 0.3275911
        %v2220 = vmul.f32 %v2216, 0.3275911
        %v2221 = vmul.f32 %v2217, 0.3275911
        %v2222 = vadd.f32 %v2218, 1.0
        %v2223 = vadd.f32 %v2219, 1.0
        %v2224 = vadd.f32 %v2220, 1.0
        %v2225 = vadd.f32 %v2221, 1.0
        %v2226 = vrcp.pop %v2222
        %v2227 = vmul.f32 %v2222, %v2226
        %v2228 = vsub.f32 1.0, %v2227
        %v2229 = vmul.f32 %v2226, %v2228
        %v2230 = vadd.f32 %v2226, %v2229
        %vm2231 = vweird.f32 %v2222
        %vm2232 = vweird.f32 %v2226
        %vm2233 = vmor %vm2231, %vm2232
        %v2234 = vsel %vm2233, %v2226, %v2230
        %v2235 = vand.u32 2147483647, %v2222
        %vm2236 = vcmp.eq.f32.partialorder %v2235, 8.507059e+37
        %v2237 = vand.u32 %v2222, 2147483648
        %v2238 = vor.u32 1.1754944e-38, %v2237
        %v2239 = vsel %vm2236, %v2238, %v2234
        %v2240 = vmul.f32 1.0, %v2239
        %v2241 = vrcp.pop %v2223
        %v2242 = vmul.f32 %v2223, %v2241
        %v2243 = vsub.f32 1.0, %v2242
        %v2244 = vmul.f32 %v2241, %v2243
        %v2245 = vadd.f32 %v2241, %v2244
        %vm2246 = vweird.f32 %v2223
        %vm2247 = vweird.f32 %v2241
        %vm2248 = vmor %vm2246, %vm2247
        %v2249 = vsel %vm2248, %v2241, %v2245
        %v2250 = vand.u32 2147483647, %v2223
        %vm2251 = vcmp.eq.f32.partialorder %v2250, 8.507059e+37
        %v2252 = vand.u32 %v2223, 2147483648
        %v2253 = vor.u32 1.1754944e-38, %v2252
        %v2254 = vsel %vm2251, %v2253, %v2249
        %v2255 = vmul.f32 1.0, %v2254
        %v2256 = vrcp.pop %v2224
        %v2257 = vmul.f32 %v2224, %v2256
        %v2258 = vsub.f32 1.0, %v2257
        %v2259 = vmul.f32 %v2256, %v2258
        %v2260 = vadd.f32 %v2256, %v2259
        %vm2261 = vweird.f32 %v2224
        %vm2262 = vweird.f32 %v2256
        %vm2263 = vmor %vm2261, %vm2262
        %v2264 = vsel %vm2263, %v2256, %v2260
        %v2265 = vand.u32 2147483647, %v2224
        %vm2266 = vcmp.eq.f32.partialorder %v2265, 8.507059e+37
        %v2267 = vand.u32 %v2224, 2147483648
        %v2268 = vor.u32 1.1754944e-38, %v2267
        %v2269 = vsel %vm2266, %v2268, %v2264
        %v2270 = vmul.f32 1.0, %v2269
        %v2271 = vrcp.pop %v2225
        %v2272 = vmul.f32 %v2225, %v2271
        %v2273 = vsub.f32 1.0, %v2272
        %v2274 = vmul.f32 %v2271, %v2273
        %v2275 = vadd.f32 %v2271, %v2274
        %vm2276 = vweird.f32 %v2225
        %vm2277 = vweird.f32 %v2271
        %vm2278 = vmor %vm2276, %vm2277
        %v2279 = vsel %vm2278, %v2271, %v2275
        %v2280 = vand.u32 2147483647, %v2225
        %vm2281 = vcmp.eq.f32.partialorder %v2280, 8.507059e+37
        %v2282 = vand.u32 %v2225, 2147483648
        %v2283 = vor.u32 1.1754944e-38, %v2282
        %v2284 = vsel %vm2281, %v2283, %v2279
        %v2285 = vmul.f32 1.0, %v2284
        %v2286 = vmul.f32 %v2240, 1.0614054
        %v2287 = vmul.f32 %v2255, 1.0614054
        %v2288 = vmul.f32 %v2270, 1.0614054
        %v2289 = vmul.f32 %v2285, 1.0614054
        %v2290 = vadd.f32 %v2286, -1.4531521
        %v2291 = vadd.f32 %v2287, -1.4531521
        %v2292 = vadd.f32 %v2288, -1.4531521
        %v2293 = vadd.f32 %v2289, -1.4531521
        %v2294 = vmul.f32 %v2290, %v2240
        %v2295 = vmul.f32 %v2291, %v2255
        %v2296 = vmul.f32 %v2292, %v2270
        %v2297 = vmul.f32 %v2293, %v2285
        %v2298 = vadd.f32 %v2294, 1.4214138
        %v2299 = vadd.f32 %v2295, 1.4214138
        %v2300 = vadd.f32 %v2296, 1.4214138
        %v2301 = vadd.f32 %v2297, 1.4214138
        %v2302 = vmul.f32 %v2298, %v2240
        %v2303 = vmul.f32 %v2299, %v2255
        %v2304 = vmul.f32 %v2300, %v2270
        %v2305 = vmul.f32 %v2301, %v2285
        %v2306 = vadd.f32 %v2302, -0.28449672
        %v2307 = vadd.f32 %v2303, -0.28449672
        %v2308 = vadd.f32 %v2304, -0.28449672
        %v2309 = vadd.f32 %v2305, -0.28449672
        %v2310 = vmul.f32 %v2306, %v2240
        %v2311 = vmul.f32 %v2307, %v2255
        %v2312 = vmul.f32 %v2308, %v2270
        %v2313 = vmul.f32 %v2309, %v2285
        %v2314 = vadd.f32 %v2310, 0.2548296
        %v2315 = vadd.f32 %v2311, 0.2548296
        %v2316 = vadd.f32 %v2312, 0.2548296
        %v2317 = vadd.f32 %v2313, 0.2548296
        %v2318 = vmul.f32 %v2314, %v2240
        %v2319 = vmul.f32 %v2315, %v2255
        %v2320 = vmul.f32 %v2316, %v2270
        %v2321 = vmul.f32 %v2317, %v2285
        %v2322 = vsub.f32 0.0, %v2214
        %v2323 = vsub.f32 0.0, %v2215
        %v2324 = vsub.f32 0.0, %v2216
        %v2325 = vsub.f32 0.0, %v2217
        %v2326 = vmul.f32 %v2322, %v2214
        %v2327 = vmul.f32 %v2323, %v2215
        %v2328 = vmul.f32 %v2324, %v2216
        %v2329 = vmul.f32 %v2325, %v2217
        %v2330 = vmul.f32 %v2326, 1.442695
        %v2331 = vpow.pop %v2330
        %v2332 = vmul.f32 %v2327, 1.442695
        %v2333 = vpow.pop %v2332
        %v2334 = vmul.f32 %v2328, 1.442695
        %v2335 = vpow.pop %v2334
        %v2336 = vmul.f32 %v2329, 1.442695
        %v2337 = vpow.pop %v2336
        %v2338 = vmul.f32 %v2318, %v2331
        %v2339 = vmul.f32 %v2319, %v2333
        %v2340 = vmul.f32 %v2320, %v2335
        %v2341 = vmul.f32 %v2321, %v2337
        %v2342 = vsub.f32 1.0, %v2338
        %v2343 = vsub.f32 1.0, %v2339
        %v2344 = vsub.f32 1.0, %v2340
        %v2345 = vsub.f32 1.0, %v2341
        %v2346 = vmul.f32 %v2210, %v2342
        %v2347 = vmul.f32 %v2211, %v2343
        %v2348 = vmul.f32 %v2212, %v2344
        %v2349 = vmul.f32 %v2213, %v2345
        %v2350 = vadd.f32 %v2346, 1.0
        %v2351 = vadd.f32 %v2347, 1.0
        %v2352 = vadd.f32 %v2348, 1.0
        %v2353 = vadd.f32 %v2349, 1.0
        %v2354 = vmul.f32 %v2198, %v2350
        %v2355 = vmul.f32 %v2199, %v2351
        %v2356 = vmul.f32 %v2200, %v2352
        %v2357 = vmul.f32 %v2201, %v2353
        %v2358 = vmul.f32 %v2354, %v2074
        %v2359 = vmul.f32 %v2355, %v2088
        %v2360 = vmul.f32 %v2356, %v2076
        %v2361 = vmul.f32 %v2357, %v2090
        %v2362 = vpack.c.bf16 %v2360, %v2358
        %v2363 = vpack.c.bf16 %v2361, %v2359
        %v2364 = vld [vmem:[%s952] sm:$0xf]
        %v2365 = vld [vmem:[%s952 + $0x4] sm:$0xf]
        %v2366 = vld [vmem:[%s952 + $0x8] sm:$0xf]
        %v2367 = vld [vmem:[%s952 + $0xc] sm:$0xf]
        %v2368 = vld [vmem:[%s952 + $0x10] sm:$0xf]
        %v2369 = vld [vmem:[%s952 + $0x14] sm:$0xf]
        %v2370 = vld [vmem:[%s952 + $0x18] sm:$0xf]
        %v2371 = vld [vmem:[%s952 + $0x1c] sm:$0xf]
        %v2372 = vld [vmem:[%s952 + $0x20] sm:$0xf]
        %v2373 = vld [vmem:[%s952 + $0x24] sm:$0xf]
        %v2374 = vld [vmem:[%s952 + $0x28] sm:$0xf]
        %v2375 = vld [vmem:[%s952 + $0x2c] sm:$0xf]
        %v2376 = vld [vmem:[%s952 + $0x30] sm:$0xf]
        %v2377 = vld [vmem:[%s952 + $0x34] sm:$0xf]
        %v2378 = vld [vmem:[%s952 + $0x38] sm:$0xf]
        %v2379 = vld [vmem:[%s952 + $0x3c] sm:$0xf]
        %v2380 = vld [vmem:[%s952 + $0x40] sm:$0xf]
        %v2381 = vld [vmem:[%s952 + $0x44] sm:$0xf]
        %v2382 = vld [vmem:[%s952 + $0x48] sm:$0xf]
        %v2383 = vld [vmem:[%s952 + $0x4c] sm:$0xf]
        %v2384 = vld [vmem:[%s952 + $0x50] sm:$0xf]
        %v2385 = vld [vmem:[%s952 + $0x54] sm:$0xf]
        %v2386 = vld [vmem:[%s952 + $0x58] sm:$0xf]
        %v2387 = vld [vmem:[%s952 + $0x5c] sm:$0xf]
        %v2388 = vld [vmem:[%s952 + $0x60] sm:$0xf]
        %v2389 = vld [vmem:[%s952 + $0x64] sm:$0xf]
        %v2390 = vld [vmem:[%s952 + $0x68] sm:$0xf]
        %v2391 = vld [vmem:[%s952 + $0x6c] sm:$0xf]
        %v2392 = vld [vmem:[%s952 + $0x70] sm:$0xf]
        %v2393 = vld [vmem:[%s952 + $0x74] sm:$0xf]
        %v2394 = vld [vmem:[%s952 + $0x78] sm:$0xf]
        %v2395 = vld [vmem:[%s952 + $0x7c] sm:$0xf]
        %v2396 = vld [vmem:[%s808] sm:$0x1]
        %v2398 = vperm.slane %v2396, 0
        %v2432 = vunpack.c.l.b16 %v2364
        %v2433 = vunpack.c.l.b16 %v2365
        %v2434 = vunpack.c.l.b16 %v2366
        %v2435 = vunpack.c.l.b16 %v2367
        %v2436 = vunpack.c.l.b16 %v2368
        %v2437 = vunpack.c.l.b16 %v2369
        %v2438 = vunpack.c.l.b16 %v2370
        %v2439 = vunpack.c.l.b16 %v2371
        %v2440 = vunpack.c.l.b16 %v2372
        %v2441 = vunpack.c.l.b16 %v2373
        %v2442 = vunpack.c.l.b16 %v2374
        %v2443 = vunpack.c.l.b16 %v2375
        %v2444 = vunpack.c.l.b16 %v2376
        %v2445 = vunpack.c.l.b16 %v2377
        %v2446 = vunpack.c.l.b16 %v2378
        %v2447 = vunpack.c.l.b16 %v2379
        %v2448 = vunpack.c.l.b16 %v2380
        %v2449 = vunpack.c.l.b16 %v2381
        %v2450 = vunpack.c.l.b16 %v2382
        %v2451 = vunpack.c.l.b16 %v2383
        %v2452 = vunpack.c.l.b16 %v2384
        %v2453 = vunpack.c.l.b16 %v2385
        %v2454 = vunpack.c.l.b16 %v2386
        %v2455 = vunpack.c.l.b16 %v2387
        %v2456 = vunpack.c.l.b16 %v2388
        %v2457 = vunpack.c.l.b16 %v2389
        %v2458 = vunpack.c.l.b16 %v2390
        %v2459 = vunpack.c.l.b16 %v2391
        %v2460 = vunpack.c.l.b16 %v2392
        %v2461 = vunpack.c.l.b16 %v2393
        %v2462 = vunpack.c.l.b16 %v2394
        %v2463 = vunpack.c.l.b16 %v2395
        %v2464 = vpack.c.b16 %v2433, %v2432
        %v2465 = vpack.c.b16 %v2435, %v2434
        %v2466 = vpack.c.b16 %v2437, %v2436
        %v2467 = vpack.c.b16 %v2439, %v2438
        %v2468 = vpack.c.b16 %v2441, %v2440
        %v2469 = vpack.c.b16 %v2443, %v2442
        %v2470 = vpack.c.b16 %v2445, %v2444
        %v2471 = vpack.c.b16 %v2447, %v2446
        %v2472 = vpack.c.b16 %v2449, %v2448
        %v2473 = vpack.c.b16 %v2451, %v2450
        %v2474 = vpack.c.b16 %v2453, %v2452
        %v2475 = vpack.c.b16 %v2455, %v2454
        %v2476 = vpack.c.b16 %v2457, %v2456
        %v2477 = vpack.c.b16 %v2459, %v2458
        %v2478 = vpack.c.b16 %v2461, %v2460
        %v2479 = vpack.c.b16 %v2463, %v2462
        %2496 = vmatpush.bf16.msra.mxu0 %v2471
        %2497 = vmatpush.bf16.msra.mxu0 %v2470
        %2498 = vmatpush.bf16.msra.mxu0 %v2469
        %2499 = vmatpush.bf16.msra.mxu0 %v2468
        %2500 = vmatpush.bf16.msra.mxu0 %v2467
        %2501 = vmatpush.bf16.msra.mxu0 %v2466
        %2502 = vmatpush.bf16.msra.mxu0 %v2465
        %2503 = vmatpush.bf16.msra.mxu0 %v2464
        %2504 = vmatmul.bf16.gmra.mxu0 %v2362
        %v2505 = vpop.f32.mrf.mxu0
        %v2506 = vadd.f32 %v2398, %v2505
        %v2507 = vpop.f32.mrf.mxu0
        %v2508 = vadd.f32 %v2398, %v2507
        %2509 = vdwg.mxu0
        %2510 = vmatpush.bf16.msra.mxu0 %v2479
        %2511 = vmatpush.bf16.msra.mxu0 %v2478
        %2512 = vmatpush.bf16.msra.mxu0 %v2477
        %2513 = vmatpush.bf16.msra.mxu0 %v2476
        %2514 = vmatpush.bf16.msra.mxu0 %v2475
        %2515 = vmatpush.bf16.msra.mxu0 %v2474
        %2516 = vmatpush.bf16.msra.mxu0 %v2473
        %2517 = vmatpush.bf16.msra.mxu0 %v2472
        %2518 = vmatmul.bf16.gmra.mxu0 %v2363
        %v2519 = vpop.f32.mrf.mxu0
        %v2520 = vadd.f32 %v2506, %v2519
        %v2521 = vpop.f32.mrf.mxu0
        %v2522 = vadd.f32 %v2508, %v2521
        %2523 = vdwg.mxu0
        %v2524 = vadd.f32 %v1942, %v2520
        %v2525 = vadd.f32 %v1943, %v2522
        %2526 = vst.msk [vmem:[#allocation2] sm:$0xff] %vm968, %v2524
        %2527 = vst.msk [vmem:[#allocation2 + $0x8] sm:$0xff] %vm968, %v2525
        %p2528 = scmp.eq.s32.totalorder %s41, 1
        // Predicated region
        $region133: #{transformer_forward.1} parent=87 // pred_check
          %p2529 = pneg %p2528
        $region134: #{transformer_forward.1} parent=87 // pred_check_branch
          %2531 = sbr.rel (%p2529) target = $region136
        $region135: #{transformer_forward.1} parent=87 // pred_region
          %v2532 = vld [vmem:[#allocation16] sm:$0x1]
          %v2533 = vmul.f32 %v2524, %v2524
          %v2534 = vmul.f32 %v2525, %v2525
          %v2535 = vsel %vm968, %v2533, 0.0
          %2536 = vadd.xlane.f32.xlu0 %v2535
          %v2537 = vpop.xlane.xlu0 %2536
          %v2538 = vsel %vm968, %v2534, 0.0
          %2539 = vadd.xlane.f32.xlu0 %v2538
          %v2540 = vpop.xlane.xlu0 %2539
          %v2541 = vmax.f32 %v2537, 1e-24
          %v2542 = vmax.f32 %v2540, 1e-24
          %v2543 = vrsqrt.pop %v2541
          %v2544 = vmul.f32 %v2543, %v2541
          %v2545 = vmul.f32 %v2544, %v2543
          %v2546 = vmul.f32 0.5, %v2545
          %v2547 = vsub.f32 1.5, %v2546
          %v2548 = vmul.f32 %v2543, %v2547
          %vm2549 = vweird.f32 %v2541
          %vm2550 = vweird.f32 %v2543
          %vm2551 = vmor %vm2549, %vm2550
          %v2552 = vsel %vm2551, %v2543, %v2548
          %v2553 = vrsqrt.pop %v2542
          %v2554 = vmul.f32 %v2553, %v2542
          %v2555 = vmul.f32 %v2554, %v2553
          %v2556 = vmul.f32 0.5, %v2555
          %v2557 = vsub.f32 1.5, %v2556
          %v2558 = vmul.f32 %v2553, %v2557
          %vm2559 = vweird.f32 %v2542
          %vm2560 = vweird.f32 %v2553
          %vm2561 = vmor %vm2559, %vm2560
          %v2562 = vsel %vm2561, %v2553, %v2558
          %v2563 = vmul.f32 %v2524, %v2552
          %v2564 = vmul.f32 %v2525, %v2562
          %v2566 = vperm.slane %v2532, 0
          %v2568 = vmul.f32 %v2563, %v2566
          %v2569 = vmul.f32 %v2564, %v2566
          %2570 = vst.msk [vmem:[%s919] sm:$0xff] %vm968, %v2568
          %2571 = vst.msk [vmem:[%s919 + $0x8] sm:$0xff] %vm968, %v2569
        $region136: #{transformer_forward.1} parent=87 // pred_fallthru
          _
        %s2572 = sand.u32 %s478, 1
        %s2573 = scalar_lea.sflag [#allocation5], %s2572
        %s2574 = sand.u32 %s478, 1
        %s2575 = smul.addr %s2574, 16
        %s2576 = scalar_lea.vmem [#allocation17], %s2575
        // Predicated region
        $region137: #{transformer_forward.1} parent=87 // pred_check
          %p2577 = pneg %p488
        $region138: #{transformer_forward.1} parent=87 // pred_check_branch
          %2579 = sbr.rel (%p2577) target = $region140
        $region139: #{transformer_forward.1} parent=87 // pred_region
          %2581 = vsyncadd %s2573, 0
          %s2582 = smul.addr %s40, 2
          %s2583 = smul.addr %s2582, 8
          %s2584 = scalar_lea.hbm %s17, %s2583
          %s2585 = sshll.u32 %s2576, 4
          %s2586 = int_to_ptr.vmem [resolvable:$true] %s2585
          %s2587 = sshll.u32 %s2584, 4
          %s2588 = int_to_ptr.hbm [resolvable:$true] %s2587
          %2593 = dma.vmem_to_hbm [thread:$0]  %s2586, 256, %s2588, %s2573, 128, 128, 8
        $region140: #{transformer_forward.1} parent=87 // pred_fallthru
          _
      $region88: #{transformer_forward.1} parent=5 // pred_fallthru
        _
      %p2594 = scmp.le.s32.totalorder 2, %s31
      // Predicated region
      $region141: #{transformer_forward.1} parent=5 // pred_check
        %p2595 = pneg %p2594
      $region142: #{transformer_forward.1} parent=5 // pred_check_branch
        %2597 = sbr.rel (%p2595) target = $region144
      $region143: #{transformer_forward.1} parent=5 // pred_region
        %s2598 = ssub.s32 %s31, 2
        // Predicated region
        $region145: #{transformer_forward.1} parent=143 // pred_check
          %p2599 = pneg %p494
        $region146: #{transformer_forward.1} parent=143 // pred_check_branch
          %2601 = sbr.rel (%p2599) target = $region148
        $region147: #{transformer_forward.1} parent=143 // pred_region
          %s2602 = sand.u32 %s479, 1
          %s2603 = scalar_lea.sflag [#allocation5], %s2602
          %s2604 = sand.u32 %s479, 1
          %s2605 = smul.addr %s2604, 16
          %s2606 = scalar_lea.vmem [#allocation17], %s2605
          %2608 = dma.done %s2603, 256
        $region148: #{transformer_forward.1} parent=143 // pred_fallthru
          _
      $region144: #{transformer_forward.1} parent=5 // pred_fallthru
        _
    $region6: #{transformer_forward.1} parent=1 // loop_footer
      %s35 = sadd.s32 1, %s31
    $region7: #{transformer_forward.1} parent=1 // loop_footer_branch
      %30 = sbr.rel target = $region3
    $region8: #{transformer_forward.1} parent=1 // loop_exit
      _
    %2609 = vsyncpa [#allocation4], 1
    %s2610 = scalar_lea.sflag [#allocation4], 1
    %2611 = vsyncpa %s2610, 1
    %2612 = vsyncpa [#allocation7], 1
    %2613 = vsyncpa [#allocation10], 1
    %2614 = vsyncpa [#allocation5], 1
    %s2615 = scalar_lea.sflag [#allocation5], 1
    %2616 = vsyncpa %s2615, 1

</llo_original>
